<compile_context>
chip_gen: v7x
topology: tpu7x:2x2x1
jax: 0.10.0
libtpu: 0.0.40
codegen_flags: <defaults>
</compile_context>

<pallas_src>
import jax
import jax.numpy as jnp
from jax.experimental import pallas as pl
from jax.experimental.pallas import tpu as pltpu


_VMEM_LIMIT = 32 * 1024 * 1024  # explicit scoped-VMEM budget; safe on v5e/v6e/v7x


def init_params(num_classes: int = 80, c_in: int = 3, num_features: int = 2048):
    """Deterministic synthetic parameters matching the module's layer shapes."""
    keys = jax.random.split(jax.random.PRNGKey(0), 8)

    def dense(key, fan_in, fan_out):
        return jax.random.normal(key, (fan_in, fan_out), jnp.float32) / jnp.sqrt(float(fan_in))

    return {
        # simplified backbone projection (stand-in for the ResNet50 feature extractor)
        "wc": dense(keys[0], c_in, num_features),
        "bc": jnp.zeros((1, num_features), jnp.float32),
        # classifier: Linear(2048,512) -> ReLU -> Linear(512,256) -> ReLU -> Linear(256,NC)
        "w1": dense(keys[1], num_features, 512),
        "b1": 0.01 * jax.random.normal(keys[2], (1, 512), jnp.float32),
        "w2": dense(keys[3], 512, 256),
        "b2": 0.01 * jax.random.normal(keys[4], (1, 256), jnp.float32),
        "w3": dense(keys[5], 256, num_classes),
        "b3": 0.01 * jax.random.normal(keys[6], (1, num_classes), jnp.float32),
    }


def _pick_spatial_tile(hw: int) -> int:
    """Largest power-of-two divisor of HW, capped at 512 (review: >512 buys
    nothing for a compute-bound kernel and only grows VMEM intermediates)."""
    for cand in (512, 256, 128, 64, 32, 16, 8):
        if hw % cand == 0:
            return cand
    # Odd HW fallback: full-HW tile; the F-chunk loop still bounds intermediates.
    return hw


def _pick_feature_chunk(f: int) -> int:
    """Feature-column chunk for the projection chain (bounds temporaries)."""
    for cand in (512, 256, 128):
        if f % cand == 0:
            return cand
    return f


def _bf16_vpu_ok() -> bool:
    """bf16 VALU exists on v6e/v7x; keep f32 on v5e and older (no bf16 VPU)."""
    try:
        kind = jax.devices()[0].device_kind.lower()
    except Exception:
        return False
    return ("v6" in kind) or ("v7" in kind)


def _backbone_gap(x_slab, wc, bc, *, tile_hw, f_chunk):
    """Pixel-major [B, HW, C_in] -> pooled features [B, 1, F] (f32)."""
    B, HW, C_in = x_slab.shape
    F = wc.shape[1]
    n_t = HW // tile_hw
    inv_hw = 1.0 / float(HW)

    def kernel(x_ref,            # [1, tile_hw, C_in]  (f32 or bf16)
               wc_ref, bc_ref,   # [C_in, F] (proj dtype), [1, F] f32
               feat_ref,         # [1, 1, F] f32 output (pooled features)
               acc_ref):         # [1, F] f32 scratch (pooled sum)
        t = pl.program_id(1)

        @pl.when(t == 0)
        def _init():
            acc_ref[...] = jnp.zeros_like(acc_ref)

        x = x_ref[0]                                     # [tile_hw, C_in]
        # Hoist the column extracts once per tile (JAX does not CSE broadcasts).
        xcols = [x[:, c:c + 1] for c in range(C_in)]     # C_in x [tile_hw, 1]

        # F-chunked projection: FMA -> bias -> ReLU -> partial-sum chain never
        # materializes more than [tile_hw, f_chunk] at once.
        for f0 in range(0, F, f_chunk):
            w = wc_ref[:, f0:f0 + f_chunk]               # [C_in, f_chunk]
            p = xcols[0] * w[0:1, :]
            for c in range(1, C_in):
                p = p + xcols[c] * w[c:c + 1, :]
            # bias / ReLU / pool accumulation in f32 regardless of FMA dtype.
            p = p.astype(jnp.float32) + bc_ref[:, f0:f0 + f_chunk]
            p = jnp.maximum(p, 0.0)
            acc_ref[:, f0:f0 + f_chunk] += jnp.sum(p, axis=0, keepdims=True)

        @pl.when(t == n_t - 1)
        def _finalize():
            feat_ref[0] = acc_ref[...] * inv_hw

    return pl.pallas_call(
        kernel,
        out_shape=jax.ShapeDtypeStruct((B, 1, F), jnp.float32),
        grid_spec=pltpu.PrefetchScalarGridSpec(
            num_scalar_prefetch=0,
            grid=(B, n_t),
            in_specs=[
                pl.BlockSpec((1, tile_hw, C_in), lambda b, t: (b, t, 0)),
                pl.BlockSpec((C_in, F), lambda b, t: (0, 0)),
                pl.BlockSpec((1, F), lambda b, t: (0, 0)),
            ],
            out_specs=pl.BlockSpec((1, 1, F), lambda b, t: (b, 0, 0)),
            scratch_shapes=[pltpu.VMEM((1, F), jnp.float32)],
        ),
        compiler_params=pltpu.CompilerParams(
            # batch axis parallel (megacore on v7x); spatial reduction serial.
            # TODO(synk): for B == 1 on v7x, split the spatial axis across the
            # two TensorCores with per-core partials + a combine step.
            dimension_semantics=("parallel", "arbitrary"),
            vmem_limit_bytes=_VMEM_LIMIT,
        ),
    )(x_slab, wc, bc)


def _classifier_head(feats, w1, b1, w2, b2, w3, b3):
    """Batched head: [B, F] f32 -> [B, NC_PAD] f32 logits (single MXU call)."""
    B, F = feats.shape
    NCP = w3.shape[1]

    def kernel(f_ref, w1_ref, b1_ref, w2_ref, b2_ref, w3_ref, b3_ref, o_ref):
        f = f_ref[...].astype(jnp.bfloat16)                              # [B, F]
        h1 = jnp.dot(f, w1_ref[...], preferred_element_type=jnp.float32) + b1_ref[...]
        h1 = jnp.maximum(h1, 0.0).astype(jnp.bfloat16)
        h2 = jnp.dot(h1, w2_ref[...], preferred_element_type=jnp.float32) + b2_ref[...]
        h2 = jnp.maximum(h2, 0.0).astype(jnp.bfloat16)
        o_ref[...] = jnp.dot(h2, w3_ref[...], preferred_element_type=jnp.float32) + b3_ref[...]

    def full(shape):
        nd = len(shape)
        return pl.BlockSpec(shape, lambda i, nd=nd: (0,) * nd)

    return pl.pallas_call(
        kernel,
        out_shape=jax.ShapeDtypeStruct((B, NCP), jnp.float32),
        grid=(1,),
        in_specs=[full(feats.shape), full(w1.shape), full(b1.shape),
                  full(w2.shape), full(b2.shape), full(w3.shape), full(b3.shape)],
        out_specs=full((B, NCP)),
        compiler_params=pltpu.CompilerParams(
            dimension_semantics=("arbitrary",),
            vmem_limit_bytes=_VMEM_LIMIT,
        ),
    )(feats, w1, b1, w2, b2, w3, b3)


def coco_pretrained_classifier(x_nchw, params):
    """x_nchw: [B, C_in, H, W] float32 -> logits [B, num_classes]."""
    B, C_in, H, W = x_nchw.shape
    HW = H * W
    F = params["wc"].shape[1]
    NC = params["w3"].shape[1]
    NC_PAD = ((NC + 127) // 128) * 128          # lane-dense last matmul / output

    tile_hw = _pick_spatial_tile(HW)
    f_chunk = _pick_feature_chunk(F)

    # NCHW -> pixel-major [B, HW, C_in] slab.
    # TODO(synk): accept NHWC (or a pre-flattened slab) at the API boundary for
    # realistic image sizes to skip this extra HBM transpose pass.
    x_slab = jnp.transpose(x_nchw, (0, 2, 3, 1)).reshape(B, HW, C_in)

    # Backbone projection dtype: bf16 FMAs on v6e/v7x (2x VALU, half the x DMA),
    # f32 on v5e and older (no bf16 VALU).  Bias / pool always f32.
    if _bf16_vpu_ok():
        x_slab = x_slab.astype(jnp.bfloat16)
        wc = params["wc"].astype(jnp.bfloat16)
    else:
        wc = params["wc"]
    bc = params["bc"]

    feats = _backbone_gap(x_slab, wc, bc, tile_hw=tile_hw, f_chunk=f_chunk)
    feats = feats.reshape(B, F)

    # Head weights in bf16 (MXU-native); biases f32; accumulation f32.
    w1 = params["w1"].astype(jnp.bfloat16)
    b1 = params["b1"]
    w2 = params["w2"].astype(jnp.bfloat16)
    b2 = params["b2"]
    w3 = jnp.pad(params["w3"], ((0, 0), (0, NC_PAD - NC))).astype(jnp.bfloat16)
    b3 = jnp.pad(params["b3"], ((0, 0), (0, NC_PAD - NC)))

    logits = _classifier_head(feats, w1, b1, w2, b2, w3, b3)
    return logits[:, :NC]


if __name__ == "__main__":
    # Small shapes consistent with the module's forward: NCHW RGB image batch.
    B, C_IN, H, W = 2, 3, 16, 16
    NUM_CLASSES = 80  # COCO

    params = init_params(num_classes=NUM_CLASSES, c_in=C_IN, num_features=2048)
    x = jax.random.normal(jax.random.PRNGKey(0), (B, C_IN, H, W), jnp.float32)

    logits = coco_pretrained_classifier(x, params)
    logits = jax.block_until_ready(logits)

    assert logits.shape == (B, NUM_CLASSES), logits.shape
    assert logits.dtype == jnp.float32
    assert bool(jnp.all(jnp.isfinite(logits)))

    print("KERNEL_OK")
</pallas_src>

<mosaic_0001>
module attributes {stable_mosaic.version = 11 : i64} {
  func.func @kernel(%arg0: i32, %arg1: i32, %arg2: memref<1x256x3xf32, #tpu.memory_space<vmem>>, %arg3: memref<3x2048xf32, #tpu.memory_space<vmem>>, %arg4: memref<1x2048xf32, #tpu.memory_space<vmem>>, %arg5: memref<1x1x2048xf32, #tpu.memory_space<vmem>>, %arg6: memref<1x2048xf32, #tpu.memory_space<vmem>>) attributes {dimension_semantics = [#tpu.dimension_semantics<parallel>, #tpu.dimension_semantics<arbitrary>], iteration_bounds = array<i64: 2, 1>, scalar_prefetch = 0 : i64, scratch_operands = 1 : i64, tpu.core_type = #tpu.core_type<tc>, window_params = [{transform_indices = @transform_0, window_bounds = array<i64: 1, 256, 3>}, {pipeline_mode = #tpu.pipeline_mode<synchronous>, transform_indices = @transform_1, window_bounds = array<i64: 3, 2048>}, {pipeline_mode = #tpu.pipeline_mode<synchronous>, transform_indices = @transform_2, window_bounds = array<i64: 1, 2048>}, {transform_indices = @transform_3, window_bounds = array<i64: 1, 1, 2048>}]} {
    %c0_i32 = arith.constant 0 : i32
    %0 = arith.cmpi eq, %arg1, %c0_i32 : i32
    %1 = arith.extui %0 : i1 to i32
    %c0_i32_0 = arith.constant 0 : i32
    %2 = arith.cmpi ne, %1, %c0_i32_0 : i32
    scf.if %2 {
      %cst_41 = arith.constant 0.000000e+00 : f32
      %111 = vector.broadcast %cst_41 : f32 to vector<1x2048xf32>
      %c0_42 = arith.constant 0 : index
      %c0_43 = arith.constant 0 : index
      %112 = vector.load %arg6[%c0_42, %c0_43] : memref<1x2048xf32, #tpu.memory_space<vmem>>, vector<1x2048xf32>
      tpu.vector_store %arg6[%c0_42, %c0_43], %111 {strides = array<i32>} : memref<1x2048xf32, #tpu.memory_space<vmem>>, vector<1x2048xf32>,
    } else {
    }
    %c0 = arith.constant 0 : index
    %c0_1 = arith.constant 0 : index
    %c0_2 = arith.constant 0 : index
    %3 = vector.load %arg2[%c0, %c0_1, %c0_2] : memref<1x256x3xf32, #tpu.memory_space<vmem>>, vector<1x256x3xf32>
    %4 = vector.shape_cast %3 : vector<1x256x3xf32> to vector<256x3xf32>
    %5 = vector.extract_strided_slice %4 {offsets = [0, 0], sizes = [256, 1], strides = [1, 1]} : vector<256x3xf32> to vector<256x1xf32>
    %6 = vector.extract_strided_slice %4 {offsets = [0, 1], sizes = [256, 1], strides = [1, 1]} : vector<256x3xf32> to vector<256x1xf32>
    %7 = vector.extract_strided_slice %4 {offsets = [0, 2], sizes = [256, 1], strides = [1, 1]} : vector<256x3xf32> to vector<256x1xf32>
    %c0_3 = arith.constant 0 : index
    %c0_4 = arith.constant 0 : index
    %8 = vector.load %arg3[%c0_3, %c0_4] : memref<3x2048xf32, #tpu.memory_space<vmem>>, vector<3x512xf32>
    %9 = vector.extract_strided_slice %8 {offsets = [0, 0], sizes = [1, 512], strides = [1, 1]} : vector<3x512xf32> to vector<1x512xf32>
    %10 = vector.broadcast %5 : vector<256x1xf32> to vector<256x512xf32>
    %11 = vector.broadcast %9 : vector<1x512xf32> to vector<256x512xf32>
    %12 = arith.mulf %10, %11 : vector<256x512xf32>
    %13 = vector.extract_strided_slice %8 {offsets = [1, 0], sizes = [1, 512], strides = [1, 1]} : vector<3x512xf32> to vector<1x512xf32>
    %14 = vector.broadcast %6 : vector<256x1xf32> to vector<256x512xf32>
    %15 = vector.broadcast %13 : vector<1x512xf32> to vector<256x512xf32>
    %16 = arith.mulf %14, %15 : vector<256x512xf32>
    %17 = arith.addf %12, %16 : vector<256x512xf32>
    %18 = vector.extract_strided_slice %8 {offsets = [2, 0], sizes = [1, 512], strides = [1, 1]} : vector<3x512xf32> to vector<1x512xf32>
    %19 = vector.broadcast %7 : vector<256x1xf32> to vector<256x512xf32>
    %20 = vector.broadcast %18 : vector<1x512xf32> to vector<256x512xf32>
    %21 = arith.mulf %19, %20 : vector<256x512xf32>
    %22 = arith.addf %17, %21 : vector<256x512xf32>
    %c0_5 = arith.constant 0 : index
    %c0_6 = arith.constant 0 : index
    %23 = vector.load %arg4[%c0_5, %c0_6] : memref<1x2048xf32, #tpu.memory_space<vmem>>, vector<1x512xf32>
    %24 = vector.broadcast %23 : vector<1x512xf32> to vector<256x512xf32>
    %25 = arith.addf %22, %24 : vector<256x512xf32>
    %cst = arith.constant 0.000000e+00 : f32
    %26 = vector.broadcast %cst : f32 to vector<256x512xf32>
    %27 = arith.maximumf %25, %26 : vector<256x512xf32>
    %c0_7 = arith.constant 0 : index
    %c0_8 = arith.constant 0 : index
    %28 = vector.load %arg6[%c0_7, %c0_8] : memref<1x2048xf32, #tpu.memory_space<vmem>>, vector<1x512xf32>
    %cst_9 = arith.constant dense<0.000000e+00> : vector<512xf32>
    %29 = vector.multi_reduction <add>, %27, %cst_9 [0] : vector<256x512xf32> to vector<512xf32>
    %30 = vector.shape_cast %29 : vector<512xf32> to vector<1x512xf32>
    %31 = arith.addf %28, %30 : vector<1x512xf32>
    %c0_10 = arith.constant 0 : index
    %c0_11 = arith.constant 0 : index
    %32 = vector.load %arg6[%c0_10, %c0_11] : memref<1x2048xf32, #tpu.memory_space<vmem>>, vector<1x512xf32>
    tpu.vector_store %arg6[%c0_10, %c0_11], %31 {strides = array<i32>} : memref<1x2048xf32, #tpu.memory_space<vmem>>, vector<1x512xf32>,
    %c0_12 = arith.constant 0 : index
    %c512 = arith.constant 512 : index
    %33 = vector.load %arg3[%c0_12, %c512] : memref<3x2048xf32, #tpu.memory_space<vmem>>, vector<3x512xf32>
    %34 = vector.extract_strided_slice %33 {offsets = [0, 0], sizes = [1, 512], strides = [1, 1]} : vector<3x512xf32> to vector<1x512xf32>
    %35 = vector.broadcast %5 : vector<256x1xf32> to vector<256x512xf32>
    %36 = vector.broadcast %34 : vector<1x512xf32> to vector<256x512xf32>
    %37 = arith.mulf %35, %36 : vector<256x512xf32>
    %38 = vector.extract_strided_slice %33 {offsets = [1, 0], sizes = [1, 512], strides = [1, 1]} : vector<3x512xf32> to vector<1x512xf32>
    %39 = vector.broadcast %6 : vector<256x1xf32> to vector<256x512xf32>
    %40 = vector.broadcast %38 : vector<1x512xf32> to vector<256x512xf32>
    %41 = arith.mulf %39, %40 : vector<256x512xf32>
    %42 = arith.addf %37, %41 : vector<256x512xf32>
    %43 = vector.extract_strided_slice %33 {offsets = [2, 0], sizes = [1, 512], strides = [1, 1]} : vector<3x512xf32> to vector<1x512xf32>
    %44 = vector.broadcast %7 : vector<256x1xf32> to vector<256x512xf32>
    %45 = vector.broadcast %43 : vector<1x512xf32> to vector<256x512xf32>
    %46 = arith.mulf %44, %45 : vector<256x512xf32>
    %47 = arith.addf %42, %46 : vector<256x512xf32>
    %c0_13 = arith.constant 0 : index
    %c512_14 = arith.constant 512 : index
    %48 = vector.load %arg4[%c0_13, %c512_14] : memref<1x2048xf32, #tpu.memory_space<vmem>>, vector<1x512xf32>
    %49 = vector.broadcast %48 : vector<1x512xf32> to vector<256x512xf32>
    %50 = arith.addf %47, %49 : vector<256x512xf32>
    %cst_15 = arith.constant 0.000000e+00 : f32
    %51 = vector.broadcast %cst_15 : f32 to vector<256x512xf32>
    %52 = arith.maximumf %50, %51 : vector<256x512xf32>
    %c0_16 = arith.constant 0 : index
    %c512_17 = arith.constant 512 : index
    %53 = vector.load %arg6[%c0_16, %c512_17] : memref<1x2048xf32, #tpu.memory_space<vmem>>, vector<1x512xf32>
    %cst_18 = arith.constant dense<0.000000e+00> : vector<512xf32>
    %54 = vector.multi_reduction <add>, %52, %cst_18 [0] : vector<256x512xf32> to vector<512xf32>
    %55 = vector.shape_cast %54 : vector<512xf32> to vector<1x512xf32>
    %56 = arith.addf %53, %55 : vector<1x512xf32>
    %c0_19 = arith.constant 0 : index
    %c512_20 = arith.constant 512 : index
    %57 = vector.load %arg6[%c0_19, %c512_20] : memref<1x2048xf32, #tpu.memory_space<vmem>>, vector<1x512xf32>
    tpu.vector_store %arg6[%c0_19, %c512_20], %56 {strides = array<i32>} : memref<1x2048xf32, #tpu.memory_space<vmem>>, vector<1x512xf32>,
    %c0_21 = arith.constant 0 : index
    %c1024 = arith.constant 1024 : index
    %58 = vector.load %arg3[%c0_21, %c1024] : memref<3x2048xf32, #tpu.memory_space<vmem>>, vector<3x512xf32>
    %59 = vector.extract_strided_slice %58 {offsets = [0, 0], sizes = [1, 512], strides = [1, 1]} : vector<3x512xf32> to vector<1x512xf32>
    %60 = vector.broadcast %5 : vector<256x1xf32> to vector<256x512xf32>
    %61 = vector.broadcast %59 : vector<1x512xf32> to vector<256x512xf32>
    %62 = arith.mulf %60, %61 : vector<256x512xf32>
    %63 = vector.extract_strided_slice %58 {offsets = [1, 0], sizes = [1, 512], strides = [1, 1]} : vector<3x512xf32> to vector<1x512xf32>
    %64 = vector.broadcast %6 : vector<256x1xf32> to vector<256x512xf32>
    %65 = vector.broadcast %63 : vector<1x512xf32> to vector<256x512xf32>
    %66 = arith.mulf %64, %65 : vector<256x512xf32>
    %67 = arith.addf %62, %66 : vector<256x512xf32>
    %68 = vector.extract_strided_slice %58 {offsets = [2, 0], sizes = [1, 512], strides = [1, 1]} : vector<3x512xf32> to vector<1x512xf32>
    %69 = vector.broadcast %7 : vector<256x1xf32> to vector<256x512xf32>
    %70 = vector.broadcast %68 : vector<1x512xf32> to vector<256x512xf32>
    %71 = arith.mulf %69, %70 : vector<256x512xf32>
    %72 = arith.addf %67, %71 : vector<256x512xf32>
    %c0_22 = arith.constant 0 : index
    %c1024_23 = arith.constant 1024 : index
    %73 = vector.load %arg4[%c0_22, %c1024_23] : memref<1x2048xf32, #tpu.memory_space<vmem>>, vector<1x512xf32>
    %74 = vector.broadcast %73 : vector<1x512xf32> to vector<256x512xf32>
    %75 = arith.addf %72, %74 : vector<256x512xf32>
    %cst_24 = arith.constant 0.000000e+00 : f32
    %76 = vector.broadcast %cst_24 : f32 to vector<256x512xf32>
    %77 = arith.maximumf %75, %76 : vector<256x512xf32>
    %c0_25 = arith.constant 0 : index
    %c1024_26 = arith.constant 1024 : index
    %78 = vector.load %arg6[%c0_25, %c1024_26] : memref<1x2048xf32, #tpu.memory_space<vmem>>, vector<1x512xf32>
    %cst_27 = arith.constant dense<0.000000e+00> : vector<512xf32>
    %79 = vector.multi_reduction <add>, %77, %cst_27 [0] : vector<256x512xf32> to vector<512xf32>
    %80 = vector.shape_cast %79 : vector<512xf32> to vector<1x512xf32>
    %81 = arith.addf %78, %80 : vector<1x512xf32>
    %c0_28 = arith.constant 0 : index
    %c1024_29 = arith.constant 1024 : index
    %82 = vector.load %arg6[%c0_28, %c1024_29] : memref<1x2048xf32, #tpu.memory_space<vmem>>, vector<1x512xf32>
    tpu.vector_store %arg6[%c0_28, %c1024_29], %81 {strides = array<i32>} : memref<1x2048xf32, #tpu.memory_space<vmem>>, vector<1x512xf32>,
    %c0_30 = arith.constant 0 : index
    %c1536 = arith.constant 1536 : index
    %83 = vector.load %arg3[%c0_30, %c1536] : memref<3x2048xf32, #tpu.memory_space<vmem>>, vector<3x512xf32>
    %84 = vector.extract_strided_slice %83 {offsets = [0, 0], sizes = [1, 512], strides = [1, 1]} : vector<3x512xf32> to vector<1x512xf32>
    %85 = vector.broadcast %5 : vector<256x1xf32> to vector<256x512xf32>
    %86 = vector.broadcast %84 : vector<1x512xf32> to vector<256x512xf32>
    %87 = arith.mulf %85, %86 : vector<256x512xf32>
    %88 = vector.extract_strided_slice %83 {offsets = [1, 0], sizes = [1, 512], strides = [1, 1]} : vector<3x512xf32> to vector<1x512xf32>
    %89 = vector.broadcast %6 : vector<256x1xf32> to vector<256x512xf32>
    %90 = vector.broadcast %88 : vector<1x512xf32> to vector<256x512xf32>
    %91 = arith.mulf %89, %90 : vector<256x512xf32>
    %92 = arith.addf %87, %91 : vector<256x512xf32>
    %93 = vector.extract_strided_slice %83 {offsets = [2, 0], sizes = [1, 512], strides = [1, 1]} : vector<3x512xf32> to vector<1x512xf32>
    %94 = vector.broadcast %7 : vector<256x1xf32> to vector<256x512xf32>
    %95 = vector.broadcast %93 : vector<1x512xf32> to vector<256x512xf32>
    %96 = arith.mulf %94, %95 : vector<256x512xf32>
    %97 = arith.addf %92, %96 : vector<256x512xf32>
    %c0_31 = arith.constant 0 : index
    %c1536_32 = arith.constant 1536 : index
    %98 = vector.load %arg4[%c0_31, %c1536_32] : memref<1x2048xf32, #tpu.memory_space<vmem>>, vector<1x512xf32>
    %99 = vector.broadcast %98 : vector<1x512xf32> to vector<256x512xf32>
    %100 = arith.addf %97, %99 : vector<256x512xf32>
    %cst_33 = arith.constant 0.000000e+00 : f32
    %101 = vector.broadcast %cst_33 : f32 to vector<256x512xf32>
    %102 = arith.maximumf %100, %101 : vector<256x512xf32>
    %c0_34 = arith.constant 0 : index
    %c1536_35 = arith.constant 1536 : index
    %103 = vector.load %arg6[%c0_34, %c1536_35] : memref<1x2048xf32, #tpu.memory_space<vmem>>, vector<1x512xf32>
    %cst_36 = arith.constant dense<0.000000e+00> : vector<512xf32>
    %104 = vector.multi_reduction <add>, %102, %cst_36 [0] : vector<256x512xf32> to vector<512xf32>
    %105 = vector.shape_cast %104 : vector<512xf32> to vector<1x512xf32>
    %106 = arith.addf %103, %105 : vector<1x512xf32>
    %c0_37 = arith.constant 0 : index
    %c1536_38 = arith.constant 1536 : index
    %107 = vector.load %arg6[%c0_37, %c1536_38] : memref<1x2048xf32, #tpu.memory_space<vmem>>, vector<1x512xf32>
    tpu.vector_store %arg6[%c0_37, %c1536_38], %106 {strides = array<i32>} : memref<1x2048xf32, #tpu.memory_space<vmem>>, vector<1x512xf32>,
    %c0_i32_39 = arith.constant 0 : i32
    %108 = arith.cmpi eq, %arg1, %c0_i32_39 : i32
    %109 = arith.extui %108 : i1 to i32
    %c0_i32_40 = arith.constant 0 : i32
    %110 = arith.cmpi ne, %109, %c0_i32_40 : i32
    scf.if %110 {
      %c0_41 = arith.constant 0 : index
      %c0_42 = arith.constant 0 : index
      %111 = vector.load %arg6[%c0_41, %c0_42] : memref<1x2048xf32, #tpu.memory_space<vmem>>, vector<1x2048xf32>
      %cst_43 = arith.constant 3.906250e-03 : f32
      %112 = vector.broadcast %cst_43 : f32 to vector<1x2048xf32>
      %113 = arith.mulf %111, %112 : vector<1x2048xf32>
      %c0_44 = arith.constant 0 : index
      %c0_45 = arith.constant 0 : index
      %c0_46 = arith.constant 0 : index
      %114 = vector.load %arg5[%c0_44, %c0_45, %c0_46] : memref<1x1x2048xf32, #tpu.memory_space<vmem>>, vector<1x1x2048xf32>
      %115 = vector.shape_cast %114 : vector<1x1x2048xf32> to vector<1x2048xf32>
      %116 = vector.shape_cast %113 : vector<1x2048xf32> to vector<1x1x2048xf32>
      tpu.vector_store %arg5[%c0_44, %c0_45, %c0_46], %116 {strides = array<i32>} : memref<1x1x2048xf32, #tpu.memory_space<vmem>>, vector<1x1x2048xf32>,
    } else {
    }
    return
  }
  func.func @transform_0(%arg0: i32, %arg1: i32) -> (i32, i32, i32) {
    %c0_i32 = arith.constant 0 : i32
    %c0_i32_0 = arith.constant 0 : i32
    return %arg0, %arg1, %c0_i32 : i32, i32, i32
  }
  func.func @transform_1(%arg0: i32, %arg1: i32) -> (i32, i32) {
    %c0_i32 = arith.constant 0 : i32
    %c0_i32_0 = arith.constant 0 : i32
    %c0_i32_1 = arith.constant 0 : i32
    return %c0_i32, %c0_i32_0 : i32, i32
  }
  func.func @transform_2(%arg0: i32, %arg1: i32) -> (i32, i32) {
    %c0_i32 = arith.constant 0 : i32
    %c0_i32_0 = arith.constant 0 : i32
    %c0_i32_1 = arith.constant 0 : i32
    return %c0_i32, %c0_i32_0 : i32, i32
  }
  func.func @transform_3(%arg0: i32, %arg1: i32) -> (i32, i32, i32) {
    %c0_i32 = arith.constant 0 : i32
    %c0_i32_0 = arith.constant 0 : i32
    %c0_i32_1 = arith.constant 0 : i32
    return %arg0, %c0_i32, %c0_i32_0 : i32, i32, i32
  }
}

</mosaic_0001>

<llo_original>
// kernel: tpu_custom_call.1
$region0: #{tpu_custom_call.1}
  #allocation0 [shape = 'u32[]', space=smem, size = 0x4, offset = 0x4, fixed_abs, tag = 'smem constant byte address 0x4 - core index']
  #allocation1 [shape = 'u32[144,128]{1,0:T(1,128)}', space=vmem, size = 0x12000, scoped, tag = 'internal scratch']
  #allocation2 [shape = 'f32[1,2048]{1,0:T(1,128)}', space=vmem, size = 0x2000, scoped, tag = 'scratch operand']
  %s0 = inlined_call_operand.vmem [shape: f32[2,256,3], index: 0, kind: input, shape index: {}]
  %s1 = inlined_call_operand.vmem [shape: f32[3,2048], index: 1, kind: input, shape index: {}]
  %s2 = inlined_call_operand.vmem [shape: f32[1,2048], index: 2, kind: input, shape index: {}]
  %s3 = inlined_call_operand.hbm [shape: f32[2,1,2048], index: 3, kind: output, shape index: {}]
  %s4 = sld [smem:[#allocation0]]
  $region53: #{tpu_custom_call.1} parent=0
    _
  %s6 = ssub.s32 1, %s4
  %s7 = scalar_select 0, %s6, %s4
  $region1: #{tpu_custom_call.1} parent=0
    #allocation3 [shape = 'u8[16384]{0}', space=vmem, size = 0x4000, scoped, tag = 'output window, operand 0']
    #allocation4 [shape = 's32[2]{0}', space=sflag, size = 0x8, scoped, tag = 'scoped memory for tpu_custom_call.1']
    %8 = vsyncpa [#allocation4], 0
    %s9 = scalar_lea.sflag [#allocation4], 1
    %10 = vsyncpa %s9, 0
    loop: start=0, step=1, limit=4
    $region2: #{tpu_custom_call.1} parent=1 // loop_pre_header
      _
    $region3: #{tpu_custom_call.1} parent=1 // loop_header
      %s12 = sphi 0, %s16
      %p13 = scmp.ge.s32.totalorder %s12, 4
      %s19 = sphi 0, %s31
      %s20 = sphi 0, %s27
      %s21 = sphi 0, %s19
      %s22 = sphi 0, %s20
      %s23 = sphi 0, %s21
      %s24 = sphi 0, %s22
      %s36 = sphi 0, %s38
      %s39 = sphi 0, %s36
      %s40 = sphi 0, %s39
      %s56 = sphi 0, %s40
      %s60 = sphi 0, %s60
      %s62 = sphi 0, %s60
      %s63 = sphi 0, %s62
      %s77 = sphi 0, %s63
      %s81 = sphi 0, %s81
      %s83 = sphi 0, %s81
      %s84 = sphi 0, %s83
      %s98 = sphi 0, %s84
      %s104 = sphi 0, %s106
      %s107 = sphi 0, %s104
      %s108 = sphi 0, %s107
      %s124 = sphi 0, %s108
    $region4: #{tpu_custom_call.1} parent=1 // loop_header_branch
      %15 = sbr.rel (%p13) target = $region8
    $region5: #{tpu_custom_call.1} parent=1 // loop_body
      %s17 = ssub.s32 %s12, 1
      %s18 = ssub.s32 %s12, 2
      %s25 = sadd.s32 1, %s20
      %p26 = scmp.ge.s32.totalorder %s25, 1
      %s27 = scalar_select %p26, 0, %s25
      %s28 = sadd.s32 1, %s19
      %s29 = scalar_select %p26, %s28, %s19
      %p30 = scmp.ge.s32.totalorder %s29, 2
      %s31 = scalar_select %p30, 0, %s29
      %s32 = ssub.s32 %s19, %s31
      %s33 = ssub.s32 %s20, %s27
      %s34 = sor.u32 %s32, %s33
      %p35 = scmp.eq.s32.totalorder %s34, 0
      %s37 = sadd.s32 %s36, 1
      %s38 = scalar_select %p35, %s36, %s37
      %p41 = pneg %p35
      %p42 = scmp.eq.s32.totalorder %s12, 1
      %p43 = por %p41, %p42
      %p44 = scmp.ne.s32.totalorder %s36, %s39
      %p45 = scmp.eq.s32.totalorder %s12, 0
      %p46 = por %p44, %p45
      %p47 = scmp.ne.s32.totalorder %s36, %s39
      %p48 = scmp.eq.s32.totalorder %s17, 1
      %p49 = por %p47, %p48
      %p50 = scmp.ne.s32.totalorder %s39, %s40
      %p51 = scmp.eq.s32.totalorder %s17, 0
      %p52 = por %p50, %p51
      %p53 = scmp.ne.s32.totalorder %s39, %s40
      %p54 = scmp.eq.s32.totalorder %s18, 1
      %p55 = por %p53, %p54
      %p57 = scmp.ne.s32.totalorder %s40, %s56
      %p58 = scmp.eq.s32.totalorder %s18, 0
      %p59 = por %p57, %p58
      %s61 = sadd.s32 %s60, 1
      %p64 = scmp.eq.s32.totalorder %s12, 1
      %p65 = scmp.ne.s32.totalorder %s60, %s62
      %p66 = scmp.eq.s32.totalorder %s12, 0
      %p67 = por %p65, %p66
      %p68 = scmp.ne.s32.totalorder %s60, %s62
      %p69 = scmp.eq.s32.totalorder %s17, 1
      %p70 = por %p68, %p69
      %p71 = scmp.ne.s32.totalorder %s62, %s63
      %p72 = scmp.eq.s32.totalorder %s17, 0
      %p73 = por %p71, %p72
      %p74 = scmp.ne.s32.totalorder %s62, %s63
      %p75 = scmp.eq.s32.totalorder %s18, 1
      %p76 = por %p74, %p75
      %p78 = scmp.ne.s32.totalorder %s63, %s77
      %p79 = scmp.eq.s32.totalorder %s18, 0
      %p80 = por %p78, %p79
      %s82 = sadd.s32 %s81, 1
      %p85 = scmp.eq.s32.totalorder %s12, 1
      %p86 = scmp.ne.s32.totalorder %s81, %s83
      %p87 = scmp.eq.s32.totalorder %s12, 0
      %p88 = por %p86, %p87
      %p89 = scmp.ne.s32.totalorder %s81, %s83
      %p90 = scmp.eq.s32.totalorder %s17, 1
      %p91 = por %p89, %p90
      %p92 = scmp.ne.s32.totalorder %s83, %s84
      %p93 = scmp.eq.s32.totalorder %s17, 0
      %p94 = por %p92, %p93
      %p95 = scmp.ne.s32.totalorder %s83, %s84
      %p96 = scmp.eq.s32.totalorder %s18, 1
      %p97 = por %p95, %p96
      %p99 = scmp.ne.s32.totalorder %s84, %s98
      %p100 = scmp.eq.s32.totalorder %s18, 0
      %p101 = por %p99, %p100
      %s102 = ssub.s32 %s19, %s31
      %p103 = scmp.eq.s32.totalorder %s102, 0
      %s105 = sadd.s32 %s104, 1
      %s106 = scalar_select %p103, %s104, %s105
      %p109 = pneg %p103
      %p110 = scmp.eq.s32.totalorder %s12, 1
      %p111 = por %p109, %p110
      %p112 = scmp.ne.s32.totalorder %s104, %s107
      %p113 = scmp.eq.s32.totalorder %s12, 0
      %p114 = por %p112, %p113
      %p115 = scmp.ne.s32.totalorder %s104, %s107
      %p116 = scmp.eq.s32.totalorder %s17, 1
      %p117 = por %p115, %p116
      %p118 = scmp.ne.s32.totalorder %s107, %s108
      %p119 = scmp.eq.s32.totalorder %s17, 0
      %p120 = por %p118, %p119
      %p121 = scmp.ne.s32.totalorder %s107, %s108
      %p122 = scmp.eq.s32.totalorder %s18, 1
      %p123 = por %p121, %p122
      %p125 = scmp.ne.s32.totalorder %s108, %s124
      %p126 = scmp.eq.s32.totalorder %s18, 0
      %p127 = por %p125, %p126
      %p128 = scmp.le.s32.totalorder 1, %s12
      %p129 = scmp.lt.s32.totalorder %s12, 3
      %p130 = pnand %p128, %p129
      %p131 = pneg %p130
      // Predicated region
      $region9: #{tpu_custom_call.1} parent=5 // pred_check
        _
      $region10: #{tpu_custom_call.1} parent=5 // pred_check_branch
        %133 = sbr.rel (%p130) target = $region12
      $region11: #{tpu_custom_call.1} parent=5 // pred_region
        %s134 = ssub.s32 %s12, 1
        // Predicated region
        $region13: #{tpu_custom_call.1} parent=11 // pred_check
          %p135 = pneg %p73
        $region14: #{tpu_custom_call.1} parent=11 // pred_check_branch
          %137 = sbr.rel (%p135) target = $region16
        $region15: #{tpu_custom_call.1} parent=11 // pred_region
          _
        $region16: #{tpu_custom_call.1} parent=11 // pred_fallthru
          _
        // Predicated region
        $region17: #{tpu_custom_call.1} parent=11 // pred_check
          %p138 = pneg %p94
        $region18: #{tpu_custom_call.1} parent=11 // pred_check_branch
          %140 = sbr.rel (%p138) target = $region20
        $region19: #{tpu_custom_call.1} parent=11 // pred_region
          _
        $region20: #{tpu_custom_call.1} parent=11 // pred_fallthru
          _
      $region12: #{tpu_custom_call.1} parent=5 // pred_fallthru
        _
      %p141 = scmp.lt.s32.totalorder %s12, 2
      // Predicated region
      $region21: #{tpu_custom_call.1} parent=5 // pred_check
        %p142 = pneg %p141
      $region22: #{tpu_custom_call.1} parent=5 // pred_check_branch
        %144 = sbr.rel (%p142) target = $region24
      $region23: #{tpu_custom_call.1} parent=5 // pred_region
        // Predicated region
        $region25: #{tpu_custom_call.1} parent=23 // pred_check
          %p145 = pneg %p46
        $region26: #{tpu_custom_call.1} parent=23 // pred_check_branch
          %147 = sbr.rel (%p145) target = $region28
        $region27: #{tpu_custom_call.1} parent=23 // pred_region
          %s148 = smul.u32 32, %s20
          %p149 = scmp.lt.s32.totalorder %s19, 1
          %s150 = scalar_select %p149, %s19, 1
          %p151 = scmp.lt.s32.totalorder %s148, 31
          %s152 = scalar_select %p151, %s148, 31
          %s153 = smul.addr %s150, 32
          %s154 = sadd.s32 %s152, %s153
          %s155 = smul.addr %s154, 8
          %s156 = scalar_lea.vmem %s0, %s155
          %s157 = smul.u32 32, %s20
        $region28: #{tpu_custom_call.1} parent=23 // pred_fallthru
          _
      $region24: #{tpu_custom_call.1} parent=5 // pred_fallthru
        _
      %p158 = scmp.le.s32.totalorder 1, %s12
      %p159 = scmp.lt.s32.totalorder %s12, 3
      %p160 = pnand %p158, %p159
      %p161 = pneg %p160
      // Predicated region
      $region29: #{tpu_custom_call.1} parent=5 // pred_check
        _
      $region30: #{tpu_custom_call.1} parent=5 // pred_check_branch
        %163 = sbr.rel (%p160) target = $region32
      $region31: #{tpu_custom_call.1} parent=5 // pred_region
        %s164 = ssub.s32 %s12, 1
        %s165 = smul.u32 32, %s22
        %p166 = scmp.lt.s32.totalorder %s21, 1
        %s167 = scalar_select %p166, %s21, 1
        %p168 = scmp.lt.s32.totalorder %s165, 31
        %s169 = scalar_select %p168, %s165, 31
        %s170 = smul.addr %s167, 32
        %s171 = sadd.s32 %s169, %s170
        %s172 = smul.addr %s171, 8
        %s173 = scalar_lea.vmem %s0, %s172
        %p174 = pneg %p52
        %p175 = pneg %p49
        %p176 = pneg %p73
        %p177 = pneg %p70
        %p178 = pneg %p94
        %p179 = pneg %p91
        %p180 = pneg %p120
        %p181 = pneg %p117
        %s182 = sand.u32 %s107, 1
        %s183 = scalar_lea.sflag [#allocation4], %s182
        %s184 = sand.u32 %s107, 1
        %s185 = smul.addr %s184, 16
        %s186 = scalar_lea.vmem [#allocation3], %s185
        %s187 = smul.u32 32, %s22
        %p188 = scmp.lt.s32.totalorder %s21, 1
        %s189 = scalar_select %p188, %s21, 1
        %p190 = scmp.lt.s32.totalorder %s187, 31
        %s191 = scalar_select %p190, %s187, 31
        %s192 = smul.addr %s189, 32
        %s193 = sadd.s32 %s191, %s192
        %s194 = smul.addr %s193, 8
        %s195 = scalar_lea.vmem %s0, %s194
        %s196 = smul.u32 32, %s22
        %p197 = scmp.eq.s32.totalorder %s22, 0
        // Predicated region
        $region33: #{tpu_custom_call.1} parent=31 // pred_check
          %p198 = pneg %p197
        $region34: #{tpu_custom_call.1} parent=31 // pred_check_branch
          %200 = sbr.rel (%p198) target = $region36
        $region35: #{tpu_custom_call.1} parent=31 // pred_region
          %201 = vst [vmem:[#allocation2] sm:$0xff] 0.0
          %202 = vst [vmem:[#allocation2 + $0x8] sm:$0xff] 0.0
        $region36: #{tpu_custom_call.1} parent=31 // pred_fallthru
          _
        %v203 = vld [vmem:[%s195] sm:$0xff]
        %v204 = vld [vmem:[%s195 + $0x8] sm:$0xff]
        %v205 = vld [vmem:[%s195 + $0x10] sm:$0xff]
        %v206 = vld [vmem:[%s195 + $0x18] sm:$0xff]
        %v207 = vld [vmem:[%s195 + $0x20] sm:$0xff]
        %v208 = vld [vmem:[%s195 + $0x28] sm:$0xff]
        %v209 = vld [vmem:[%s195 + $0x30] sm:$0xff]
        %v210 = vld [vmem:[%s195 + $0x38] sm:$0xff]
        %v211 = vld [vmem:[%s195 + $0x40] sm:$0xff]
        %v212 = vld [vmem:[%s195 + $0x48] sm:$0xff]
        %v213 = vld [vmem:[%s195 + $0x50] sm:$0xff]
        %v214 = vld [vmem:[%s195 + $0x58] sm:$0xff]
        %v215 = vld [vmem:[%s195 + $0x60] sm:$0xff]
        %v216 = vld [vmem:[%s195 + $0x68] sm:$0xff]
        %v217 = vld [vmem:[%s195 + $0x70] sm:$0xff]
        %v218 = vld [vmem:[%s195 + $0x78] sm:$0xff]
        %v219 = vld [vmem:[%s195 + $0x80] sm:$0xff]
        %v220 = vld [vmem:[%s195 + $0x88] sm:$0xff]
        %v221 = vld [vmem:[%s195 + $0x90] sm:$0xff]
        %v222 = vld [vmem:[%s195 + $0x98] sm:$0xff]
        %v223 = vld [vmem:[%s195 + $0xa0] sm:$0xff]
        %v224 = vld [vmem:[%s195 + $0xa8] sm:$0xff]
        %v225 = vld [vmem:[%s195 + $0xb0] sm:$0xff]
        %v226 = vld [vmem:[%s195 + $0xb8] sm:$0xff]
        %v227 = vld [vmem:[%s195 + $0xc0] sm:$0xff]
        %v228 = vld [vmem:[%s195 + $0xc8] sm:$0xff]
        %v229 = vld [vmem:[%s195 + $0xd0] sm:$0xff]
        %v230 = vld [vmem:[%s195 + $0xd8] sm:$0xff]
        %v231 = vld [vmem:[%s195 + $0xe0] sm:$0xff]
        %v232 = vld [vmem:[%s195 + $0xe8] sm:$0xff]
        %v233 = vld [vmem:[%s195 + $0xf0] sm:$0xff]
        %v234 = vld [vmem:[%s195 + $0xf8] sm:$0xff]
        %v235 = vld [vmem:[%s1] sm:$0x77]
        %v236 = vld [vmem:[%s1 + $0x8] sm:$0x77]
        %238 = vset.pattern.permute.xlu0 0
        %239 = vperm.xlu0 %238, %v203
        %v240 = vpop.permute.xlu0 %239
        %243 = vset.pattern.permute.xlu0 0
        %244 = vperm.xlu0 %243, %v204
        %v245 = vpop.permute.xlu0 %244
        %248 = vset.pattern.permute.xlu0 0
        %249 = vperm.xlu0 %248, %v205
        %v250 = vpop.permute.xlu0 %249
        %253 = vset.pattern.permute.xlu0 0
        %254 = vperm.xlu0 %253, %v206
        %v255 = vpop.permute.xlu0 %254
        %258 = vset.pattern.permute.xlu0 0
        %259 = vperm.xlu0 %258, %v207
        %v260 = vpop.permute.xlu0 %259
        %263 = vset.pattern.permute.xlu0 0
        %264 = vperm.xlu0 %263, %v208
        %v265 = vpop.permute.xlu0 %264
        %268 = vset.pattern.permute.xlu0 0
        %269 = vperm.xlu0 %268, %v209
        %v270 = vpop.permute.xlu0 %269
        %273 = vset.pattern.permute.xlu0 0
        %274 = vperm.xlu0 %273, %v210
        %v275 = vpop.permute.xlu0 %274
        %278 = vset.pattern.permute.xlu0 0
        %279 = vperm.xlu0 %278, %v211
        %v280 = vpop.permute.xlu0 %279
        %283 = vset.pattern.permute.xlu0 0
        %284 = vperm.xlu0 %283, %v212
        %v285 = vpop.permute.xlu0 %284
        %288 = vset.pattern.permute.xlu0 0
        %289 = vperm.xlu0 %288, %v213
        %v290 = vpop.permute.xlu0 %289
        %293 = vset.pattern.permute.xlu0 0
        %294 = vperm.xlu0 %293, %v214
        %v295 = vpop.permute.xlu0 %294
        %298 = vset.pattern.permute.xlu0 0
        %299 = vperm.xlu0 %298, %v215
        %v300 = vpop.permute.xlu0 %299
        %303 = vset.pattern.permute.xlu0 0
        %304 = vperm.xlu0 %303, %v216
        %v305 = vpop.permute.xlu0 %304
        %308 = vset.pattern.permute.xlu0 0
        %309 = vperm.xlu0 %308, %v217
        %v310 = vpop.permute.xlu0 %309
        %313 = vset.pattern.permute.xlu0 0
        %314 = vperm.xlu0 %313, %v218
        %v315 = vpop.permute.xlu0 %314
        %318 = vset.pattern.permute.xlu0 0
        %319 = vperm.xlu0 %318, %v219
        %v320 = vpop.permute.xlu0 %319
        %323 = vset.pattern.permute.xlu0 0
        %324 = vperm.xlu0 %323, %v220
        %v325 = vpop.permute.xlu0 %324
        %328 = vset.pattern.permute.xlu0 0
        %329 = vperm.xlu0 %328, %v221
        %v330 = vpop.permute.xlu0 %329
        %333 = vset.pattern.permute.xlu0 0
        %334 = vperm.xlu0 %333, %v222
        %v335 = vpop.permute.xlu0 %334
        %338 = vset.pattern.permute.xlu0 0
        %339 = vperm.xlu0 %338, %v223
        %v340 = vpop.permute.xlu0 %339
        %343 = vset.pattern.permute.xlu0 0
        %344 = vperm.xlu0 %343, %v224
        %v345 = vpop.permute.xlu0 %344
        %348 = vset.pattern.permute.xlu0 0
        %349 = vperm.xlu0 %348, %v225
        %v350 = vpop.permute.xlu0 %349
        %353 = vset.pattern.permute.xlu0 0
        %354 = vperm.xlu0 %353, %v226
        %v355 = vpop.permute.xlu0 %354
        %358 = vset.pattern.permute.xlu0 0
        %359 = vperm.xlu0 %358, %v227
        %v360 = vpop.permute.xlu0 %359
        %363 = vset.pattern.permute.xlu0 0
        %364 = vperm.xlu0 %363, %v228
        %v365 = vpop.permute.xlu0 %364
        %368 = vset.pattern.permute.xlu0 0
        %369 = vperm.xlu0 %368, %v229
        %v370 = vpop.permute.xlu0 %369
        %373 = vset.pattern.permute.xlu0 0
        %374 = vperm.xlu0 %373, %v230
        %v375 = vpop.permute.xlu0 %374
        %378 = vset.pattern.permute.xlu0 0
        %379 = vperm.xlu0 %378, %v231
        %v380 = vpop.permute.xlu0 %379
        %383 = vset.pattern.permute.xlu0 0
        %384 = vperm.xlu0 %383, %v232
        %v385 = vpop.permute.xlu0 %384
        %388 = vset.pattern.permute.xlu0 0
        %389 = vperm.xlu0 %388, %v233
        %v390 = vpop.permute.xlu0 %389
        %393 = vset.pattern.permute.xlu0 0
        %394 = vperm.xlu0 %393, %v234
        %v395 = vpop.permute.xlu0 %394
        %v399 = vlaneseq
        %v400 = vshrl.u32 %v399, 7
        %v401 = vsub.s32 0, %v400
        %v402 = vrot.slane %v235, %v401
        %v403 = vlaneseq
        %v404 = vshrl.u32 %v403, 7
        %v405 = vsub.s32 4, %v404
        %v406 = vrot.slane %v235, %v405
        %v407 = vlaneseq
        %v408 = vshrl.u32 %v407, 7
        %v409 = vsub.s32 0, %v408
        %v410 = vrot.slane %v236, %v409
        %v411 = vlaneseq
        %v412 = vshrl.u32 %v411, 7
        %v413 = vsub.s32 4, %v412
        %v414 = vrot.slane %v236, %v413
        %v419 = vlaneseq
        %v420 = vshrl.u32 %v419, 7
        %v421 = vsub.s32 0, %v420
        %v422 = vrot.slane %v402, %v421
        %v423 = vlaneseq
        %v424 = vshrl.u32 %v423, 7
        %v425 = vsub.s32 0, %v424
        %v426 = vrot.slane %v406, %v425
        %v427 = vlaneseq
        %v428 = vshrl.u32 %v427, 7
        %v429 = vsub.s32 0, %v428
        %v430 = vrot.slane %v410, %v429
        %v431 = vlaneseq
        %v432 = vshrl.u32 %v431, 7
        %v433 = vsub.s32 0, %v432
        %v434 = vrot.slane %v414, %v433
        %v435 = vmul.f32 %v240, %v422
        %v436 = vmul.f32 %v240, %v426
        %v437 = vmul.f32 %v240, %v430
        %v438 = vmul.f32 %v240, %v434
        %v439 = vmul.f32 %v245, %v422
        %v440 = vmul.f32 %v245, %v426
        %v441 = vmul.f32 %v245, %v430
        %v442 = vmul.f32 %v245, %v434
        %v443 = vmul.f32 %v250, %v422
        %v444 = vmul.f32 %v250, %v426
        %v445 = vmul.f32 %v250, %v430
        %v446 = vmul.f32 %v250, %v434
        %v447 = vmul.f32 %v255, %v422
        %v448 = vmul.f32 %v255, %v426
        %v449 = vmul.f32 %v255, %v430
        %v450 = vmul.f32 %v255, %v434
        %v451 = vmul.f32 %v260, %v422
        %v452 = vmul.f32 %v260, %v426
        %v453 = vmul.f32 %v260, %v430
        %v454 = vmul.f32 %v260, %v434
        %v455 = vmul.f32 %v265, %v422
        %v456 = vmul.f32 %v265, %v426
        %v457 = vmul.f32 %v265, %v430
        %v458 = vmul.f32 %v265, %v434
        %v459 = vmul.f32 %v270, %v422
        %v460 = vmul.f32 %v270, %v426
        %v461 = vmul.f32 %v270, %v430
        %v462 = vmul.f32 %v270, %v434
        %v463 = vmul.f32 %v275, %v422
        %v464 = vmul.f32 %v275, %v426
        %v465 = vmul.f32 %v275, %v430
        %v466 = vmul.f32 %v275, %v434
        %v467 = vmul.f32 %v280, %v422
        %v468 = vmul.f32 %v280, %v426
        %v469 = vmul.f32 %v280, %v430
        %v470 = vmul.f32 %v280, %v434
        %v471 = vmul.f32 %v285, %v422
        %v472 = vmul.f32 %v285, %v426
        %v473 = vmul.f32 %v285, %v430
        %v474 = vmul.f32 %v285, %v434
        %v475 = vmul.f32 %v290, %v422
        %v476 = vmul.f32 %v290, %v426
        %v477 = vmul.f32 %v290, %v430
        %v478 = vmul.f32 %v290, %v434
        %v479 = vmul.f32 %v295, %v422
        %v480 = vmul.f32 %v295, %v426
        %v481 = vmul.f32 %v295, %v430
        %v482 = vmul.f32 %v295, %v434
        %v483 = vmul.f32 %v300, %v422
        %v484 = vmul.f32 %v300, %v426
        %v485 = vmul.f32 %v300, %v430
        %v486 = vmul.f32 %v300, %v434
        %v487 = vmul.f32 %v305, %v422
        %v488 = vmul.f32 %v305, %v426
        %v489 = vmul.f32 %v305, %v430
        %v490 = vmul.f32 %v305, %v434
        %v491 = vmul.f32 %v310, %v422
        %v492 = vmul.f32 %v310, %v426
        %v493 = vmul.f32 %v310, %v430
        %v494 = vmul.f32 %v310, %v434
        %v495 = vmul.f32 %v315, %v422
        %v496 = vmul.f32 %v315, %v426
        %v497 = vmul.f32 %v315, %v430
        %v498 = vmul.f32 %v315, %v434
        %v499 = vmul.f32 %v320, %v422
        %v500 = vmul.f32 %v320, %v426
        %v501 = vmul.f32 %v320, %v430
        %v502 = vmul.f32 %v320, %v434
        %v503 = vmul.f32 %v325, %v422
        %v504 = vmul.f32 %v325, %v426
        %v505 = vmul.f32 %v325, %v430
        %v506 = vmul.f32 %v325, %v434
        %v507 = vmul.f32 %v330, %v422
        %v508 = vmul.f32 %v330, %v426
        %v509 = vmul.f32 %v330, %v430
        %v510 = vmul.f32 %v330, %v434
        %v511 = vmul.f32 %v335, %v422
        %v512 = vmul.f32 %v335, %v426
        %v513 = vmul.f32 %v335, %v430
        %v514 = vmul.f32 %v335, %v434
        %v515 = vmul.f32 %v340, %v422
        %v516 = vmul.f32 %v340, %v426
        %v517 = vmul.f32 %v340, %v430
        %v518 = vmul.f32 %v340, %v434
        %v519 = vmul.f32 %v345, %v422
        %v520 = vmul.f32 %v345, %v426
        %v521 = vmul.f32 %v345, %v430
        %v522 = vmul.f32 %v345, %v434
        %v523 = vmul.f32 %v350, %v422
        %v524 = vmul.f32 %v350, %v426
        %v525 = vmul.f32 %v350, %v430
        %v526 = vmul.f32 %v350, %v434
        %v527 = vmul.f32 %v355, %v422
        %v528 = vmul.f32 %v355, %v426
        %v529 = vmul.f32 %v355, %v430
        %v530 = vmul.f32 %v355, %v434
        %v531 = vmul.f32 %v360, %v422
        %v532 = vmul.f32 %v360, %v426
        %v533 = vmul.f32 %v360, %v430
        %v534 = vmul.f32 %v360, %v434
        %v535 = vmul.f32 %v365, %v422
        %v536 = vmul.f32 %v365, %v426
        %v537 = vmul.f32 %v365, %v430
        %v538 = vmul.f32 %v365, %v434
        %v539 = vmul.f32 %v370, %v422
        %v540 = vmul.f32 %v370, %v426
        %v541 = vmul.f32 %v370, %v430
        %v542 = vmul.f32 %v370, %v434
        %v543 = vmul.f32 %v375, %v422
        %v544 = vmul.f32 %v375, %v426
        %v545 = vmul.f32 %v375, %v430
        %v546 = vmul.f32 %v375, %v434
        %v547 = vmul.f32 %v380, %v422
        %v548 = vmul.f32 %v380, %v426
        %v549 = vmul.f32 %v380, %v430
        %v550 = vmul.f32 %v380, %v434
        %v551 = vmul.f32 %v385, %v422
        %v552 = vmul.f32 %v385, %v426
        %v553 = vmul.f32 %v385, %v430
        %v554 = vmul.f32 %v385, %v434
        %v555 = vmul.f32 %v390, %v422
        %v556 = vmul.f32 %v390, %v426
        %v557 = vmul.f32 %v390, %v430
        %v558 = vmul.f32 %v390, %v434
        %v559 = vmul.f32 %v395, %v422
        %v560 = vmul.f32 %v395, %v426
        %v561 = vmul.f32 %v395, %v430
        %v562 = vmul.f32 %v395, %v434
        %563 = vset.pattern.permute.xlu0 1
        %564 = vperm.xlu0 %563, %v203
        %v565 = vpop.permute.xlu0 %564
        %567 = vset.pattern.permute.xlu0 1
        %568 = vperm.xlu0 %567, %v204
        %v569 = vpop.permute.xlu0 %568
        %571 = vset.pattern.permute.xlu0 1
        %572 = vperm.xlu0 %571, %v205
        %v573 = vpop.permute.xlu0 %572
        %575 = vset.pattern.permute.xlu0 1
        %576 = vperm.xlu0 %575, %v206
        %v577 = vpop.permute.xlu0 %576
        %579 = vset.pattern.permute.xlu0 1
        %580 = vperm.xlu0 %579, %v207
        %v581 = vpop.permute.xlu0 %580
        %583 = vset.pattern.permute.xlu0 1
        %584 = vperm.xlu0 %583, %v208
        %v585 = vpop.permute.xlu0 %584
        %587 = vset.pattern.permute.xlu0 1
        %588 = vperm.xlu0 %587, %v209
        %v589 = vpop.permute.xlu0 %588
        %591 = vset.pattern.permute.xlu0 1
        %592 = vperm.xlu0 %591, %v210
        %v593 = vpop.permute.xlu0 %592
        %595 = vset.pattern.permute.xlu0 1
        %596 = vperm.xlu0 %595, %v211
        %v597 = vpop.permute.xlu0 %596
        %599 = vset.pattern.permute.xlu0 1
        %600 = vperm.xlu0 %599, %v212
        %v601 = vpop.permute.xlu0 %600
        %603 = vset.pattern.permute.xlu0 1
        %604 = vperm.xlu0 %603, %v213
        %v605 = vpop.permute.xlu0 %604
        %607 = vset.pattern.permute.xlu0 1
        %608 = vperm.xlu0 %607, %v214
        %v609 = vpop.permute.xlu0 %608
        %611 = vset.pattern.permute.xlu0 1
        %612 = vperm.xlu0 %611, %v215
        %v613 = vpop.permute.xlu0 %612
        %615 = vset.pattern.permute.xlu0 1
        %616 = vperm.xlu0 %615, %v216
        %v617 = vpop.permute.xlu0 %616
        %619 = vset.pattern.permute.xlu0 1
        %620 = vperm.xlu0 %619, %v217
        %v621 = vpop.permute.xlu0 %620
        %623 = vset.pattern.permute.xlu0 1
        %624 = vperm.xlu0 %623, %v218
        %v625 = vpop.permute.xlu0 %624
        %627 = vset.pattern.permute.xlu0 1
        %628 = vperm.xlu0 %627, %v219
        %v629 = vpop.permute.xlu0 %628
        %631 = vset.pattern.permute.xlu0 1
        %632 = vperm.xlu0 %631, %v220
        %v633 = vpop.permute.xlu0 %632
        %635 = vset.pattern.permute.xlu0 1
        %636 = vperm.xlu0 %635, %v221
        %v637 = vpop.permute.xlu0 %636
        %639 = vset.pattern.permute.xlu0 1
        %640 = vperm.xlu0 %639, %v222
        %v641 = vpop.permute.xlu0 %640
        %643 = vset.pattern.permute.xlu0 1
        %644 = vperm.xlu0 %643, %v223
        %v645 = vpop.permute.xlu0 %644
        %647 = vset.pattern.permute.xlu0 1
        %648 = vperm.xlu0 %647, %v224
        %v649 = vpop.permute.xlu0 %648
        %651 = vset.pattern.permute.xlu0 1
        %652 = vperm.xlu0 %651, %v225
        %v653 = vpop.permute.xlu0 %652
        %655 = vset.pattern.permute.xlu0 1
        %656 = vperm.xlu0 %655, %v226
        %v657 = vpop.permute.xlu0 %656
        %659 = vset.pattern.permute.xlu0 1
        %660 = vperm.xlu0 %659, %v227
        %v661 = vpop.permute.xlu0 %660
        %663 = vset.pattern.permute.xlu0 1
        %664 = vperm.xlu0 %663, %v228
        %v665 = vpop.permute.xlu0 %664
        %667 = vset.pattern.permute.xlu0 1
        %668 = vperm.xlu0 %667, %v229
        %v669 = vpop.permute.xlu0 %668
        %671 = vset.pattern.permute.xlu0 1
        %672 = vperm.xlu0 %671, %v230
        %v673 = vpop.permute.xlu0 %672
        %675 = vset.pattern.permute.xlu0 1
        %676 = vperm.xlu0 %675, %v231
        %v677 = vpop.permute.xlu0 %676
        %679 = vset.pattern.permute.xlu0 1
        %680 = vperm.xlu0 %679, %v232
        %v681 = vpop.permute.xlu0 %680
        %683 = vset.pattern.permute.xlu0 1
        %684 = vperm.xlu0 %683, %v233
        %v685 = vpop.permute.xlu0 %684
        %687 = vset.pattern.permute.xlu0 1
        %688 = vperm.xlu0 %687, %v234
        %v689 = vpop.permute.xlu0 %688
        %v691 = vlaneseq
        %v692 = vshrl.u32 %v691, 7
        %v693 = vsub.s32 1, %v692
        %v694 = vrot.slane %v235, %v693
        %v695 = vlaneseq
        %v696 = vshrl.u32 %v695, 7
        %v697 = vsub.s32 5, %v696
        %v698 = vrot.slane %v235, %v697
        %v699 = vlaneseq
        %v700 = vshrl.u32 %v699, 7
        %v701 = vsub.s32 1, %v700
        %v702 = vrot.slane %v236, %v701
        %v703 = vlaneseq
        %v704 = vshrl.u32 %v703, 7
        %v705 = vsub.s32 5, %v704
        %v706 = vrot.slane %v236, %v705
        %v711 = vlaneseq
        %v712 = vshrl.u32 %v711, 7
        %v713 = vsub.s32 1, %v712
        %v714 = vrot.slane %v694, %v713
        %v715 = vlaneseq
        %v716 = vshrl.u32 %v715, 7
        %v717 = vsub.s32 1, %v716
        %v718 = vrot.slane %v698, %v717
        %v719 = vlaneseq
        %v720 = vshrl.u32 %v719, 7
        %v721 = vsub.s32 1, %v720
        %v722 = vrot.slane %v702, %v721
        %v723 = vlaneseq
        %v724 = vshrl.u32 %v723, 7
        %v725 = vsub.s32 1, %v724
        %v726 = vrot.slane %v706, %v725
        %v727 = vmul.f32 %v565, %v714
        %v728 = vmul.f32 %v565, %v718
        %v729 = vmul.f32 %v565, %v722
        %v730 = vmul.f32 %v565, %v726
        %v731 = vmul.f32 %v569, %v714
        %v732 = vmul.f32 %v569, %v718
        %v733 = vmul.f32 %v569, %v722
        %v734 = vmul.f32 %v569, %v726
        %v735 = vmul.f32 %v573, %v714
        %v736 = vmul.f32 %v573, %v718
        %v737 = vmul.f32 %v573, %v722
        %v738 = vmul.f32 %v573, %v726
        %v739 = vmul.f32 %v577, %v714
        %v740 = vmul.f32 %v577, %v718
        %v741 = vmul.f32 %v577, %v722
        %v742 = vmul.f32 %v577, %v726
        %v743 = vmul.f32 %v581, %v714
        %v744 = vmul.f32 %v581, %v718
        %v745 = vmul.f32 %v581, %v722
        %v746 = vmul.f32 %v581, %v726
        %v747 = vmul.f32 %v585, %v714
        %v748 = vmul.f32 %v585, %v718
        %v749 = vmul.f32 %v585, %v722
        %v750 = vmul.f32 %v585, %v726
        %v751 = vmul.f32 %v589, %v714
        %v752 = vmul.f32 %v589, %v718
        %v753 = vmul.f32 %v589, %v722
        %v754 = vmul.f32 %v589, %v726
        %v755 = vmul.f32 %v593, %v714
        %v756 = vmul.f32 %v593, %v718
        %v757 = vmul.f32 %v593, %v722
        %v758 = vmul.f32 %v593, %v726
        %v759 = vmul.f32 %v597, %v714
        %v760 = vmul.f32 %v597, %v718
        %v761 = vmul.f32 %v597, %v722
        %v762 = vmul.f32 %v597, %v726
        %v763 = vmul.f32 %v601, %v714
        %v764 = vmul.f32 %v601, %v718
        %v765 = vmul.f32 %v601, %v722
        %v766 = vmul.f32 %v601, %v726
        %v767 = vmul.f32 %v605, %v714
        %v768 = vmul.f32 %v605, %v718
        %v769 = vmul.f32 %v605, %v722
        %v770 = vmul.f32 %v605, %v726
        %v771 = vmul.f32 %v609, %v714
        %v772 = vmul.f32 %v609, %v718
        %v773 = vmul.f32 %v609, %v722
        %v774 = vmul.f32 %v609, %v726
        %v775 = vmul.f32 %v613, %v714
        %v776 = vmul.f32 %v613, %v718
        %v777 = vmul.f32 %v613, %v722
        %v778 = vmul.f32 %v613, %v726
        %v779 = vmul.f32 %v617, %v714
        %v780 = vmul.f32 %v617, %v718
        %v781 = vmul.f32 %v617, %v722
        %v782 = vmul.f32 %v617, %v726
        %v783 = vmul.f32 %v621, %v714
        %v784 = vmul.f32 %v621, %v718
        %v785 = vmul.f32 %v621, %v722
        %v786 = vmul.f32 %v621, %v726
        %v787 = vmul.f32 %v625, %v714
        %v788 = vmul.f32 %v625, %v718
        %v789 = vmul.f32 %v625, %v722
        %v790 = vmul.f32 %v625, %v726
        %v791 = vmul.f32 %v629, %v714
        %v792 = vmul.f32 %v629, %v718
        %v793 = vmul.f32 %v629, %v722
        %v794 = vmul.f32 %v629, %v726
        %v795 = vmul.f32 %v633, %v714
        %v796 = vmul.f32 %v633, %v718
        %v797 = vmul.f32 %v633, %v722
        %v798 = vmul.f32 %v633, %v726
        %v799 = vmul.f32 %v637, %v714
        %v800 = vmul.f32 %v637, %v718
        %v801 = vmul.f32 %v637, %v722
        %v802 = vmul.f32 %v637, %v726
        %v803 = vmul.f32 %v641, %v714
        %v804 = vmul.f32 %v641, %v718
        %v805 = vmul.f32 %v641, %v722
        %v806 = vmul.f32 %v641, %v726
        %v807 = vmul.f32 %v645, %v714
        %v808 = vmul.f32 %v645, %v718
        %v809 = vmul.f32 %v645, %v722
        %v810 = vmul.f32 %v645, %v726
        %v811 = vmul.f32 %v649, %v714
        %v812 = vmul.f32 %v649, %v718
        %v813 = vmul.f32 %v649, %v722
        %v814 = vmul.f32 %v649, %v726
        %v815 = vmul.f32 %v653, %v714
        %v816 = vmul.f32 %v653, %v718
        %v817 = vmul.f32 %v653, %v722
        %v818 = vmul.f32 %v653, %v726
        %v819 = vmul.f32 %v657, %v714
        %v820 = vmul.f32 %v657, %v718
        %v821 = vmul.f32 %v657, %v722
        %v822 = vmul.f32 %v657, %v726
        %v823 = vmul.f32 %v661, %v714
        %v824 = vmul.f32 %v661, %v718
        %v825 = vmul.f32 %v661, %v722
        %v826 = vmul.f32 %v661, %v726
        %v827 = vmul.f32 %v665, %v714
        %v828 = vmul.f32 %v665, %v718
        %v829 = vmul.f32 %v665, %v722
        %v830 = vmul.f32 %v665, %v726
        %v831 = vmul.f32 %v669, %v714
        %v832 = vmul.f32 %v669, %v718
        %v833 = vmul.f32 %v669, %v722
        %v834 = vmul.f32 %v669, %v726
        %v835 = vmul.f32 %v673, %v714
        %v836 = vmul.f32 %v673, %v718
        %v837 = vmul.f32 %v673, %v722
        %v838 = vmul.f32 %v673, %v726
        %v839 = vmul.f32 %v677, %v714
        %v840 = vmul.f32 %v677, %v718
        %v841 = vmul.f32 %v677, %v722
        %v842 = vmul.f32 %v677, %v726
        %v843 = vmul.f32 %v681, %v714
        %v844 = vmul.f32 %v681, %v718
        %v845 = vmul.f32 %v681, %v722
        %v846 = vmul.f32 %v681, %v726
        %v847 = vmul.f32 %v685, %v714
        %v848 = vmul.f32 %v685, %v718
        %v849 = vmul.f32 %v685, %v722
        %v850 = vmul.f32 %v685, %v726
        %v851 = vmul.f32 %v689, %v714
        %v852 = vmul.f32 %v689, %v718
        %v853 = vmul.f32 %v689, %v722
        %v854 = vmul.f32 %v689, %v726
        %v855 = vadd.f32 %v435, %v727
        %v856 = vadd.f32 %v436, %v728
        %v857 = vadd.f32 %v437, %v729
        %v858 = vadd.f32 %v438, %v730
        %v859 = vadd.f32 %v439, %v731
        %v860 = vadd.f32 %v440, %v732
        %v861 = vadd.f32 %v441, %v733
        %v862 = vadd.f32 %v442, %v734
        %v863 = vadd.f32 %v443, %v735
        %v864 = vadd.f32 %v444, %v736
        %v865 = vadd.f32 %v445, %v737
        %v866 = vadd.f32 %v446, %v738
        %v867 = vadd.f32 %v447, %v739
        %v868 = vadd.f32 %v448, %v740
        %v869 = vadd.f32 %v449, %v741
        %v870 = vadd.f32 %v450, %v742
        %v871 = vadd.f32 %v451, %v743
        %v872 = vadd.f32 %v452, %v744
        %v873 = vadd.f32 %v453, %v745
        %v874 = vadd.f32 %v454, %v746
        %v875 = vadd.f32 %v455, %v747
        %v876 = vadd.f32 %v456, %v748
        %v877 = vadd.f32 %v457, %v749
        %v878 = vadd.f32 %v458, %v750
        %v879 = vadd.f32 %v459, %v751
        %v880 = vadd.f32 %v460, %v752
        %v881 = vadd.f32 %v461, %v753
        %v882 = vadd.f32 %v462, %v754
        %v883 = vadd.f32 %v463, %v755
        %v884 = vadd.f32 %v464, %v756
        %v885 = vadd.f32 %v465, %v757
        %v886 = vadd.f32 %v466, %v758
        %v887 = vadd.f32 %v467, %v759
        %v888 = vadd.f32 %v468, %v760
        %v889 = vadd.f32 %v469, %v761
        %v890 = vadd.f32 %v470, %v762
        %v891 = vadd.f32 %v471, %v763
        %v892 = vadd.f32 %v472, %v764
        %v893 = vadd.f32 %v473, %v765
        %v894 = vadd.f32 %v474, %v766
        %v895 = vadd.f32 %v475, %v767
        %v896 = vadd.f32 %v476, %v768
        %v897 = vadd.f32 %v477, %v769
        %v898 = vadd.f32 %v478, %v770
        %v899 = vadd.f32 %v479, %v771
        %v900 = vadd.f32 %v480, %v772
        %v901 = vadd.f32 %v481, %v773
        %v902 = vadd.f32 %v482, %v774
        %v903 = vadd.f32 %v483, %v775
        %v904 = vadd.f32 %v484, %v776
        %v905 = vadd.f32 %v485, %v777
        %v906 = vadd.f32 %v486, %v778
        %v907 = vadd.f32 %v487, %v779
        %v908 = vadd.f32 %v488, %v780
        %v909 = vadd.f32 %v489, %v781
        %v910 = vadd.f32 %v490, %v782
        %v911 = vadd.f32 %v491, %v783
        %v912 = vadd.f32 %v492, %v784
        %v913 = vadd.f32 %v493, %v785
        %v914 = vadd.f32 %v494, %v786
        %v915 = vadd.f32 %v495, %v787
        %v916 = vadd.f32 %v496, %v788
        %v917 = vadd.f32 %v497, %v789
        %v918 = vadd.f32 %v498, %v790
        %v919 = vadd.f32 %v499, %v791
        %v920 = vadd.f32 %v500, %v792
        %v921 = vadd.f32 %v501, %v793
        %v922 = vadd.f32 %v502, %v794
        %v923 = vadd.f32 %v503, %v795
        %v924 = vadd.f32 %v504, %v796
        %v925 = vadd.f32 %v505, %v797
        %v926 = vadd.f32 %v506, %v798
        %v927 = vadd.f32 %v507, %v799
        %v928 = vadd.f32 %v508, %v800
        %v929 = vadd.f32 %v509, %v801
        %v930 = vadd.f32 %v510, %v802
        %v931 = vadd.f32 %v511, %v803
        %v932 = vadd.f32 %v512, %v804
        %v933 = vadd.f32 %v513, %v805
        %v934 = vadd.f32 %v514, %v806
        %v935 = vadd.f32 %v515, %v807
        %v936 = vadd.f32 %v516, %v808
        %v937 = vadd.f32 %v517, %v809
        %v938 = vadd.f32 %v518, %v810
        %v939 = vadd.f32 %v519, %v811
        %v940 = vadd.f32 %v520, %v812
        %v941 = vadd.f32 %v521, %v813
        %v942 = vadd.f32 %v522, %v814
        %v943 = vadd.f32 %v523, %v815
        %v944 = vadd.f32 %v524, %v816
        %v945 = vadd.f32 %v525, %v817
        %v946 = vadd.f32 %v526, %v818
        %v947 = vadd.f32 %v527, %v819
        %v948 = vadd.f32 %v528, %v820
        %v949 = vadd.f32 %v529, %v821
        %v950 = vadd.f32 %v530, %v822
        %v951 = vadd.f32 %v531, %v823
        %v952 = vadd.f32 %v532, %v824
        %v953 = vadd.f32 %v533, %v825
        %v954 = vadd.f32 %v534, %v826
        %v955 = vadd.f32 %v535, %v827
        %v956 = vadd.f32 %v536, %v828
        %v957 = vadd.f32 %v537, %v829
        %v958 = vadd.f32 %v538, %v830
        %v959 = vadd.f32 %v539, %v831
        %v960 = vadd.f32 %v540, %v832
        %v961 = vadd.f32 %v541, %v833
        %v962 = vadd.f32 %v542, %v834
        %v963 = vadd.f32 %v543, %v835
        %v964 = vadd.f32 %v544, %v836
        %v965 = vadd.f32 %v545, %v837
        %v966 = vadd.f32 %v546, %v838
        %v967 = vadd.f32 %v547, %v839
        %v968 = vadd.f32 %v548, %v840
        %v969 = vadd.f32 %v549, %v841
        %v970 = vadd.f32 %v550, %v842
        %v971 = vadd.f32 %v551, %v843
        %v972 = vadd.f32 %v552, %v844
        %v973 = vadd.f32 %v553, %v845
        %v974 = vadd.f32 %v554, %v846
        %v975 = vadd.f32 %v555, %v847
        %v976 = vadd.f32 %v556, %v848
        %v977 = vadd.f32 %v557, %v849
        %v978 = vadd.f32 %v558, %v850
        %v979 = vadd.f32 %v559, %v851
        %v980 = vadd.f32 %v560, %v852
        %v981 = vadd.f32 %v561, %v853
        %v982 = vadd.f32 %v562, %v854
        %983 = vset.pattern.permute.xlu0 2
        %984 = vperm.xlu0 %983, %v203
        %v985 = vpop.permute.xlu0 %984
        %987 = vset.pattern.permute.xlu0 2
        %988 = vperm.xlu0 %987, %v204
        %v989 = vpop.permute.xlu0 %988
        %991 = vset.pattern.permute.xlu0 2
        %992 = vperm.xlu0 %991, %v205
        %v993 = vpop.permute.xlu0 %992
        %995 = vset.pattern.permute.xlu0 2
        %996 = vperm.xlu0 %995, %v206
        %v997 = vpop.permute.xlu0 %996
        %999 = vset.pattern.permute.xlu0 2
        %1000 = vperm.xlu0 %999, %v207
        %v1001 = vpop.permute.xlu0 %1000
        %1003 = vset.pattern.permute.xlu0 2
        %1004 = vperm.xlu0 %1003, %v208
        %v1005 = vpop.permute.xlu0 %1004
        %1007 = vset.pattern.permute.xlu0 2
        %1008 = vperm.xlu0 %1007, %v209
        %v1009 = vpop.permute.xlu0 %1008
        %1011 = vset.pattern.permute.xlu0 2
        %1012 = vperm.xlu0 %1011, %v210
        %v1013 = vpop.permute.xlu0 %1012
        %1015 = vset.pattern.permute.xlu0 2
        %1016 = vperm.xlu0 %1015, %v211
        %v1017 = vpop.permute.xlu0 %1016
        %1019 = vset.pattern.permute.xlu0 2
        %1020 = vperm.xlu0 %1019, %v212
        %v1021 = vpop.permute.xlu0 %1020
        %1023 = vset.pattern.permute.xlu0 2
        %1024 = vperm.xlu0 %1023, %v213
        %v1025 = vpop.permute.xlu0 %1024
        %1027 = vset.pattern.permute.xlu0 2
        %1028 = vperm.xlu0 %1027, %v214
        %v1029 = vpop.permute.xlu0 %1028
        %1031 = vset.pattern.permute.xlu0 2
        %1032 = vperm.xlu0 %1031, %v215
        %v1033 = vpop.permute.xlu0 %1032
        %1035 = vset.pattern.permute.xlu0 2
        %1036 = vperm.xlu0 %1035, %v216
        %v1037 = vpop.permute.xlu0 %1036
        %1039 = vset.pattern.permute.xlu0 2
        %1040 = vperm.xlu0 %1039, %v217
        %v1041 = vpop.permute.xlu0 %1040
        %1043 = vset.pattern.permute.xlu0 2
        %1044 = vperm.xlu0 %1043, %v218
        %v1045 = vpop.permute.xlu0 %1044
        %1047 = vset.pattern.permute.xlu0 2
        %1048 = vperm.xlu0 %1047, %v219
        %v1049 = vpop.permute.xlu0 %1048
        %1051 = vset.pattern.permute.xlu0 2
        %1052 = vperm.xlu0 %1051, %v220
        %v1053 = vpop.permute.xlu0 %1052
        %1055 = vset.pattern.permute.xlu0 2
        %1056 = vperm.xlu0 %1055, %v221
        %v1057 = vpop.permute.xlu0 %1056
        %1059 = vset.pattern.permute.xlu0 2
        %1060 = vperm.xlu0 %1059, %v222
        %v1061 = vpop.permute.xlu0 %1060
        %1063 = vset.pattern.permute.xlu0 2
        %1064 = vperm.xlu0 %1063, %v223
        %v1065 = vpop.permute.xlu0 %1064
        %1067 = vset.pattern.permute.xlu0 2
        %1068 = vperm.xlu0 %1067, %v224
        %v1069 = vpop.permute.xlu0 %1068
        %1071 = vset.pattern.permute.xlu0 2
        %1072 = vperm.xlu0 %1071, %v225
        %v1073 = vpop.permute.xlu0 %1072
        %1075 = vset.pattern.permute.xlu0 2
        %1076 = vperm.xlu0 %1075, %v226
        %v1077 = vpop.permute.xlu0 %1076
        %1079 = vset.pattern.permute.xlu0 2
        %1080 = vperm.xlu0 %1079, %v227
        %v1081 = vpop.permute.xlu0 %1080
        %1083 = vset.pattern.permute.xlu0 2
        %1084 = vperm.xlu0 %1083, %v228
        %v1085 = vpop.permute.xlu0 %1084
        %1087 = vset.pattern.permute.xlu0 2
        %1088 = vperm.xlu0 %1087, %v229
        %v1089 = vpop.permute.xlu0 %1088
        %1091 = vset.pattern.permute.xlu0 2
        %1092 = vperm.xlu0 %1091, %v230
        %v1093 = vpop.permute.xlu0 %1092
        %1095 = vset.pattern.permute.xlu0 2
        %1096 = vperm.xlu0 %1095, %v231
        %v1097 = vpop.permute.xlu0 %1096
        %1099 = vset.pattern.permute.xlu0 2
        %1100 = vperm.xlu0 %1099, %v232
        %v1101 = vpop.permute.xlu0 %1100
        %1103 = vset.pattern.permute.xlu0 2
        %1104 = vperm.xlu0 %1103, %v233
        %v1105 = vpop.permute.xlu0 %1104
        %1107 = vset.pattern.permute.xlu0 2
        %1108 = vperm.xlu0 %1107, %v234
        %v1109 = vpop.permute.xlu0 %1108
        %v1111 = vlaneseq
        %v1112 = vshrl.u32 %v1111, 7
        %v1113 = vsub.s32 2, %v1112
        %v1114 = vrot.slane %v235, %v1113
        %v1115 = vlaneseq
        %v1116 = vshrl.u32 %v1115, 7
        %v1117 = vsub.s32 6, %v1116
        %v1118 = vrot.slane %v235, %v1117
        %v1119 = vlaneseq
        %v1120 = vshrl.u32 %v1119, 7
        %v1121 = vsub.s32 2, %v1120
        %v1122 = vrot.slane %v236, %v1121
        %v1123 = vlaneseq
        %v1124 = vshrl.u32 %v1123, 7
        %v1125 = vsub.s32 6, %v1124
        %v1126 = vrot.slane %v236, %v1125
        %v1131 = vlaneseq
        %v1132 = vshrl.u32 %v1131, 7
        %v1133 = vsub.s32 2, %v1132
        %v1134 = vrot.slane %v1114, %v1133
        %v1135 = vlaneseq
        %v1136 = vshrl.u32 %v1135, 7
        %v1137 = vsub.s32 2, %v1136
        %v1138 = vrot.slane %v1118, %v1137
        %v1139 = vlaneseq
        %v1140 = vshrl.u32 %v1139, 7
        %v1141 = vsub.s32 2, %v1140
        %v1142 = vrot.slane %v1122, %v1141
        %v1143 = vlaneseq
        %v1144 = vshrl.u32 %v1143, 7
        %v1145 = vsub.s32 2, %v1144
        %v1146 = vrot.slane %v1126, %v1145
        %v1147 = vmul.f32 %v985, %v1134
        %v1148 = vmul.f32 %v985, %v1138
        %v1149 = vmul.f32 %v985, %v1142
        %v1150 = vmul.f32 %v985, %v1146
        %v1151 = vmul.f32 %v989, %v1134
        %v1152 = vmul.f32 %v989, %v1138
        %v1153 = vmul.f32 %v989, %v1142
        %v1154 = vmul.f32 %v989, %v1146
        %v1155 = vmul.f32 %v993, %v1134
        %v1156 = vmul.f32 %v993, %v1138
        %v1157 = vmul.f32 %v993, %v1142
        %v1158 = vmul.f32 %v993, %v1146
        %v1159 = vmul.f32 %v997, %v1134
        %v1160 = vmul.f32 %v997, %v1138
        %v1161 = vmul.f32 %v997, %v1142
        %v1162 = vmul.f32 %v997, %v1146
        %v1163 = vmul.f32 %v1001, %v1134
        %v1164 = vmul.f32 %v1001, %v1138
        %v1165 = vmul.f32 %v1001, %v1142
        %v1166 = vmul.f32 %v1001, %v1146
        %v1167 = vmul.f32 %v1005, %v1134
        %v1168 = vmul.f32 %v1005, %v1138
        %v1169 = vmul.f32 %v1005, %v1142
        %v1170 = vmul.f32 %v1005, %v1146
        %v1171 = vmul.f32 %v1009, %v1134
        %v1172 = vmul.f32 %v1009, %v1138
        %v1173 = vmul.f32 %v1009, %v1142
        %v1174 = vmul.f32 %v1009, %v1146
        %v1175 = vmul.f32 %v1013, %v1134
        %v1176 = vmul.f32 %v1013, %v1138
        %v1177 = vmul.f32 %v1013, %v1142
        %v1178 = vmul.f32 %v1013, %v1146
        %v1179 = vmul.f32 %v1017, %v1134
        %v1180 = vmul.f32 %v1017, %v1138
        %v1181 = vmul.f32 %v1017, %v1142
        %v1182 = vmul.f32 %v1017, %v1146
        %v1183 = vmul.f32 %v1021, %v1134
        %v1184 = vmul.f32 %v1021, %v1138
        %v1185 = vmul.f32 %v1021, %v1142
        %v1186 = vmul.f32 %v1021, %v1146
        %v1187 = vmul.f32 %v1025, %v1134
        %v1188 = vmul.f32 %v1025, %v1138
        %v1189 = vmul.f32 %v1025, %v1142
        %v1190 = vmul.f32 %v1025, %v1146
        %v1191 = vmul.f32 %v1029, %v1134
        %v1192 = vmul.f32 %v1029, %v1138
        %v1193 = vmul.f32 %v1029, %v1142
        %v1194 = vmul.f32 %v1029, %v1146
        %v1195 = vmul.f32 %v1033, %v1134
        %v1196 = vmul.f32 %v1033, %v1138
        %v1197 = vmul.f32 %v1033, %v1142
        %v1198 = vmul.f32 %v1033, %v1146
        %v1199 = vmul.f32 %v1037, %v1134
        %v1200 = vmul.f32 %v1037, %v1138
        %v1201 = vmul.f32 %v1037, %v1142
        %v1202 = vmul.f32 %v1037, %v1146
        %v1203 = vmul.f32 %v1041, %v1134
        %v1204 = vmul.f32 %v1041, %v1138
        %v1205 = vmul.f32 %v1041, %v1142
        %v1206 = vmul.f32 %v1041, %v1146
        %v1207 = vmul.f32 %v1045, %v1134
        %v1208 = vmul.f32 %v1045, %v1138
        %v1209 = vmul.f32 %v1045, %v1142
        %v1210 = vmul.f32 %v1045, %v1146
        %v1211 = vmul.f32 %v1049, %v1134
        %v1212 = vmul.f32 %v1049, %v1138
        %v1213 = vmul.f32 %v1049, %v1142
        %v1214 = vmul.f32 %v1049, %v1146
        %v1215 = vmul.f32 %v1053, %v1134
        %v1216 = vmul.f32 %v1053, %v1138
        %v1217 = vmul.f32 %v1053, %v1142
        %v1218 = vmul.f32 %v1053, %v1146
        %v1219 = vmul.f32 %v1057, %v1134
        %v1220 = vmul.f32 %v1057, %v1138
        %v1221 = vmul.f32 %v1057, %v1142
        %v1222 = vmul.f32 %v1057, %v1146
        %v1223 = vmul.f32 %v1061, %v1134
        %v1224 = vmul.f32 %v1061, %v1138
        %v1225 = vmul.f32 %v1061, %v1142
        %v1226 = vmul.f32 %v1061, %v1146
        %v1227 = vmul.f32 %v1065, %v1134
        %v1228 = vmul.f32 %v1065, %v1138
        %v1229 = vmul.f32 %v1065, %v1142
        %v1230 = vmul.f32 %v1065, %v1146
        %v1231 = vmul.f32 %v1069, %v1134
        %v1232 = vmul.f32 %v1069, %v1138
        %v1233 = vmul.f32 %v1069, %v1142
        %v1234 = vmul.f32 %v1069, %v1146
        %v1235 = vmul.f32 %v1073, %v1134
        %v1236 = vmul.f32 %v1073, %v1138
        %v1237 = vmul.f32 %v1073, %v1142
        %v1238 = vmul.f32 %v1073, %v1146
        %v1239 = vmul.f32 %v1077, %v1134
        %v1240 = vmul.f32 %v1077, %v1138
        %v1241 = vmul.f32 %v1077, %v1142
        %v1242 = vmul.f32 %v1077, %v1146
        %v1243 = vmul.f32 %v1081, %v1134
        %v1244 = vmul.f32 %v1081, %v1138
        %v1245 = vmul.f32 %v1081, %v1142
        %v1246 = vmul.f32 %v1081, %v1146
        %v1247 = vmul.f32 %v1085, %v1134
        %v1248 = vmul.f32 %v1085, %v1138
        %v1249 = vmul.f32 %v1085, %v1142
        %v1250 = vmul.f32 %v1085, %v1146
        %v1251 = vmul.f32 %v1089, %v1134
        %v1252 = vmul.f32 %v1089, %v1138
        %v1253 = vmul.f32 %v1089, %v1142
        %v1254 = vmul.f32 %v1089, %v1146
        %v1255 = vmul.f32 %v1093, %v1134
        %v1256 = vmul.f32 %v1093, %v1138
        %v1257 = vmul.f32 %v1093, %v1142
        %v1258 = vmul.f32 %v1093, %v1146
        %v1259 = vmul.f32 %v1097, %v1134
        %v1260 = vmul.f32 %v1097, %v1138
        %v1261 = vmul.f32 %v1097, %v1142
        %v1262 = vmul.f32 %v1097, %v1146
        %v1263 = vmul.f32 %v1101, %v1134
        %v1264 = vmul.f32 %v1101, %v1138
        %v1265 = vmul.f32 %v1101, %v1142
        %v1266 = vmul.f32 %v1101, %v1146
        %v1267 = vmul.f32 %v1105, %v1134
        %v1268 = vmul.f32 %v1105, %v1138
        %v1269 = vmul.f32 %v1105, %v1142
        %v1270 = vmul.f32 %v1105, %v1146
        %v1271 = vmul.f32 %v1109, %v1134
        %v1272 = vmul.f32 %v1109, %v1138
        %v1273 = vmul.f32 %v1109, %v1142
        %v1274 = vmul.f32 %v1109, %v1146
        %v1275 = vadd.f32 %v855, %v1147
        %v1276 = vadd.f32 %v856, %v1148
        %v1277 = vadd.f32 %v857, %v1149
        %v1278 = vadd.f32 %v858, %v1150
        %v1279 = vadd.f32 %v859, %v1151
        %v1280 = vadd.f32 %v860, %v1152
        %v1281 = vadd.f32 %v861, %v1153
        %v1282 = vadd.f32 %v862, %v1154
        %v1283 = vadd.f32 %v863, %v1155
        %v1284 = vadd.f32 %v864, %v1156
        %v1285 = vadd.f32 %v865, %v1157
        %v1286 = vadd.f32 %v866, %v1158
        %v1287 = vadd.f32 %v867, %v1159
        %v1288 = vadd.f32 %v868, %v1160
        %v1289 = vadd.f32 %v869, %v1161
        %v1290 = vadd.f32 %v870, %v1162
        %v1291 = vadd.f32 %v871, %v1163
        %v1292 = vadd.f32 %v872, %v1164
        %v1293 = vadd.f32 %v873, %v1165
        %v1294 = vadd.f32 %v874, %v1166
        %v1295 = vadd.f32 %v875, %v1167
        %v1296 = vadd.f32 %v876, %v1168
        %v1297 = vadd.f32 %v877, %v1169
        %v1298 = vadd.f32 %v878, %v1170
        %v1299 = vadd.f32 %v879, %v1171
        %v1300 = vadd.f32 %v880, %v1172
        %v1301 = vadd.f32 %v881, %v1173
        %v1302 = vadd.f32 %v882, %v1174
        %v1303 = vadd.f32 %v883, %v1175
        %v1304 = vadd.f32 %v884, %v1176
        %v1305 = vadd.f32 %v885, %v1177
        %v1306 = vadd.f32 %v886, %v1178
        %v1307 = vadd.f32 %v887, %v1179
        %v1308 = vadd.f32 %v888, %v1180
        %v1309 = vadd.f32 %v889, %v1181
        %v1310 = vadd.f32 %v890, %v1182
        %v1311 = vadd.f32 %v891, %v1183
        %v1312 = vadd.f32 %v892, %v1184
        %v1313 = vadd.f32 %v893, %v1185
        %v1314 = vadd.f32 %v894, %v1186
        %v1315 = vadd.f32 %v895, %v1187
        %v1316 = vadd.f32 %v896, %v1188
        %v1317 = vadd.f32 %v897, %v1189
        %v1318 = vadd.f32 %v898, %v1190
        %v1319 = vadd.f32 %v899, %v1191
        %v1320 = vadd.f32 %v900, %v1192
        %v1321 = vadd.f32 %v901, %v1193
        %v1322 = vadd.f32 %v902, %v1194
        %v1323 = vadd.f32 %v903, %v1195
        %v1324 = vadd.f32 %v904, %v1196
        %v1325 = vadd.f32 %v905, %v1197
        %v1326 = vadd.f32 %v906, %v1198
        %v1327 = vadd.f32 %v907, %v1199
        %v1328 = vadd.f32 %v908, %v1200
        %v1329 = vadd.f32 %v909, %v1201
        %v1330 = vadd.f32 %v910, %v1202
        %v1331 = vadd.f32 %v911, %v1203
        %v1332 = vadd.f32 %v912, %v1204
        %v1333 = vadd.f32 %v913, %v1205
        %v1334 = vadd.f32 %v914, %v1206
        %v1335 = vadd.f32 %v915, %v1207
        %v1336 = vadd.f32 %v916, %v1208
        %v1337 = vadd.f32 %v917, %v1209
        %v1338 = vadd.f32 %v918, %v1210
        %v1339 = vadd.f32 %v919, %v1211
        %v1340 = vadd.f32 %v920, %v1212
        %v1341 = vadd.f32 %v921, %v1213
        %v1342 = vadd.f32 %v922, %v1214
        %v1343 = vadd.f32 %v923, %v1215
        %v1344 = vadd.f32 %v924, %v1216
        %v1345 = vadd.f32 %v925, %v1217
        %v1346 = vadd.f32 %v926, %v1218
        %v1347 = vadd.f32 %v927, %v1219
        %v1348 = vadd.f32 %v928, %v1220
        %v1349 = vadd.f32 %v929, %v1221
        %v1350 = vadd.f32 %v930, %v1222
        %v1351 = vadd.f32 %v931, %v1223
        %v1352 = vadd.f32 %v932, %v1224
        %v1353 = vadd.f32 %v933, %v1225
        %v1354 = vadd.f32 %v934, %v1226
        %v1355 = vadd.f32 %v935, %v1227
        %v1356 = vadd.f32 %v936, %v1228
        %v1357 = vadd.f32 %v937, %v1229
        %v1358 = vadd.f32 %v938, %v1230
        %v1359 = vadd.f32 %v939, %v1231
        %v1360 = vadd.f32 %v940, %v1232
        %v1361 = vadd.f32 %v941, %v1233
        %v1362 = vadd.f32 %v942, %v1234
        %v1363 = vadd.f32 %v943, %v1235
        %v1364 = vadd.f32 %v944, %v1236
        %v1365 = vadd.f32 %v945, %v1237
        %v1366 = vadd.f32 %v946, %v1238
        %v1367 = vadd.f32 %v947, %v1239
        %v1368 = vadd.f32 %v948, %v1240
        %v1369 = vadd.f32 %v949, %v1241
        %v1370 = vadd.f32 %v950, %v1242
        %v1371 = vadd.f32 %v951, %v1243
        %v1372 = vadd.f32 %v952, %v1244
        %v1373 = vadd.f32 %v953, %v1245
        %v1374 = vadd.f32 %v954, %v1246
        %v1375 = vadd.f32 %v955, %v1247
        %v1376 = vadd.f32 %v956, %v1248
        %v1377 = vadd.f32 %v957, %v1249
        %v1378 = vadd.f32 %v958, %v1250
        %v1379 = vadd.f32 %v959, %v1251
        %v1380 = vadd.f32 %v960, %v1252
        %v1381 = vadd.f32 %v961, %v1253
        %v1382 = vadd.f32 %v962, %v1254
        %v1383 = vadd.f32 %v963, %v1255
        %v1384 = vadd.f32 %v964, %v1256
        %v1385 = vadd.f32 %v965, %v1257
        %v1386 = vadd.f32 %v966, %v1258
        %v1387 = vadd.f32 %v967, %v1259
        %v1388 = vadd.f32 %v968, %v1260
        %v1389 = vadd.f32 %v969, %v1261
        %v1390 = vadd.f32 %v970, %v1262
        %v1391 = vadd.f32 %v971, %v1263
        %v1392 = vadd.f32 %v972, %v1264
        %v1393 = vadd.f32 %v973, %v1265
        %v1394 = vadd.f32 %v974, %v1266
        %v1395 = vadd.f32 %v975, %v1267
        %v1396 = vadd.f32 %v976, %v1268
        %v1397 = vadd.f32 %v977, %v1269
        %v1398 = vadd.f32 %v978, %v1270
        %v1399 = vadd.f32 %v979, %v1271
        %v1400 = vadd.f32 %v980, %v1272
        %v1401 = vadd.f32 %v981, %v1273
        %v1402 = vadd.f32 %v982, %v1274
        %v1403 = vld [vmem:[%s2] sm:$0xf]
        %v1405 = vlaneseq
        %v1406 = vshrl.u32 %v1405, 7
        %v1407 = vsub.s32 0, %v1406
        %v1408 = vrot.slane %v1403, %v1407
        %v1409 = vlaneseq
        %v1410 = vshrl.u32 %v1409, 7
        %v1411 = vsub.s32 1, %v1410
        %v1412 = vrot.slane %v1403, %v1411
        %v1413 = vlaneseq
        %v1414 = vshrl.u32 %v1413, 7
        %v1415 = vsub.s32 2, %v1414
        %v1416 = vrot.slane %v1403, %v1415
        %v1417 = vlaneseq
        %v1418 = vshrl.u32 %v1417, 7
        %v1419 = vsub.s32 3, %v1418
        %v1420 = vrot.slane %v1403, %v1419
        %v1425 = vadd.f32 %v1275, %v1408
        %v1426 = vadd.f32 %v1276, %v1412
        %v1427 = vadd.f32 %v1277, %v1416
        %v1428 = vadd.f32 %v1278, %v1420
        %v1429 = vadd.f32 %v1279, %v1408
        %v1430 = vadd.f32 %v1280, %v1412
        %v1431 = vadd.f32 %v1281, %v1416
        %v1432 = vadd.f32 %v1282, %v1420
        %v1433 = vadd.f32 %v1283, %v1408
        %v1434 = vadd.f32 %v1284, %v1412
        %v1435 = vadd.f32 %v1285, %v1416
        %v1436 = vadd.f32 %v1286, %v1420
        %v1437 = vadd.f32 %v1287, %v1408
        %v1438 = vadd.f32 %v1288, %v1412
        %v1439 = vadd.f32 %v1289, %v1416
        %v1440 = vadd.f32 %v1290, %v1420
        %v1441 = vadd.f32 %v1291, %v1408
        %v1442 = vadd.f32 %v1292, %v1412
        %v1443 = vadd.f32 %v1293, %v1416
        %v1444 = vadd.f32 %v1294, %v1420
        %v1445 = vadd.f32 %v1295, %v1408
        %v1446 = vadd.f32 %v1296, %v1412
        %v1447 = vadd.f32 %v1297, %v1416
        %v1448 = vadd.f32 %v1298, %v1420
        %v1449 = vadd.f32 %v1299, %v1408
        %v1450 = vadd.f32 %v1300, %v1412
        %v1451 = vadd.f32 %v1301, %v1416
        %v1452 = vadd.f32 %v1302, %v1420
        %v1453 = vadd.f32 %v1303, %v1408
        %v1454 = vadd.f32 %v1304, %v1412
        %v1455 = vadd.f32 %v1305, %v1416
        %v1456 = vadd.f32 %v1306, %v1420
        %v1457 = vadd.f32 %v1307, %v1408
        %v1458 = vadd.f32 %v1308, %v1412
        %v1459 = vadd.f32 %v1309, %v1416
        %v1460 = vadd.f32 %v1310, %v1420
        %v1461 = vadd.f32 %v1311, %v1408
        %v1462 = vadd.f32 %v1312, %v1412
        %v1463 = vadd.f32 %v1313, %v1416
        %v1464 = vadd.f32 %v1314, %v1420
        %v1465 = vadd.f32 %v1315, %v1408
        %v1466 = vadd.f32 %v1316, %v1412
        %v1467 = vadd.f32 %v1317, %v1416
        %v1468 = vadd.f32 %v1318, %v1420
        %v1469 = vadd.f32 %v1319, %v1408
        %v1470 = vadd.f32 %v1320, %v1412
        %v1471 = vadd.f32 %v1321, %v1416
        %v1472 = vadd.f32 %v1322, %v1420
        %v1473 = vadd.f32 %v1323, %v1408
        %v1474 = vadd.f32 %v1324, %v1412
        %v1475 = vadd.f32 %v1325, %v1416
        %v1476 = vadd.f32 %v1326, %v1420
        %v1477 = vadd.f32 %v1327, %v1408
        %v1478 = vadd.f32 %v1328, %v1412
        %v1479 = vadd.f32 %v1329, %v1416
        %v1480 = vadd.f32 %v1330, %v1420
        %v1481 = vadd.f32 %v1331, %v1408
        %v1482 = vadd.f32 %v1332, %v1412
        %v1483 = vadd.f32 %v1333, %v1416
        %v1484 = vadd.f32 %v1334, %v1420
        %v1485 = vadd.f32 %v1335, %v1408
        %v1486 = vadd.f32 %v1336, %v1412
        %v1487 = vadd.f32 %v1337, %v1416
        %v1488 = vadd.f32 %v1338, %v1420
        %v1489 = vadd.f32 %v1339, %v1408
        %v1490 = vadd.f32 %v1340, %v1412
        %v1491 = vadd.f32 %v1341, %v1416
        %v1492 = vadd.f32 %v1342, %v1420
        %v1493 = vadd.f32 %v1343, %v1408
        %v1494 = vadd.f32 %v1344, %v1412
        %v1495 = vadd.f32 %v1345, %v1416
        %v1496 = vadd.f32 %v1346, %v1420
        %v1497 = vadd.f32 %v1347, %v1408
        %v1498 = vadd.f32 %v1348, %v1412
        %v1499 = vadd.f32 %v1349, %v1416
        %v1500 = vadd.f32 %v1350, %v1420
        %v1501 = vadd.f32 %v1351, %v1408
        %v1502 = vadd.f32 %v1352, %v1412
        %v1503 = vadd.f32 %v1353, %v1416
        %v1504 = vadd.f32 %v1354, %v1420
        %v1505 = vadd.f32 %v1355, %v1408
        %v1506 = vadd.f32 %v1356, %v1412
        %v1507 = vadd.f32 %v1357, %v1416
        %v1508 = vadd.f32 %v1358, %v1420
        %v1509 = vadd.f32 %v1359, %v1408
        %v1510 = vadd.f32 %v1360, %v1412
        %v1511 = vadd.f32 %v1361, %v1416
        %v1512 = vadd.f32 %v1362, %v1420
        %v1513 = vadd.f32 %v1363, %v1408
        %v1514 = vadd.f32 %v1364, %v1412
        %v1515 = vadd.f32 %v1365, %v1416
        %v1516 = vadd.f32 %v1366, %v1420
        %v1517 = vadd.f32 %v1367, %v1408
        %v1518 = vadd.f32 %v1368, %v1412
        %v1519 = vadd.f32 %v1369, %v1416
        %v1520 = vadd.f32 %v1370, %v1420
        %v1521 = vadd.f32 %v1371, %v1408
        %v1522 = vadd.f32 %v1372, %v1412
        %v1523 = vadd.f32 %v1373, %v1416
        %v1524 = vadd.f32 %v1374, %v1420
        %v1525 = vadd.f32 %v1375, %v1408
        %v1526 = vadd.f32 %v1376, %v1412
        %v1527 = vadd.f32 %v1377, %v1416
        %v1528 = vadd.f32 %v1378, %v1420
        %v1529 = vadd.f32 %v1379, %v1408
        %v1530 = vadd.f32 %v1380, %v1412
        %v1531 = vadd.f32 %v1381, %v1416
        %v1532 = vadd.f32 %v1382, %v1420
        %v1533 = vadd.f32 %v1383, %v1408
        %v1534 = vadd.f32 %v1384, %v1412
        %v1535 = vadd.f32 %v1385, %v1416
        %v1536 = vadd.f32 %v1386, %v1420
        %v1537 = vadd.f32 %v1387, %v1408
        %v1538 = vadd.f32 %v1388, %v1412
        %v1539 = vadd.f32 %v1389, %v1416
        %v1540 = vadd.f32 %v1390, %v1420
        %v1541 = vadd.f32 %v1391, %v1408
        %v1542 = vadd.f32 %v1392, %v1412
        %v1543 = vadd.f32 %v1393, %v1416
        %v1544 = vadd.f32 %v1394, %v1420
        %v1545 = vadd.f32 %v1395, %v1408
        %v1546 = vadd.f32 %v1396, %v1412
        %v1547 = vadd.f32 %v1397, %v1416
        %v1548 = vadd.f32 %v1398, %v1420
        %v1549 = vadd.f32 %v1399, %v1408
        %v1550 = vadd.f32 %v1400, %v1412
        %v1551 = vadd.f32 %v1401, %v1416
        %v1552 = vadd.f32 %v1402, %v1420
        %v1553 = vmax.f32 %v1425, 0.0
        %v1554 = vmax.f32 %v1426, 0.0
        %v1555 = vmax.f32 %v1427, 0.0
        %v1556 = vmax.f32 %v1428, 0.0
        %v1557 = vmax.f32 %v1429, 0.0
        %v1558 = vmax.f32 %v1430, 0.0
        %v1559 = vmax.f32 %v1431, 0.0
        %v1560 = vmax.f32 %v1432, 0.0
        %v1561 = vmax.f32 %v1433, 0.0
        %v1562 = vmax.f32 %v1434, 0.0
        %v1563 = vmax.f32 %v1435, 0.0
        %v1564 = vmax.f32 %v1436, 0.0
        %v1565 = vmax.f32 %v1437, 0.0
        %v1566 = vmax.f32 %v1438, 0.0
        %v1567 = vmax.f32 %v1439, 0.0
        %v1568 = vmax.f32 %v1440, 0.0
        %v1569 = vmax.f32 %v1441, 0.0
        %v1570 = vmax.f32 %v1442, 0.0
        %v1571 = vmax.f32 %v1443, 0.0
        %v1572 = vmax.f32 %v1444, 0.0
        %v1573 = vmax.f32 %v1445, 0.0
        %v1574 = vmax.f32 %v1446, 0.0
        %v1575 = vmax.f32 %v1447, 0.0
        %v1576 = vmax.f32 %v1448, 0.0
        %v1577 = vmax.f32 %v1449, 0.0
        %v1578 = vmax.f32 %v1450, 0.0
        %v1579 = vmax.f32 %v1451, 0.0
        %v1580 = vmax.f32 %v1452, 0.0
        %v1581 = vmax.f32 %v1453, 0.0
        %v1582 = vmax.f32 %v1454, 0.0
        %v1583 = vmax.f32 %v1455, 0.0
        %v1584 = vmax.f32 %v1456, 0.0
        %v1585 = vmax.f32 %v1457, 0.0
        %v1586 = vmax.f32 %v1458, 0.0
        %v1587 = vmax.f32 %v1459, 0.0
        %v1588 = vmax.f32 %v1460, 0.0
        %v1589 = vmax.f32 %v1461, 0.0
        %v1590 = vmax.f32 %v1462, 0.0
        %v1591 = vmax.f32 %v1463, 0.0
        %v1592 = vmax.f32 %v1464, 0.0
        %v1593 = vmax.f32 %v1465, 0.0
        %v1594 = vmax.f32 %v1466, 0.0
        %v1595 = vmax.f32 %v1467, 0.0
        %v1596 = vmax.f32 %v1468, 0.0
        %v1597 = vmax.f32 %v1469, 0.0
        %v1598 = vmax.f32 %v1470, 0.0
        %v1599 = vmax.f32 %v1471, 0.0
        %v1600 = vmax.f32 %v1472, 0.0
        %v1601 = vmax.f32 %v1473, 0.0
        %v1602 = vmax.f32 %v1474, 0.0
        %v1603 = vmax.f32 %v1475, 0.0
        %v1604 = vmax.f32 %v1476, 0.0
        %v1605 = vmax.f32 %v1477, 0.0
        %v1606 = vmax.f32 %v1478, 0.0
        %v1607 = vmax.f32 %v1479, 0.0
        %v1608 = vmax.f32 %v1480, 0.0
        %v1609 = vmax.f32 %v1481, 0.0
        %v1610 = vmax.f32 %v1482, 0.0
        %v1611 = vmax.f32 %v1483, 0.0
        %v1612 = vmax.f32 %v1484, 0.0
        %v1613 = vmax.f32 %v1485, 0.0
        %v1614 = vmax.f32 %v1486, 0.0
        %v1615 = vmax.f32 %v1487, 0.0
        %v1616 = vmax.f32 %v1488, 0.0
        %v1617 = vmax.f32 %v1489, 0.0
        %v1618 = vmax.f32 %v1490, 0.0
        %v1619 = vmax.f32 %v1491, 0.0
        %v1620 = vmax.f32 %v1492, 0.0
        %v1621 = vmax.f32 %v1493, 0.0
        %v1622 = vmax.f32 %v1494, 0.0
        %v1623 = vmax.f32 %v1495, 0.0
        %v1624 = vmax.f32 %v1496, 0.0
        %v1625 = vmax.f32 %v1497, 0.0
        %v1626 = vmax.f32 %v1498, 0.0
        %v1627 = vmax.f32 %v1499, 0.0
        %v1628 = vmax.f32 %v1500, 0.0
        %v1629 = vmax.f32 %v1501, 0.0
        %v1630 = vmax.f32 %v1502, 0.0
        %v1631 = vmax.f32 %v1503, 0.0
        %v1632 = vmax.f32 %v1504, 0.0
        %v1633 = vmax.f32 %v1505, 0.0
        %v1634 = vmax.f32 %v1506, 0.0
        %v1635 = vmax.f32 %v1507, 0.0
        %v1636 = vmax.f32 %v1508, 0.0
        %v1637 = vmax.f32 %v1509, 0.0
        %v1638 = vmax.f32 %v1510, 0.0
        %v1639 = vmax.f32 %v1511, 0.0
        %v1640 = vmax.f32 %v1512, 0.0
        %v1641 = vmax.f32 %v1513, 0.0
        %v1642 = vmax.f32 %v1514, 0.0
        %v1643 = vmax.f32 %v1515, 0.0
        %v1644 = vmax.f32 %v1516, 0.0
        %v1645 = vmax.f32 %v1517, 0.0
        %v1646 = vmax.f32 %v1518, 0.0
        %v1647 = vmax.f32 %v1519, 0.0
        %v1648 = vmax.f32 %v1520, 0.0
        %v1649 = vmax.f32 %v1521, 0.0
        %v1650 = vmax.f32 %v1522, 0.0
        %v1651 = vmax.f32 %v1523, 0.0
        %v1652 = vmax.f32 %v1524, 0.0
        %v1653 = vmax.f32 %v1525, 0.0
        %v1654 = vmax.f32 %v1526, 0.0
        %v1655 = vmax.f32 %v1527, 0.0
        %v1656 = vmax.f32 %v1528, 0.0
        %v1657 = vmax.f32 %v1529, 0.0
        %v1658 = vmax.f32 %v1530, 0.0
        %v1659 = vmax.f32 %v1531, 0.0
        %v1660 = vmax.f32 %v1532, 0.0
        %v1661 = vmax.f32 %v1533, 0.0
        %v1662 = vmax.f32 %v1534, 0.0
        %v1663 = vmax.f32 %v1535, 0.0
        %v1664 = vmax.f32 %v1536, 0.0
        %v1665 = vmax.f32 %v1537, 0.0
        %v1666 = vmax.f32 %v1538, 0.0
        %v1667 = vmax.f32 %v1539, 0.0
        %v1668 = vmax.f32 %v1540, 0.0
        %v1669 = vmax.f32 %v1541, 0.0
        %v1670 = vmax.f32 %v1542, 0.0
        %v1671 = vmax.f32 %v1543, 0.0
        %v1672 = vmax.f32 %v1544, 0.0
        %v1673 = vmax.f32 %v1545, 0.0
        %v1674 = vmax.f32 %v1546, 0.0
        %v1675 = vmax.f32 %v1547, 0.0
        %v1676 = vmax.f32 %v1548, 0.0
        %v1677 = vmax.f32 %v1549, 0.0
        %v1678 = vmax.f32 %v1550, 0.0
        %v1679 = vmax.f32 %v1551, 0.0
        %v1680 = vmax.f32 %v1552, 0.0
        %v1681 = vld [vmem:[#allocation2] sm:$0xf]
        %v1682 = vadd.f32 %v1553, %v1557
        %v1683 = vadd.f32 %v1682, %v1561
        %v1684 = vadd.f32 %v1683, %v1565
        %v1685 = vadd.f32 %v1684, %v1569
        %v1686 = vadd.f32 %v1685, %v1573
        %v1687 = vadd.f32 %v1686, %v1577
        %v1688 = vadd.f32 %v1687, %v1581
        %v1689 = vadd.f32 %v1688, %v1585
        %v1690 = vadd.f32 %v1689, %v1589
        %v1691 = vadd.f32 %v1690, %v1593
        %v1692 = vadd.f32 %v1691, %v1597
        %v1693 = vadd.f32 %v1692, %v1601
        %v1694 = vadd.f32 %v1693, %v1605
        %v1695 = vadd.f32 %v1694, %v1609
        %v1696 = vadd.f32 %v1695, %v1613
        %v1697 = vadd.f32 %v1696, %v1617
        %v1698 = vadd.f32 %v1697, %v1621
        %v1699 = vadd.f32 %v1698, %v1625
        %v1700 = vadd.f32 %v1699, %v1629
        %v1701 = vadd.f32 %v1700, %v1633
        %v1702 = vadd.f32 %v1701, %v1637
        %v1703 = vadd.f32 %v1702, %v1641
        %v1704 = vadd.f32 %v1703, %v1645
        %v1705 = vadd.f32 %v1704, %v1649
        %v1706 = vadd.f32 %v1705, %v1653
        %v1707 = vadd.f32 %v1706, %v1657
        %v1708 = vadd.f32 %v1707, %v1661
        %v1709 = vadd.f32 %v1708, %v1665
        %v1710 = vadd.f32 %v1709, %v1669
        %v1711 = vadd.f32 %v1710, %v1673
        %v1712 = vadd.f32 %v1711, %v1677
        %v1713 = vrot.slane %v1712, 4
        %v1714 = vadd.f32 %v1712, %v1713
        %v1715 = vrot.slane %v1714, 2
        %v1716 = vadd.f32 %v1714, %v1715
        %v1717 = vrot.slane %v1716, 1
        %v1718 = vadd.f32 %v1716, %v1717
        %v1719 = vadd.f32 %v1554, %v1558
        %v1720 = vadd.f32 %v1719, %v1562
        %v1721 = vadd.f32 %v1720, %v1566
        %v1722 = vadd.f32 %v1721, %v1570
        %v1723 = vadd.f32 %v1722, %v1574
        %v1724 = vadd.f32 %v1723, %v1578
        %v1725 = vadd.f32 %v1724, %v1582
        %v1726 = vadd.f32 %v1725, %v1586
        %v1727 = vadd.f32 %v1726, %v1590
        %v1728 = vadd.f32 %v1727, %v1594
        %v1729 = vadd.f32 %v1728, %v1598
        %v1730 = vadd.f32 %v1729, %v1602
        %v1731 = vadd.f32 %v1730, %v1606
        %v1732 = vadd.f32 %v1731, %v1610
        %v1733 = vadd.f32 %v1732, %v1614
        %v1734 = vadd.f32 %v1733, %v1618
        %v1735 = vadd.f32 %v1734, %v1622
        %v1736 = vadd.f32 %v1735, %v1626
        %v1737 = vadd.f32 %v1736, %v1630
        %v1738 = vadd.f32 %v1737, %v1634
        %v1739 = vadd.f32 %v1738, %v1638
        %v1740 = vadd.f32 %v1739, %v1642
        %v1741 = vadd.f32 %v1740, %v1646
        %v1742 = vadd.f32 %v1741, %v1650
        %v1743 = vadd.f32 %v1742, %v1654
        %v1744 = vadd.f32 %v1743, %v1658
        %v1745 = vadd.f32 %v1744, %v1662
        %v1746 = vadd.f32 %v1745, %v1666
        %v1747 = vadd.f32 %v1746, %v1670
        %v1748 = vadd.f32 %v1747, %v1674
        %v1749 = vadd.f32 %v1748, %v1678
        %v1750 = vrot.slane %v1749, 4
        %v1751 = vadd.f32 %v1749, %v1750
        %v1752 = vrot.slane %v1751, 2
        %v1753 = vadd.f32 %v1751, %v1752
        %v1754 = vrot.slane %v1753, 1
        %v1755 = vadd.f32 %v1753, %v1754
        %v1756 = vadd.f32 %v1555, %v1559
        %v1757 = vadd.f32 %v1756, %v1563
        %v1758 = vadd.f32 %v1757, %v1567
        %v1759 = vadd.f32 %v1758, %v1571
        %v1760 = vadd.f32 %v1759, %v1575
        %v1761 = vadd.f32 %v1760, %v1579
        %v1762 = vadd.f32 %v1761, %v1583
        %v1763 = vadd.f32 %v1762, %v1587
        %v1764 = vadd.f32 %v1763, %v1591
        %v1765 = vadd.f32 %v1764, %v1595
        %v1766 = vadd.f32 %v1765, %v1599
        %v1767 = vadd.f32 %v1766, %v1603
        %v1768 = vadd.f32 %v1767, %v1607
        %v1769 = vadd.f32 %v1768, %v1611
        %v1770 = vadd.f32 %v1769, %v1615
        %v1771 = vadd.f32 %v1770, %v1619
        %v1772 = vadd.f32 %v1771, %v1623
        %v1773 = vadd.f32 %v1772, %v1627
        %v1774 = vadd.f32 %v1773, %v1631
        %v1775 = vadd.f32 %v1774, %v1635
        %v1776 = vadd.f32 %v1775, %v1639
        %v1777 = vadd.f32 %v1776, %v1643
        %v1778 = vadd.f32 %v1777, %v1647
        %v1779 = vadd.f32 %v1778, %v1651
        %v1780 = vadd.f32 %v1779, %v1655
        %v1781 = vadd.f32 %v1780, %v1659
        %v1782 = vadd.f32 %v1781, %v1663
        %v1783 = vadd.f32 %v1782, %v1667
        %v1784 = vadd.f32 %v1783, %v1671
        %v1785 = vadd.f32 %v1784, %v1675
        %v1786 = vadd.f32 %v1785, %v1679
        %v1787 = vrot.slane %v1786, 4
        %v1788 = vadd.f32 %v1786, %v1787
        %v1789 = vrot.slane %v1788, 2
        %v1790 = vadd.f32 %v1788, %v1789
        %v1791 = vrot.slane %v1790, 1
        %v1792 = vadd.f32 %v1790, %v1791
        %v1793 = vadd.f32 %v1556, %v1560
        %v1794 = vadd.f32 %v1793, %v1564
        %v1795 = vadd.f32 %v1794, %v1568
        %v1796 = vadd.f32 %v1795, %v1572
        %v1797 = vadd.f32 %v1796, %v1576
        %v1798 = vadd.f32 %v1797, %v1580
        %v1799 = vadd.f32 %v1798, %v1584
        %v1800 = vadd.f32 %v1799, %v1588
        %v1801 = vadd.f32 %v1800, %v1592
        %v1802 = vadd.f32 %v1801, %v1596
        %v1803 = vadd.f32 %v1802, %v1600
        %v1804 = vadd.f32 %v1803, %v1604
        %v1805 = vadd.f32 %v1804, %v1608
        %v1806 = vadd.f32 %v1805, %v1612
        %v1807 = vadd.f32 %v1806, %v1616
        %v1808 = vadd.f32 %v1807, %v1620
        %v1809 = vadd.f32 %v1808, %v1624
        %v1810 = vadd.f32 %v1809, %v1628
        %v1811 = vadd.f32 %v1810, %v1632
        %v1812 = vadd.f32 %v1811, %v1636
        %v1813 = vadd.f32 %v1812, %v1640
        %v1814 = vadd.f32 %v1813, %v1644
        %v1815 = vadd.f32 %v1814, %v1648
        %v1816 = vadd.f32 %v1815, %v1652
        %v1817 = vadd.f32 %v1816, %v1656
        %v1818 = vadd.f32 %v1817, %v1660
        %v1819 = vadd.f32 %v1818, %v1664
        %v1820 = vadd.f32 %v1819, %v1668
        %v1821 = vadd.f32 %v1820, %v1672
        %v1822 = vadd.f32 %v1821, %v1676
        %v1823 = vadd.f32 %v1822, %v1680
        %v1824 = vrot.slane %v1823, 4
        %v1825 = vadd.f32 %v1823, %v1824
        %v1826 = vrot.slane %v1825, 2
        %v1827 = vadd.f32 %v1825, %v1826
        %v1828 = vrot.slane %v1827, 1
        %v1829 = vadd.f32 %v1827, %v1828
        %v1834 = vcombine.low %v1718, %v1755
        %v1835 = vcombine.low %v1792, %v1829
        %v1837 = vunpack.c.l.s4 1966171168
        %v1838 = vunpack.c.0.s8 %v1837
        %v1839 = vlaneseq
        %v1840 = vshrl.u32 %v1839, 7
        %v1841 = vsub.s32 %v1838, %v1840
        %v1842 = vrot.slane %v1834, %v1841
        %v1844 = vunpack.c.l.s4 1966171168
        %v1845 = vunpack.c.0.s8 %v1844
        %v1846 = vlaneseq
        %v1847 = vshrl.u32 %v1846, 7
        %v1848 = vsub.s32 %v1845, %v1847
        %v1849 = vrot.slane %v1835, %v1848
        %v1850 = vcombine.low %v1842, %v1849
        %v1852 = vunpack.c.l.s4 1966171168
        %v1853 = vunpack.c.0.s8 %v1852
        %v1854 = vlaneseq
        %v1855 = vshrl.u32 %v1854, 7
        %v1856 = vsub.s32 %v1853, %v1855
        %v1857 = vrot.slane %v1850, %v1856
        %v1859 = vadd.f32 %v1681, %v1857
        %v1860 = vlaneseq
        %vm1861 = vcmp.ge.s32.totalorder %v1860, 0
        %vm1862 = vcmp.lt.s32.totalorder %v1860, 512
        %vm1863 = vmand %vm1861, %vm1862
        %1864 = vst.msk [vmem:[#allocation2] sm:$0xf] %vm1863, %v1859
        %v1865 = vld [vmem:[%s1 + $0x10] sm:$0x77]
        %v1866 = vld [vmem:[%s1 + $0x18] sm:$0x77]
        %v1869 = vlaneseq
        %v1870 = vshrl.u32 %v1869, 7
        %v1871 = vsub.s32 0, %v1870
        %v1872 = vrot.slane %v1865, %v1871
        %v1873 = vlaneseq
        %v1874 = vshrl.u32 %v1873, 7
        %v1875 = vsub.s32 4, %v1874
        %v1876 = vrot.slane %v1865, %v1875
        %v1877 = vlaneseq
        %v1878 = vshrl.u32 %v1877, 7
        %v1879 = vsub.s32 0, %v1878
        %v1880 = vrot.slane %v1866, %v1879
        %v1881 = vlaneseq
        %v1882 = vshrl.u32 %v1881, 7
        %v1883 = vsub.s32 4, %v1882
        %v1884 = vrot.slane %v1866, %v1883
        %v1889 = vlaneseq
        %v1890 = vshrl.u32 %v1889, 7
        %v1891 = vsub.s32 0, %v1890
        %v1892 = vrot.slane %v1872, %v1891
        %v1893 = vlaneseq
        %v1894 = vshrl.u32 %v1893, 7
        %v1895 = vsub.s32 0, %v1894
        %v1896 = vrot.slane %v1876, %v1895
        %v1897 = vlaneseq
        %v1898 = vshrl.u32 %v1897, 7
        %v1899 = vsub.s32 0, %v1898
        %v1900 = vrot.slane %v1880, %v1899
        %v1901 = vlaneseq
        %v1902 = vshrl.u32 %v1901, 7
        %v1903 = vsub.s32 0, %v1902
        %v1904 = vrot.slane %v1884, %v1903
        %v1905 = vmul.f32 %v240, %v1892
        %v1906 = vmul.f32 %v240, %v1896
        %v1907 = vmul.f32 %v240, %v1900
        %v1908 = vmul.f32 %v240, %v1904
        %v1909 = vmul.f32 %v245, %v1892
        %v1910 = vmul.f32 %v245, %v1896
        %v1911 = vmul.f32 %v245, %v1900
        %v1912 = vmul.f32 %v245, %v1904
        %v1913 = vmul.f32 %v250, %v1892
        %v1914 = vmul.f32 %v250, %v1896
        %v1915 = vmul.f32 %v250, %v1900
        %v1916 = vmul.f32 %v250, %v1904
        %v1917 = vmul.f32 %v255, %v1892
        %v1918 = vmul.f32 %v255, %v1896
        %v1919 = vmul.f32 %v255, %v1900
        %v1920 = vmul.f32 %v255, %v1904
        %v1921 = vmul.f32 %v260, %v1892
        %v1922 = vmul.f32 %v260, %v1896
        %v1923 = vmul.f32 %v260, %v1900
        %v1924 = vmul.f32 %v260, %v1904
        %v1925 = vmul.f32 %v265, %v1892
        %v1926 = vmul.f32 %v265, %v1896
        %v1927 = vmul.f32 %v265, %v1900
        %v1928 = vmul.f32 %v265, %v1904
        %v1929 = vmul.f32 %v270, %v1892
        %v1930 = vmul.f32 %v270, %v1896
        %v1931 = vmul.f32 %v270, %v1900
        %v1932 = vmul.f32 %v270, %v1904
        %v1933 = vmul.f32 %v275, %v1892
        %v1934 = vmul.f32 %v275, %v1896
        %v1935 = vmul.f32 %v275, %v1900
        %v1936 = vmul.f32 %v275, %v1904
        %v1937 = vmul.f32 %v280, %v1892
        %v1938 = vmul.f32 %v280, %v1896
        %v1939 = vmul.f32 %v280, %v1900
        %v1940 = vmul.f32 %v280, %v1904
        %v1941 = vmul.f32 %v285, %v1892
        %v1942 = vmul.f32 %v285, %v1896
        %v1943 = vmul.f32 %v285, %v1900
        %v1944 = vmul.f32 %v285, %v1904
        %v1945 = vmul.f32 %v290, %v1892
        %v1946 = vmul.f32 %v290, %v1896
        %v1947 = vmul.f32 %v290, %v1900
        %v1948 = vmul.f32 %v290, %v1904
        %v1949 = vmul.f32 %v295, %v1892
        %v1950 = vmul.f32 %v295, %v1896
        %v1951 = vmul.f32 %v295, %v1900
        %v1952 = vmul.f32 %v295, %v1904
        %v1953 = vmul.f32 %v300, %v1892
        %v1954 = vmul.f32 %v300, %v1896
        %v1955 = vmul.f32 %v300, %v1900
        %v1956 = vmul.f32 %v300, %v1904
        %v1957 = vmul.f32 %v305, %v1892
        %v1958 = vmul.f32 %v305, %v1896
        %v1959 = vmul.f32 %v305, %v1900
        %v1960 = vmul.f32 %v305, %v1904
        %v1961 = vmul.f32 %v310, %v1892
        %v1962 = vmul.f32 %v310, %v1896
        %v1963 = vmul.f32 %v310, %v1900
        %v1964 = vmul.f32 %v310, %v1904
        %v1965 = vmul.f32 %v315, %v1892
        %v1966 = vmul.f32 %v315, %v1896
        %v1967 = vmul.f32 %v315, %v1900
        %v1968 = vmul.f32 %v315, %v1904
        %v1969 = vmul.f32 %v320, %v1892
        %v1970 = vmul.f32 %v320, %v1896
        %v1971 = vmul.f32 %v320, %v1900
        %v1972 = vmul.f32 %v320, %v1904
        %v1973 = vmul.f32 %v325, %v1892
        %v1974 = vmul.f32 %v325, %v1896
        %v1975 = vmul.f32 %v325, %v1900
        %v1976 = vmul.f32 %v325, %v1904
        %v1977 = vmul.f32 %v330, %v1892
        %v1978 = vmul.f32 %v330, %v1896
        %v1979 = vmul.f32 %v330, %v1900
        %v1980 = vmul.f32 %v330, %v1904
        %v1981 = vmul.f32 %v335, %v1892
        %v1982 = vmul.f32 %v335, %v1896
        %v1983 = vmul.f32 %v335, %v1900
        %v1984 = vmul.f32 %v335, %v1904
        %v1985 = vmul.f32 %v340, %v1892
        %v1986 = vmul.f32 %v340, %v1896
        %v1987 = vmul.f32 %v340, %v1900
        %v1988 = vmul.f32 %v340, %v1904
        %v1989 = vmul.f32 %v345, %v1892
        %v1990 = vmul.f32 %v345, %v1896
        %v1991 = vmul.f32 %v345, %v1900
        %v1992 = vmul.f32 %v345, %v1904
        %v1993 = vmul.f32 %v350, %v1892
        %v1994 = vmul.f32 %v350, %v1896
        %v1995 = vmul.f32 %v350, %v1900
        %v1996 = vmul.f32 %v350, %v1904
        %v1997 = vmul.f32 %v355, %v1892
        %v1998 = vmul.f32 %v355, %v1896
        %v1999 = vmul.f32 %v355, %v1900
        %v2000 = vmul.f32 %v355, %v1904
        %v2001 = vmul.f32 %v360, %v1892
        %v2002 = vmul.f32 %v360, %v1896
        %v2003 = vmul.f32 %v360, %v1900
        %v2004 = vmul.f32 %v360, %v1904
        %v2005 = vmul.f32 %v365, %v1892
        %v2006 = vmul.f32 %v365, %v1896
        %v2007 = vmul.f32 %v365, %v1900
        %v2008 = vmul.f32 %v365, %v1904
        %v2009 = vmul.f32 %v370, %v1892
        %v2010 = vmul.f32 %v370, %v1896
        %v2011 = vmul.f32 %v370, %v1900
        %v2012 = vmul.f32 %v370, %v1904
        %v2013 = vmul.f32 %v375, %v1892
        %v2014 = vmul.f32 %v375, %v1896
        %v2015 = vmul.f32 %v375, %v1900
        %v2016 = vmul.f32 %v375, %v1904
        %v2017 = vmul.f32 %v380, %v1892
        %v2018 = vmul.f32 %v380, %v1896
        %v2019 = vmul.f32 %v380, %v1900
        %v2020 = vmul.f32 %v380, %v1904
        %v2021 = vmul.f32 %v385, %v1892
        %v2022 = vmul.f32 %v385, %v1896
        %v2023 = vmul.f32 %v385, %v1900
        %v2024 = vmul.f32 %v385, %v1904
        %v2025 = vmul.f32 %v390, %v1892
        %v2026 = vmul.f32 %v390, %v1896
        %v2027 = vmul.f32 %v390, %v1900
        %v2028 = vmul.f32 %v390, %v1904
        %v2029 = vmul.f32 %v395, %v1892
        %v2030 = vmul.f32 %v395, %v1896
        %v2031 = vmul.f32 %v395, %v1900
        %v2032 = vmul.f32 %v395, %v1904
        %v2033 = vlaneseq
        %v2034 = vshrl.u32 %v2033, 7
        %v2035 = vsub.s32 1, %v2034
        %v2036 = vrot.slane %v1865, %v2035
        %v2037 = vlaneseq
        %v2038 = vshrl.u32 %v2037, 7
        %v2039 = vsub.s32 5, %v2038
        %v2040 = vrot.slane %v1865, %v2039
        %v2041 = vlaneseq
        %v2042 = vshrl.u32 %v2041, 7
        %v2043 = vsub.s32 1, %v2042
        %v2044 = vrot.slane %v1866, %v2043
        %v2045 = vlaneseq
        %v2046 = vshrl.u32 %v2045, 7
        %v2047 = vsub.s32 5, %v2046
        %v2048 = vrot.slane %v1866, %v2047
        %v2053 = vlaneseq
        %v2054 = vshrl.u32 %v2053, 7
        %v2055 = vsub.s32 1, %v2054
        %v2056 = vrot.slane %v2036, %v2055
        %v2057 = vlaneseq
        %v2058 = vshrl.u32 %v2057, 7
        %v2059 = vsub.s32 1, %v2058
        %v2060 = vrot.slane %v2040, %v2059
        %v2061 = vlaneseq
        %v2062 = vshrl.u32 %v2061, 7
        %v2063 = vsub.s32 1, %v2062
        %v2064 = vrot.slane %v2044, %v2063
        %v2065 = vlaneseq
        %v2066 = vshrl.u32 %v2065, 7
        %v2067 = vsub.s32 1, %v2066
        %v2068 = vrot.slane %v2048, %v2067
        %v2069 = vmul.f32 %v565, %v2056
        %v2070 = vmul.f32 %v565, %v2060
        %v2071 = vmul.f32 %v565, %v2064
        %v2072 = vmul.f32 %v565, %v2068
        %v2073 = vmul.f32 %v569, %v2056
        %v2074 = vmul.f32 %v569, %v2060
        %v2075 = vmul.f32 %v569, %v2064
        %v2076 = vmul.f32 %v569, %v2068
        %v2077 = vmul.f32 %v573, %v2056
        %v2078 = vmul.f32 %v573, %v2060
        %v2079 = vmul.f32 %v573, %v2064
        %v2080 = vmul.f32 %v573, %v2068
        %v2081 = vmul.f32 %v577, %v2056
        %v2082 = vmul.f32 %v577, %v2060
        %v2083 = vmul.f32 %v577, %v2064
        %v2084 = vmul.f32 %v577, %v2068
        %v2085 = vmul.f32 %v581, %v2056
        %v2086 = vmul.f32 %v581, %v2060
        %v2087 = vmul.f32 %v581, %v2064
        %v2088 = vmul.f32 %v581, %v2068
        %v2089 = vmul.f32 %v585, %v2056
        %v2090 = vmul.f32 %v585, %v2060
        %v2091 = vmul.f32 %v585, %v2064
        %v2092 = vmul.f32 %v585, %v2068
        %v2093 = vmul.f32 %v589, %v2056
        %v2094 = vmul.f32 %v589, %v2060
        %v2095 = vmul.f32 %v589, %v2064
        %v2096 = vmul.f32 %v589, %v2068
        %v2097 = vmul.f32 %v593, %v2056
        %v2098 = vmul.f32 %v593, %v2060
        %v2099 = vmul.f32 %v593, %v2064
        %v2100 = vmul.f32 %v593, %v2068
        %v2101 = vmul.f32 %v597, %v2056
        %v2102 = vmul.f32 %v597, %v2060
        %v2103 = vmul.f32 %v597, %v2064
        %v2104 = vmul.f32 %v597, %v2068
        %v2105 = vmul.f32 %v601, %v2056
        %v2106 = vmul.f32 %v601, %v2060
        %v2107 = vmul.f32 %v601, %v2064
        %v2108 = vmul.f32 %v601, %v2068
        %v2109 = vmul.f32 %v605, %v2056
        %v2110 = vmul.f32 %v605, %v2060
        %v2111 = vmul.f32 %v605, %v2064
        %v2112 = vmul.f32 %v605, %v2068
        %v2113 = vmul.f32 %v609, %v2056
        %v2114 = vmul.f32 %v609, %v2060
        %v2115 = vmul.f32 %v609, %v2064
        %v2116 = vmul.f32 %v609, %v2068
        %v2117 = vmul.f32 %v613, %v2056
        %v2118 = vmul.f32 %v613, %v2060
        %v2119 = vmul.f32 %v613, %v2064
        %v2120 = vmul.f32 %v613, %v2068
        %v2121 = vmul.f32 %v617, %v2056
        %v2122 = vmul.f32 %v617, %v2060
        %v2123 = vmul.f32 %v617, %v2064
        %v2124 = vmul.f32 %v617, %v2068
        %v2125 = vmul.f32 %v621, %v2056
        %v2126 = vmul.f32 %v621, %v2060
        %v2127 = vmul.f32 %v621, %v2064
        %v2128 = vmul.f32 %v621, %v2068
        %v2129 = vmul.f32 %v625, %v2056
        %v2130 = vmul.f32 %v625, %v2060
        %v2131 = vmul.f32 %v625, %v2064
        %v2132 = vmul.f32 %v625, %v2068
        %v2133 = vmul.f32 %v629, %v2056
        %v2134 = vmul.f32 %v629, %v2060
        %v2135 = vmul.f32 %v629, %v2064
        %v2136 = vmul.f32 %v629, %v2068
        %v2137 = vmul.f32 %v633, %v2056
        %v2138 = vmul.f32 %v633, %v2060
        %v2139 = vmul.f32 %v633, %v2064
        %v2140 = vmul.f32 %v633, %v2068
        %v2141 = vmul.f32 %v637, %v2056
        %v2142 = vmul.f32 %v637, %v2060
        %v2143 = vmul.f32 %v637, %v2064
        %v2144 = vmul.f32 %v637, %v2068
        %v2145 = vmul.f32 %v641, %v2056
        %v2146 = vmul.f32 %v641, %v2060
        %v2147 = vmul.f32 %v641, %v2064
        %v2148 = vmul.f32 %v641, %v2068
        %v2149 = vmul.f32 %v645, %v2056
        %v2150 = vmul.f32 %v645, %v2060
        %v2151 = vmul.f32 %v645, %v2064
        %v2152 = vmul.f32 %v645, %v2068
        %v2153 = vmul.f32 %v649, %v2056
        %v2154 = vmul.f32 %v649, %v2060
        %v2155 = vmul.f32 %v649, %v2064
        %v2156 = vmul.f32 %v649, %v2068
        %v2157 = vmul.f32 %v653, %v2056
        %v2158 = vmul.f32 %v653, %v2060
        %v2159 = vmul.f32 %v653, %v2064
        %v2160 = vmul.f32 %v653, %v2068
        %v2161 = vmul.f32 %v657, %v2056
        %v2162 = vmul.f32 %v657, %v2060
        %v2163 = vmul.f32 %v657, %v2064
        %v2164 = vmul.f32 %v657, %v2068
        %v2165 = vmul.f32 %v661, %v2056
        %v2166 = vmul.f32 %v661, %v2060
        %v2167 = vmul.f32 %v661, %v2064
        %v2168 = vmul.f32 %v661, %v2068
        %v2169 = vmul.f32 %v665, %v2056
        %v2170 = vmul.f32 %v665, %v2060
        %v2171 = vmul.f32 %v665, %v2064
        %v2172 = vmul.f32 %v665, %v2068
        %v2173 = vmul.f32 %v669, %v2056
        %v2174 = vmul.f32 %v669, %v2060
        %v2175 = vmul.f32 %v669, %v2064
        %v2176 = vmul.f32 %v669, %v2068
        %v2177 = vmul.f32 %v673, %v2056
        %v2178 = vmul.f32 %v673, %v2060
        %v2179 = vmul.f32 %v673, %v2064
        %v2180 = vmul.f32 %v673, %v2068
        %v2181 = vmul.f32 %v677, %v2056
        %v2182 = vmul.f32 %v677, %v2060
        %v2183 = vmul.f32 %v677, %v2064
        %v2184 = vmul.f32 %v677, %v2068
        %v2185 = vmul.f32 %v681, %v2056
        %v2186 = vmul.f32 %v681, %v2060
        %v2187 = vmul.f32 %v681, %v2064
        %v2188 = vmul.f32 %v681, %v2068
        %v2189 = vmul.f32 %v685, %v2056
        %v2190 = vmul.f32 %v685, %v2060
        %v2191 = vmul.f32 %v685, %v2064
        %v2192 = vmul.f32 %v685, %v2068
        %v2193 = vmul.f32 %v689, %v2056
        %v2194 = vmul.f32 %v689, %v2060
        %v2195 = vmul.f32 %v689, %v2064
        %v2196 = vmul.f32 %v689, %v2068
        %v2197 = vadd.f32 %v1905, %v2069
        %v2198 = vadd.f32 %v1906, %v2070
        %v2199 = vadd.f32 %v1907, %v2071
        %v2200 = vadd.f32 %v1908, %v2072
        %v2201 = vadd.f32 %v1909, %v2073
        %v2202 = vadd.f32 %v1910, %v2074
        %v2203 = vadd.f32 %v1911, %v2075
        %v2204 = vadd.f32 %v1912, %v2076
        %v2205 = vadd.f32 %v1913, %v2077
        %v2206 = vadd.f32 %v1914, %v2078
        %v2207 = vadd.f32 %v1915, %v2079
        %v2208 = vadd.f32 %v1916, %v2080
        %v2209 = vadd.f32 %v1917, %v2081
        %v2210 = vadd.f32 %v1918, %v2082
        %v2211 = vadd.f32 %v1919, %v2083
        %v2212 = vadd.f32 %v1920, %v2084
        %v2213 = vadd.f32 %v1921, %v2085
        %v2214 = vadd.f32 %v1922, %v2086
        %v2215 = vadd.f32 %v1923, %v2087
        %v2216 = vadd.f32 %v1924, %v2088
        %v2217 = vadd.f32 %v1925, %v2089
        %v2218 = vadd.f32 %v1926, %v2090
        %v2219 = vadd.f32 %v1927, %v2091
        %v2220 = vadd.f32 %v1928, %v2092
        %v2221 = vadd.f32 %v1929, %v2093
        %v2222 = vadd.f32 %v1930, %v2094
        %v2223 = vadd.f32 %v1931, %v2095
        %v2224 = vadd.f32 %v1932, %v2096
        %v2225 = vadd.f32 %v1933, %v2097
        %v2226 = vadd.f32 %v1934, %v2098
        %v2227 = vadd.f32 %v1935, %v2099
        %v2228 = vadd.f32 %v1936, %v2100
        %v2229 = vadd.f32 %v1937, %v2101
        %v2230 = vadd.f32 %v1938, %v2102
        %v2231 = vadd.f32 %v1939, %v2103
        %v2232 = vadd.f32 %v1940, %v2104
        %v2233 = vadd.f32 %v1941, %v2105
        %v2234 = vadd.f32 %v1942, %v2106
        %v2235 = vadd.f32 %v1943, %v2107
        %v2236 = vadd.f32 %v1944, %v2108
        %v2237 = vadd.f32 %v1945, %v2109
        %v2238 = vadd.f32 %v1946, %v2110
        %v2239 = vadd.f32 %v1947, %v2111
        %v2240 = vadd.f32 %v1948, %v2112
        %v2241 = vadd.f32 %v1949, %v2113
        %v2242 = vadd.f32 %v1950, %v2114
        %v2243 = vadd.f32 %v1951, %v2115
        %v2244 = vadd.f32 %v1952, %v2116
        %v2245 = vadd.f32 %v1953, %v2117
        %v2246 = vadd.f32 %v1954, %v2118
        %v2247 = vadd.f32 %v1955, %v2119
        %v2248 = vadd.f32 %v1956, %v2120
        %v2249 = vadd.f32 %v1957, %v2121
        %v2250 = vadd.f32 %v1958, %v2122
        %v2251 = vadd.f32 %v1959, %v2123
        %v2252 = vadd.f32 %v1960, %v2124
        %v2253 = vadd.f32 %v1961, %v2125
        %v2254 = vadd.f32 %v1962, %v2126
        %v2255 = vadd.f32 %v1963, %v2127
        %v2256 = vadd.f32 %v1964, %v2128
        %v2257 = vadd.f32 %v1965, %v2129
        %v2258 = vadd.f32 %v1966, %v2130
        %v2259 = vadd.f32 %v1967, %v2131
        %v2260 = vadd.f32 %v1968, %v2132
        %v2261 = vadd.f32 %v1969, %v2133
        %v2262 = vadd.f32 %v1970, %v2134
        %v2263 = vadd.f32 %v1971, %v2135
        %v2264 = vadd.f32 %v1972, %v2136
        %v2265 = vadd.f32 %v1973, %v2137
        %v2266 = vadd.f32 %v1974, %v2138
        %v2267 = vadd.f32 %v1975, %v2139
        %v2268 = vadd.f32 %v1976, %v2140
        %v2269 = vadd.f32 %v1977, %v2141
        %v2270 = vadd.f32 %v1978, %v2142
        %v2271 = vadd.f32 %v1979, %v2143
        %v2272 = vadd.f32 %v1980, %v2144
        %v2273 = vadd.f32 %v1981, %v2145
        %v2274 = vadd.f32 %v1982, %v2146
        %v2275 = vadd.f32 %v1983, %v2147
        %v2276 = vadd.f32 %v1984, %v2148
        %v2277 = vadd.f32 %v1985, %v2149
        %v2278 = vadd.f32 %v1986, %v2150
        %v2279 = vadd.f32 %v1987, %v2151
        %v2280 = vadd.f32 %v1988, %v2152
        %v2281 = vadd.f32 %v1989, %v2153
        %v2282 = vadd.f32 %v1990, %v2154
        %v2283 = vadd.f32 %v1991, %v2155
        %v2284 = vadd.f32 %v1992, %v2156
        %v2285 = vadd.f32 %v1993, %v2157
        %v2286 = vadd.f32 %v1994, %v2158
        %v2287 = vadd.f32 %v1995, %v2159
        %v2288 = vadd.f32 %v1996, %v2160
        %v2289 = vadd.f32 %v1997, %v2161
        %v2290 = vadd.f32 %v1998, %v2162
        %v2291 = vadd.f32 %v1999, %v2163
        %v2292 = vadd.f32 %v2000, %v2164
        %v2293 = vadd.f32 %v2001, %v2165
        %v2294 = vadd.f32 %v2002, %v2166
        %v2295 = vadd.f32 %v2003, %v2167
        %v2296 = vadd.f32 %v2004, %v2168
        %v2297 = vadd.f32 %v2005, %v2169
        %v2298 = vadd.f32 %v2006, %v2170
        %v2299 = vadd.f32 %v2007, %v2171
        %v2300 = vadd.f32 %v2008, %v2172
        %v2301 = vadd.f32 %v2009, %v2173
        %v2302 = vadd.f32 %v2010, %v2174
        %v2303 = vadd.f32 %v2011, %v2175
        %v2304 = vadd.f32 %v2012, %v2176
        %v2305 = vadd.f32 %v2013, %v2177
        %v2306 = vadd.f32 %v2014, %v2178
        %v2307 = vadd.f32 %v2015, %v2179
        %v2308 = vadd.f32 %v2016, %v2180
        %v2309 = vadd.f32 %v2017, %v2181
        %v2310 = vadd.f32 %v2018, %v2182
        %v2311 = vadd.f32 %v2019, %v2183
        %v2312 = vadd.f32 %v2020, %v2184
        %v2313 = vadd.f32 %v2021, %v2185
        %v2314 = vadd.f32 %v2022, %v2186
        %v2315 = vadd.f32 %v2023, %v2187
        %v2316 = vadd.f32 %v2024, %v2188
        %v2317 = vadd.f32 %v2025, %v2189
        %v2318 = vadd.f32 %v2026, %v2190
        %v2319 = vadd.f32 %v2027, %v2191
        %v2320 = vadd.f32 %v2028, %v2192
        %v2321 = vadd.f32 %v2029, %v2193
        %v2322 = vadd.f32 %v2030, %v2194
        %v2323 = vadd.f32 %v2031, %v2195
        %v2324 = vadd.f32 %v2032, %v2196
        %v2325 = vlaneseq
        %v2326 = vshrl.u32 %v2325, 7
        %v2327 = vsub.s32 2, %v2326
        %v2328 = vrot.slane %v1865, %v2327
        %v2329 = vlaneseq
        %v2330 = vshrl.u32 %v2329, 7
        %v2331 = vsub.s32 6, %v2330
        %v2332 = vrot.slane %v1865, %v2331
        %v2333 = vlaneseq
        %v2334 = vshrl.u32 %v2333, 7
        %v2335 = vsub.s32 2, %v2334
        %v2336 = vrot.slane %v1866, %v2335
        %v2337 = vlaneseq
        %v2338 = vshrl.u32 %v2337, 7
        %v2339 = vsub.s32 6, %v2338
        %v2340 = vrot.slane %v1866, %v2339
        %v2345 = vlaneseq
        %v2346 = vshrl.u32 %v2345, 7
        %v2347 = vsub.s32 2, %v2346
        %v2348 = vrot.slane %v2328, %v2347
        %v2349 = vlaneseq
        %v2350 = vshrl.u32 %v2349, 7
        %v2351 = vsub.s32 2, %v2350
        %v2352 = vrot.slane %v2332, %v2351
        %v2353 = vlaneseq
        %v2354 = vshrl.u32 %v2353, 7
        %v2355 = vsub.s32 2, %v2354
        %v2356 = vrot.slane %v2336, %v2355
        %v2357 = vlaneseq
        %v2358 = vshrl.u32 %v2357, 7
        %v2359 = vsub.s32 2, %v2358
        %v2360 = vrot.slane %v2340, %v2359
        %v2361 = vmul.f32 %v985, %v2348
        %v2362 = vmul.f32 %v985, %v2352
        %v2363 = vmul.f32 %v985, %v2356
        %v2364 = vmul.f32 %v985, %v2360
        %v2365 = vmul.f32 %v989, %v2348
        %v2366 = vmul.f32 %v989, %v2352
        %v2367 = vmul.f32 %v989, %v2356
        %v2368 = vmul.f32 %v989, %v2360
        %v2369 = vmul.f32 %v993, %v2348
        %v2370 = vmul.f32 %v993, %v2352
        %v2371 = vmul.f32 %v993, %v2356
        %v2372 = vmul.f32 %v993, %v2360
        %v2373 = vmul.f32 %v997, %v2348
        %v2374 = vmul.f32 %v997, %v2352
        %v2375 = vmul.f32 %v997, %v2356
        %v2376 = vmul.f32 %v997, %v2360
        %v2377 = vmul.f32 %v1001, %v2348
        %v2378 = vmul.f32 %v1001, %v2352
        %v2379 = vmul.f32 %v1001, %v2356
        %v2380 = vmul.f32 %v1001, %v2360
        %v2381 = vmul.f32 %v1005, %v2348
        %v2382 = vmul.f32 %v1005, %v2352
        %v2383 = vmul.f32 %v1005, %v2356
        %v2384 = vmul.f32 %v1005, %v2360
        %v2385 = vmul.f32 %v1009, %v2348
        %v2386 = vmul.f32 %v1009, %v2352
        %v2387 = vmul.f32 %v1009, %v2356
        %v2388 = vmul.f32 %v1009, %v2360
        %v2389 = vmul.f32 %v1013, %v2348
        %v2390 = vmul.f32 %v1013, %v2352
        %v2391 = vmul.f32 %v1013, %v2356
        %v2392 = vmul.f32 %v1013, %v2360
        %v2393 = vmul.f32 %v1017, %v2348
        %v2394 = vmul.f32 %v1017, %v2352
        %v2395 = vmul.f32 %v1017, %v2356
        %v2396 = vmul.f32 %v1017, %v2360
        %v2397 = vmul.f32 %v1021, %v2348
        %v2398 = vmul.f32 %v1021, %v2352
        %v2399 = vmul.f32 %v1021, %v2356
        %v2400 = vmul.f32 %v1021, %v2360
        %v2401 = vmul.f32 %v1025, %v2348
        %v2402 = vmul.f32 %v1025, %v2352
        %v2403 = vmul.f32 %v1025, %v2356
        %v2404 = vmul.f32 %v1025, %v2360
        %v2405 = vmul.f32 %v1029, %v2348
        %v2406 = vmul.f32 %v1029, %v2352
        %v2407 = vmul.f32 %v1029, %v2356
        %v2408 = vmul.f32 %v1029, %v2360
        %v2409 = vmul.f32 %v1033, %v2348
        %v2410 = vmul.f32 %v1033, %v2352
        %v2411 = vmul.f32 %v1033, %v2356
        %v2412 = vmul.f32 %v1033, %v2360
        %v2413 = vmul.f32 %v1037, %v2348
        %v2414 = vmul.f32 %v1037, %v2352
        %v2415 = vmul.f32 %v1037, %v2356
        %v2416 = vmul.f32 %v1037, %v2360
        %v2417 = vmul.f32 %v1041, %v2348
        %v2418 = vmul.f32 %v1041, %v2352
        %v2419 = vmul.f32 %v1041, %v2356
        %v2420 = vmul.f32 %v1041, %v2360
        %v2421 = vmul.f32 %v1045, %v2348
        %v2422 = vmul.f32 %v1045, %v2352
        %v2423 = vmul.f32 %v1045, %v2356
        %v2424 = vmul.f32 %v1045, %v2360
        %v2425 = vmul.f32 %v1049, %v2348
        %v2426 = vmul.f32 %v1049, %v2352
        %v2427 = vmul.f32 %v1049, %v2356
        %v2428 = vmul.f32 %v1049, %v2360
        %v2429 = vmul.f32 %v1053, %v2348
        %v2430 = vmul.f32 %v1053, %v2352
        %v2431 = vmul.f32 %v1053, %v2356
        %v2432 = vmul.f32 %v1053, %v2360
        %v2433 = vmul.f32 %v1057, %v2348
        %v2434 = vmul.f32 %v1057, %v2352
        %v2435 = vmul.f32 %v1057, %v2356
        %v2436 = vmul.f32 %v1057, %v2360
        %v2437 = vmul.f32 %v1061, %v2348
        %v2438 = vmul.f32 %v1061, %v2352
        %v2439 = vmul.f32 %v1061, %v2356
        %v2440 = vmul.f32 %v1061, %v2360
        %v2441 = vmul.f32 %v1065, %v2348
        %v2442 = vmul.f32 %v1065, %v2352
        %v2443 = vmul.f32 %v1065, %v2356
        %v2444 = vmul.f32 %v1065, %v2360
        %v2445 = vmul.f32 %v1069, %v2348
        %v2446 = vmul.f32 %v1069, %v2352
        %v2447 = vmul.f32 %v1069, %v2356
        %v2448 = vmul.f32 %v1069, %v2360
        %v2449 = vmul.f32 %v1073, %v2348
        %v2450 = vmul.f32 %v1073, %v2352
        %v2451 = vmul.f32 %v1073, %v2356
        %v2452 = vmul.f32 %v1073, %v2360
        %v2453 = vmul.f32 %v1077, %v2348
        %v2454 = vmul.f32 %v1077, %v2352
        %v2455 = vmul.f32 %v1077, %v2356
        %v2456 = vmul.f32 %v1077, %v2360
        %v2457 = vmul.f32 %v1081, %v2348
        %v2458 = vmul.f32 %v1081, %v2352
        %v2459 = vmul.f32 %v1081, %v2356
        %v2460 = vmul.f32 %v1081, %v2360
        %v2461 = vmul.f32 %v1085, %v2348
        %v2462 = vmul.f32 %v1085, %v2352
        %v2463 = vmul.f32 %v1085, %v2356
        %v2464 = vmul.f32 %v1085, %v2360
        %v2465 = vmul.f32 %v1089, %v2348
        %v2466 = vmul.f32 %v1089, %v2352
        %v2467 = vmul.f32 %v1089, %v2356
        %v2468 = vmul.f32 %v1089, %v2360
        %v2469 = vmul.f32 %v1093, %v2348
        %v2470 = vmul.f32 %v1093, %v2352
        %v2471 = vmul.f32 %v1093, %v2356
        %v2472 = vmul.f32 %v1093, %v2360
        %v2473 = vmul.f32 %v1097, %v2348
        %v2474 = vmul.f32 %v1097, %v2352
        %v2475 = vmul.f32 %v1097, %v2356
        %v2476 = vmul.f32 %v1097, %v2360
        %v2477 = vmul.f32 %v1101, %v2348
        %v2478 = vmul.f32 %v1101, %v2352
        %v2479 = vmul.f32 %v1101, %v2356
        %v2480 = vmul.f32 %v1101, %v2360
        %v2481 = vmul.f32 %v1105, %v2348
        %v2482 = vmul.f32 %v1105, %v2352
        %v2483 = vmul.f32 %v1105, %v2356
        %v2484 = vmul.f32 %v1105, %v2360
        %v2485 = vmul.f32 %v1109, %v2348
        %v2486 = vmul.f32 %v1109, %v2352
        %v2487 = vmul.f32 %v1109, %v2356
        %v2488 = vmul.f32 %v1109, %v2360
        %v2489 = vadd.f32 %v2197, %v2361
        %v2490 = vadd.f32 %v2198, %v2362
        %v2491 = vadd.f32 %v2199, %v2363
        %v2492 = vadd.f32 %v2200, %v2364
        %v2493 = vadd.f32 %v2201, %v2365
        %v2494 = vadd.f32 %v2202, %v2366
        %v2495 = vadd.f32 %v2203, %v2367
        %v2496 = vadd.f32 %v2204, %v2368
        %v2497 = vadd.f32 %v2205, %v2369
        %v2498 = vadd.f32 %v2206, %v2370
        %v2499 = vadd.f32 %v2207, %v2371
        %v2500 = vadd.f32 %v2208, %v2372
        %v2501 = vadd.f32 %v2209, %v2373
        %v2502 = vadd.f32 %v2210, %v2374
        %v2503 = vadd.f32 %v2211, %v2375
        %v2504 = vadd.f32 %v2212, %v2376
        %v2505 = vadd.f32 %v2213, %v2377
        %v2506 = vadd.f32 %v2214, %v2378
        %v2507 = vadd.f32 %v2215, %v2379
        %v2508 = vadd.f32 %v2216, %v2380
        %v2509 = vadd.f32 %v2217, %v2381
        %v2510 = vadd.f32 %v2218, %v2382
        %v2511 = vadd.f32 %v2219, %v2383
        %v2512 = vadd.f32 %v2220, %v2384
        %v2513 = vadd.f32 %v2221, %v2385
        %v2514 = vadd.f32 %v2222, %v2386
        %v2515 = vadd.f32 %v2223, %v2387
        %v2516 = vadd.f32 %v2224, %v2388
        %v2517 = vadd.f32 %v2225, %v2389
        %v2518 = vadd.f32 %v2226, %v2390
        %v2519 = vadd.f32 %v2227, %v2391
        %v2520 = vadd.f32 %v2228, %v2392
        %v2521 = vadd.f32 %v2229, %v2393
        %v2522 = vadd.f32 %v2230, %v2394
        %v2523 = vadd.f32 %v2231, %v2395
        %v2524 = vadd.f32 %v2232, %v2396
        %v2525 = vadd.f32 %v2233, %v2397
        %v2526 = vadd.f32 %v2234, %v2398
        %v2527 = vadd.f32 %v2235, %v2399
        %v2528 = vadd.f32 %v2236, %v2400
        %v2529 = vadd.f32 %v2237, %v2401
        %v2530 = vadd.f32 %v2238, %v2402
        %v2531 = vadd.f32 %v2239, %v2403
        %v2532 = vadd.f32 %v2240, %v2404
        %v2533 = vadd.f32 %v2241, %v2405
        %v2534 = vadd.f32 %v2242, %v2406
        %v2535 = vadd.f32 %v2243, %v2407
        %v2536 = vadd.f32 %v2244, %v2408
        %v2537 = vadd.f32 %v2245, %v2409
        %v2538 = vadd.f32 %v2246, %v2410
        %v2539 = vadd.f32 %v2247, %v2411
        %v2540 = vadd.f32 %v2248, %v2412
        %v2541 = vadd.f32 %v2249, %v2413
        %v2542 = vadd.f32 %v2250, %v2414
        %v2543 = vadd.f32 %v2251, %v2415
        %v2544 = vadd.f32 %v2252, %v2416
        %v2545 = vadd.f32 %v2253, %v2417
        %v2546 = vadd.f32 %v2254, %v2418
        %v2547 = vadd.f32 %v2255, %v2419
        %v2548 = vadd.f32 %v2256, %v2420
        %v2549 = vadd.f32 %v2257, %v2421
        %v2550 = vadd.f32 %v2258, %v2422
        %v2551 = vadd.f32 %v2259, %v2423
        %v2552 = vadd.f32 %v2260, %v2424
        %v2553 = vadd.f32 %v2261, %v2425
        %v2554 = vadd.f32 %v2262, %v2426
        %v2555 = vadd.f32 %v2263, %v2427
        %v2556 = vadd.f32 %v2264, %v2428
        %v2557 = vadd.f32 %v2265, %v2429
        %v2558 = vadd.f32 %v2266, %v2430
        %v2559 = vadd.f32 %v2267, %v2431
        %v2560 = vadd.f32 %v2268, %v2432
        %v2561 = vadd.f32 %v2269, %v2433
        %v2562 = vadd.f32 %v2270, %v2434
        %v2563 = vadd.f32 %v2271, %v2435
        %v2564 = vadd.f32 %v2272, %v2436
        %v2565 = vadd.f32 %v2273, %v2437
        %v2566 = vadd.f32 %v2274, %v2438
        %v2567 = vadd.f32 %v2275, %v2439
        %v2568 = vadd.f32 %v2276, %v2440
        %v2569 = vadd.f32 %v2277, %v2441
        %v2570 = vadd.f32 %v2278, %v2442
        %v2571 = vadd.f32 %v2279, %v2443
        %v2572 = vadd.f32 %v2280, %v2444
        %v2573 = vadd.f32 %v2281, %v2445
        %v2574 = vadd.f32 %v2282, %v2446
        %v2575 = vadd.f32 %v2283, %v2447
        %v2576 = vadd.f32 %v2284, %v2448
        %v2577 = vadd.f32 %v2285, %v2449
        %v2578 = vadd.f32 %v2286, %v2450
        %v2579 = vadd.f32 %v2287, %v2451
        %v2580 = vadd.f32 %v2288, %v2452
        %v2581 = vadd.f32 %v2289, %v2453
        %v2582 = vadd.f32 %v2290, %v2454
        %v2583 = vadd.f32 %v2291, %v2455
        %v2584 = vadd.f32 %v2292, %v2456
        %v2585 = vadd.f32 %v2293, %v2457
        %v2586 = vadd.f32 %v2294, %v2458
        %v2587 = vadd.f32 %v2295, %v2459
        %v2588 = vadd.f32 %v2296, %v2460
        %v2589 = vadd.f32 %v2297, %v2461
        %v2590 = vadd.f32 %v2298, %v2462
        %v2591 = vadd.f32 %v2299, %v2463
        %v2592 = vadd.f32 %v2300, %v2464
        %v2593 = vadd.f32 %v2301, %v2465
        %v2594 = vadd.f32 %v2302, %v2466
        %v2595 = vadd.f32 %v2303, %v2467
        %v2596 = vadd.f32 %v2304, %v2468
        %v2597 = vadd.f32 %v2305, %v2469
        %v2598 = vadd.f32 %v2306, %v2470
        %v2599 = vadd.f32 %v2307, %v2471
        %v2600 = vadd.f32 %v2308, %v2472
        %v2601 = vadd.f32 %v2309, %v2473
        %v2602 = vadd.f32 %v2310, %v2474
        %v2603 = vadd.f32 %v2311, %v2475
        %v2604 = vadd.f32 %v2312, %v2476
        %v2605 = vadd.f32 %v2313, %v2477
        %v2606 = vadd.f32 %v2314, %v2478
        %v2607 = vadd.f32 %v2315, %v2479
        %v2608 = vadd.f32 %v2316, %v2480
        %v2609 = vadd.f32 %v2317, %v2481
        %v2610 = vadd.f32 %v2318, %v2482
        %v2611 = vadd.f32 %v2319, %v2483
        %v2612 = vadd.f32 %v2320, %v2484
        %v2613 = vadd.f32 %v2321, %v2485
        %v2614 = vadd.f32 %v2322, %v2486
        %v2615 = vadd.f32 %v2323, %v2487
        %v2616 = vadd.f32 %v2324, %v2488
        %v2617 = vld [vmem:[%s2 + $0x4] sm:$0xf]
        %v2619 = vlaneseq
        %v2620 = vshrl.u32 %v2619, 7
        %v2621 = vsub.s32 0, %v2620
        %v2622 = vrot.slane %v2617, %v2621
        %v2623 = vlaneseq
        %v2624 = vshrl.u32 %v2623, 7
        %v2625 = vsub.s32 1, %v2624
        %v2626 = vrot.slane %v2617, %v2625
        %v2627 = vlaneseq
        %v2628 = vshrl.u32 %v2627, 7
        %v2629 = vsub.s32 2, %v2628
        %v2630 = vrot.slane %v2617, %v2629
        %v2631 = vlaneseq
        %v2632 = vshrl.u32 %v2631, 7
        %v2633 = vsub.s32 3, %v2632
        %v2634 = vrot.slane %v2617, %v2633
        %v2639 = vadd.f32 %v2489, %v2622
        %v2640 = vadd.f32 %v2490, %v2626
        %v2641 = vadd.f32 %v2491, %v2630
        %v2642 = vadd.f32 %v2492, %v2634
        %v2643 = vadd.f32 %v2493, %v2622
        %v2644 = vadd.f32 %v2494, %v2626
        %v2645 = vadd.f32 %v2495, %v2630
        %v2646 = vadd.f32 %v2496, %v2634
        %v2647 = vadd.f32 %v2497, %v2622
        %v2648 = vadd.f32 %v2498, %v2626
        %v2649 = vadd.f32 %v2499, %v2630
        %v2650 = vadd.f32 %v2500, %v2634
        %v2651 = vadd.f32 %v2501, %v2622
        %v2652 = vadd.f32 %v2502, %v2626
        %v2653 = vadd.f32 %v2503, %v2630
        %v2654 = vadd.f32 %v2504, %v2634
        %v2655 = vadd.f32 %v2505, %v2622
        %v2656 = vadd.f32 %v2506, %v2626
        %v2657 = vadd.f32 %v2507, %v2630
        %v2658 = vadd.f32 %v2508, %v2634
        %v2659 = vadd.f32 %v2509, %v2622
        %v2660 = vadd.f32 %v2510, %v2626
        %v2661 = vadd.f32 %v2511, %v2630
        %v2662 = vadd.f32 %v2512, %v2634
        %v2663 = vadd.f32 %v2513, %v2622
        %v2664 = vadd.f32 %v2514, %v2626
        %v2665 = vadd.f32 %v2515, %v2630
        %v2666 = vadd.f32 %v2516, %v2634
        %v2667 = vadd.f32 %v2517, %v2622
        %v2668 = vadd.f32 %v2518, %v2626
        %v2669 = vadd.f32 %v2519, %v2630
        %v2670 = vadd.f32 %v2520, %v2634
        %v2671 = vadd.f32 %v2521, %v2622
        %v2672 = vadd.f32 %v2522, %v2626
        %v2673 = vadd.f32 %v2523, %v2630
        %v2674 = vadd.f32 %v2524, %v2634
        %v2675 = vadd.f32 %v2525, %v2622
        %v2676 = vadd.f32 %v2526, %v2626
        %v2677 = vadd.f32 %v2527, %v2630
        %v2678 = vadd.f32 %v2528, %v2634
        %v2679 = vadd.f32 %v2529, %v2622
        %v2680 = vadd.f32 %v2530, %v2626
        %v2681 = vadd.f32 %v2531, %v2630
        %v2682 = vadd.f32 %v2532, %v2634
        %v2683 = vadd.f32 %v2533, %v2622
        %v2684 = vadd.f32 %v2534, %v2626
        %v2685 = vadd.f32 %v2535, %v2630
        %v2686 = vadd.f32 %v2536, %v2634
        %v2687 = vadd.f32 %v2537, %v2622
        %v2688 = vadd.f32 %v2538, %v2626
        %v2689 = vadd.f32 %v2539, %v2630
        %v2690 = vadd.f32 %v2540, %v2634
        %v2691 = vadd.f32 %v2541, %v2622
        %v2692 = vadd.f32 %v2542, %v2626
        %v2693 = vadd.f32 %v2543, %v2630
        %v2694 = vadd.f32 %v2544, %v2634
        %v2695 = vadd.f32 %v2545, %v2622
        %v2696 = vadd.f32 %v2546, %v2626
        %v2697 = vadd.f32 %v2547, %v2630
        %v2698 = vadd.f32 %v2548, %v2634
        %v2699 = vadd.f32 %v2549, %v2622
        %v2700 = vadd.f32 %v2550, %v2626
        %v2701 = vadd.f32 %v2551, %v2630
        %v2702 = vadd.f32 %v2552, %v2634
        %v2703 = vadd.f32 %v2553, %v2622
        %v2704 = vadd.f32 %v2554, %v2626
        %v2705 = vadd.f32 %v2555, %v2630
        %v2706 = vadd.f32 %v2556, %v2634
        %v2707 = vadd.f32 %v2557, %v2622
        %v2708 = vadd.f32 %v2558, %v2626
        %v2709 = vadd.f32 %v2559, %v2630
        %v2710 = vadd.f32 %v2560, %v2634
        %v2711 = vadd.f32 %v2561, %v2622
        %v2712 = vadd.f32 %v2562, %v2626
        %v2713 = vadd.f32 %v2563, %v2630
        %v2714 = vadd.f32 %v2564, %v2634
        %v2715 = vadd.f32 %v2565, %v2622
        %v2716 = vadd.f32 %v2566, %v2626
        %v2717 = vadd.f32 %v2567, %v2630
        %v2718 = vadd.f32 %v2568, %v2634
        %v2719 = vadd.f32 %v2569, %v2622
        %v2720 = vadd.f32 %v2570, %v2626
        %v2721 = vadd.f32 %v2571, %v2630
        %v2722 = vadd.f32 %v2572, %v2634
        %v2723 = vadd.f32 %v2573, %v2622
        %v2724 = vadd.f32 %v2574, %v2626
        %v2725 = vadd.f32 %v2575, %v2630
        %v2726 = vadd.f32 %v2576, %v2634
        %v2727 = vadd.f32 %v2577, %v2622
        %v2728 = vadd.f32 %v2578, %v2626
        %v2729 = vadd.f32 %v2579, %v2630
        %v2730 = vadd.f32 %v2580, %v2634
        %v2731 = vadd.f32 %v2581, %v2622
        %v2732 = vadd.f32 %v2582, %v2626
        %v2733 = vadd.f32 %v2583, %v2630
        %v2734 = vadd.f32 %v2584, %v2634
        %v2735 = vadd.f32 %v2585, %v2622
        %v2736 = vadd.f32 %v2586, %v2626
        %v2737 = vadd.f32 %v2587, %v2630
        %v2738 = vadd.f32 %v2588, %v2634
        %v2739 = vadd.f32 %v2589, %v2622
        %v2740 = vadd.f32 %v2590, %v2626
        %v2741 = vadd.f32 %v2591, %v2630
        %v2742 = vadd.f32 %v2592, %v2634
        %v2743 = vadd.f32 %v2593, %v2622
        %v2744 = vadd.f32 %v2594, %v2626
        %v2745 = vadd.f32 %v2595, %v2630
        %v2746 = vadd.f32 %v2596, %v2634
        %v2747 = vadd.f32 %v2597, %v2622
        %v2748 = vadd.f32 %v2598, %v2626
        %v2749 = vadd.f32 %v2599, %v2630
        %v2750 = vadd.f32 %v2600, %v2634
        %v2751 = vadd.f32 %v2601, %v2622
        %v2752 = vadd.f32 %v2602, %v2626
        %v2753 = vadd.f32 %v2603, %v2630
        %v2754 = vadd.f32 %v2604, %v2634
        %v2755 = vadd.f32 %v2605, %v2622
        %v2756 = vadd.f32 %v2606, %v2626
        %v2757 = vadd.f32 %v2607, %v2630
        %v2758 = vadd.f32 %v2608, %v2634
        %v2759 = vadd.f32 %v2609, %v2622
        %v2760 = vadd.f32 %v2610, %v2626
        %v2761 = vadd.f32 %v2611, %v2630
        %v2762 = vadd.f32 %v2612, %v2634
        %v2763 = vadd.f32 %v2613, %v2622
        %v2764 = vadd.f32 %v2614, %v2626
        %v2765 = vadd.f32 %v2615, %v2630
        %v2766 = vadd.f32 %v2616, %v2634
        %v2767 = vmax.f32 %v2639, 0.0
        %v2768 = vmax.f32 %v2640, 0.0
        %v2769 = vmax.f32 %v2641, 0.0
        %v2770 = vmax.f32 %v2642, 0.0
        %v2771 = vmax.f32 %v2643, 0.0
        %v2772 = vmax.f32 %v2644, 0.0
        %v2773 = vmax.f32 %v2645, 0.0
        %v2774 = vmax.f32 %v2646, 0.0
        %v2775 = vmax.f32 %v2647, 0.0
        %v2776 = vmax.f32 %v2648, 0.0
        %v2777 = vmax.f32 %v2649, 0.0
        %v2778 = vmax.f32 %v2650, 0.0
        %v2779 = vmax.f32 %v2651, 0.0
        %v2780 = vmax.f32 %v2652, 0.0
        %v2781 = vmax.f32 %v2653, 0.0
        %v2782 = vmax.f32 %v2654, 0.0
        %v2783 = vmax.f32 %v2655, 0.0
        %v2784 = vmax.f32 %v2656, 0.0
        %v2785 = vmax.f32 %v2657, 0.0
        %v2786 = vmax.f32 %v2658, 0.0
        %v2787 = vmax.f32 %v2659, 0.0
        %v2788 = vmax.f32 %v2660, 0.0
        %v2789 = vmax.f32 %v2661, 0.0
        %v2790 = vmax.f32 %v2662, 0.0
        %v2791 = vmax.f32 %v2663, 0.0
        %v2792 = vmax.f32 %v2664, 0.0
        %v2793 = vmax.f32 %v2665, 0.0
        %v2794 = vmax.f32 %v2666, 0.0
        %v2795 = vmax.f32 %v2667, 0.0
        %v2796 = vmax.f32 %v2668, 0.0
        %v2797 = vmax.f32 %v2669, 0.0
        %v2798 = vmax.f32 %v2670, 0.0
        %v2799 = vmax.f32 %v2671, 0.0
        %v2800 = vmax.f32 %v2672, 0.0
        %v2801 = vmax.f32 %v2673, 0.0
        %v2802 = vmax.f32 %v2674, 0.0
        %v2803 = vmax.f32 %v2675, 0.0
        %v2804 = vmax.f32 %v2676, 0.0
        %v2805 = vmax.f32 %v2677, 0.0
        %v2806 = vmax.f32 %v2678, 0.0
        %v2807 = vmax.f32 %v2679, 0.0
        %v2808 = vmax.f32 %v2680, 0.0
        %v2809 = vmax.f32 %v2681, 0.0
        %v2810 = vmax.f32 %v2682, 0.0
        %v2811 = vmax.f32 %v2683, 0.0
        %v2812 = vmax.f32 %v2684, 0.0
        %v2813 = vmax.f32 %v2685, 0.0
        %v2814 = vmax.f32 %v2686, 0.0
        %v2815 = vmax.f32 %v2687, 0.0
        %v2816 = vmax.f32 %v2688, 0.0
        %v2817 = vmax.f32 %v2689, 0.0
        %v2818 = vmax.f32 %v2690, 0.0
        %v2819 = vmax.f32 %v2691, 0.0
        %v2820 = vmax.f32 %v2692, 0.0
        %v2821 = vmax.f32 %v2693, 0.0
        %v2822 = vmax.f32 %v2694, 0.0
        %v2823 = vmax.f32 %v2695, 0.0
        %v2824 = vmax.f32 %v2696, 0.0
        %v2825 = vmax.f32 %v2697, 0.0
        %v2826 = vmax.f32 %v2698, 0.0
        %v2827 = vmax.f32 %v2699, 0.0
        %v2828 = vmax.f32 %v2700, 0.0
        %v2829 = vmax.f32 %v2701, 0.0
        %v2830 = vmax.f32 %v2702, 0.0
        %v2831 = vmax.f32 %v2703, 0.0
        %v2832 = vmax.f32 %v2704, 0.0
        %v2833 = vmax.f32 %v2705, 0.0
        %v2834 = vmax.f32 %v2706, 0.0
        %v2835 = vmax.f32 %v2707, 0.0
        %v2836 = vmax.f32 %v2708, 0.0
        %v2837 = vmax.f32 %v2709, 0.0
        %v2838 = vmax.f32 %v2710, 0.0
        %v2839 = vmax.f32 %v2711, 0.0
        %v2840 = vmax.f32 %v2712, 0.0
        %v2841 = vmax.f32 %v2713, 0.0
        %v2842 = vmax.f32 %v2714, 0.0
        %v2843 = vmax.f32 %v2715, 0.0
        %v2844 = vmax.f32 %v2716, 0.0
        %v2845 = vmax.f32 %v2717, 0.0
        %v2846 = vmax.f32 %v2718, 0.0
        %v2847 = vmax.f32 %v2719, 0.0
        %v2848 = vmax.f32 %v2720, 0.0
        %v2849 = vmax.f32 %v2721, 0.0
        %v2850 = vmax.f32 %v2722, 0.0
        %v2851 = vmax.f32 %v2723, 0.0
        %v2852 = vmax.f32 %v2724, 0.0
        %v2853 = vmax.f32 %v2725, 0.0
        %v2854 = vmax.f32 %v2726, 0.0
        %v2855 = vmax.f32 %v2727, 0.0
        %v2856 = vmax.f32 %v2728, 0.0
        %v2857 = vmax.f32 %v2729, 0.0
        %v2858 = vmax.f32 %v2730, 0.0
        %v2859 = vmax.f32 %v2731, 0.0
        %v2860 = vmax.f32 %v2732, 0.0
        %v2861 = vmax.f32 %v2733, 0.0
        %v2862 = vmax.f32 %v2734, 0.0
        %v2863 = vmax.f32 %v2735, 0.0
        %v2864 = vmax.f32 %v2736, 0.0
        %v2865 = vmax.f32 %v2737, 0.0
        %v2866 = vmax.f32 %v2738, 0.0
        %v2867 = vmax.f32 %v2739, 0.0
        %v2868 = vmax.f32 %v2740, 0.0
        %v2869 = vmax.f32 %v2741, 0.0
        %v2870 = vmax.f32 %v2742, 0.0
        %v2871 = vmax.f32 %v2743, 0.0
        %v2872 = vmax.f32 %v2744, 0.0
        %v2873 = vmax.f32 %v2745, 0.0
        %v2874 = vmax.f32 %v2746, 0.0
        %v2875 = vmax.f32 %v2747, 0.0
        %v2876 = vmax.f32 %v2748, 0.0
        %v2877 = vmax.f32 %v2749, 0.0
        %v2878 = vmax.f32 %v2750, 0.0
        %v2879 = vmax.f32 %v2751, 0.0
        %v2880 = vmax.f32 %v2752, 0.0
        %v2881 = vmax.f32 %v2753, 0.0
        %v2882 = vmax.f32 %v2754, 0.0
        %v2883 = vmax.f32 %v2755, 0.0
        %v2884 = vmax.f32 %v2756, 0.0
        %v2885 = vmax.f32 %v2757, 0.0
        %v2886 = vmax.f32 %v2758, 0.0
        %v2887 = vmax.f32 %v2759, 0.0
        %v2888 = vmax.f32 %v2760, 0.0
        %v2889 = vmax.f32 %v2761, 0.0
        %v2890 = vmax.f32 %v2762, 0.0
        %v2891 = vmax.f32 %v2763, 0.0
        %v2892 = vmax.f32 %v2764, 0.0
        %v2893 = vmax.f32 %v2765, 0.0
        %v2894 = vmax.f32 %v2766, 0.0
        %v2895 = vld [vmem:[#allocation2 + $0x4] sm:$0xf]
        %v2896 = vadd.f32 %v2767, %v2771
        %v2897 = vadd.f32 %v2896, %v2775
        %v2898 = vadd.f32 %v2897, %v2779
        %v2899 = vadd.f32 %v2898, %v2783
        %v2900 = vadd.f32 %v2899, %v2787
        %v2901 = vadd.f32 %v2900, %v2791
        %v2902 = vadd.f32 %v2901, %v2795
        %v2903 = vadd.f32 %v2902, %v2799
        %v2904 = vadd.f32 %v2903, %v2803
        %v2905 = vadd.f32 %v2904, %v2807
        %v2906 = vadd.f32 %v2905, %v2811
        %v2907 = vadd.f32 %v2906, %v2815
        %v2908 = vadd.f32 %v2907, %v2819
        %v2909 = vadd.f32 %v2908, %v2823
        %v2910 = vadd.f32 %v2909, %v2827
        %v2911 = vadd.f32 %v2910, %v2831
        %v2912 = vadd.f32 %v2911, %v2835
        %v2913 = vadd.f32 %v2912, %v2839
        %v2914 = vadd.f32 %v2913, %v2843
        %v2915 = vadd.f32 %v2914, %v2847
        %v2916 = vadd.f32 %v2915, %v2851
        %v2917 = vadd.f32 %v2916, %v2855
        %v2918 = vadd.f32 %v2917, %v2859
        %v2919 = vadd.f32 %v2918, %v2863
        %v2920 = vadd.f32 %v2919, %v2867
        %v2921 = vadd.f32 %v2920, %v2871
        %v2922 = vadd.f32 %v2921, %v2875
        %v2923 = vadd.f32 %v2922, %v2879
        %v2924 = vadd.f32 %v2923, %v2883
        %v2925 = vadd.f32 %v2924, %v2887
        %v2926 = vadd.f32 %v2925, %v2891
        %v2927 = vrot.slane %v2926, 4
        %v2928 = vadd.f32 %v2926, %v2927
        %v2929 = vrot.slane %v2928, 2
        %v2930 = vadd.f32 %v2928, %v2929
        %v2931 = vrot.slane %v2930, 1
        %v2932 = vadd.f32 %v2930, %v2931
        %v2933 = vadd.f32 %v2768, %v2772
        %v2934 = vadd.f32 %v2933, %v2776
        %v2935 = vadd.f32 %v2934, %v2780
        %v2936 = vadd.f32 %v2935, %v2784
        %v2937 = vadd.f32 %v2936, %v2788
        %v2938 = vadd.f32 %v2937, %v2792
        %v2939 = vadd.f32 %v2938, %v2796
        %v2940 = vadd.f32 %v2939, %v2800
        %v2941 = vadd.f32 %v2940, %v2804
        %v2942 = vadd.f32 %v2941, %v2808
        %v2943 = vadd.f32 %v2942, %v2812
        %v2944 = vadd.f32 %v2943, %v2816
        %v2945 = vadd.f32 %v2944, %v2820
        %v2946 = vadd.f32 %v2945, %v2824
        %v2947 = vadd.f32 %v2946, %v2828
        %v2948 = vadd.f32 %v2947, %v2832
        %v2949 = vadd.f32 %v2948, %v2836
        %v2950 = vadd.f32 %v2949, %v2840
        %v2951 = vadd.f32 %v2950, %v2844
        %v2952 = vadd.f32 %v2951, %v2848
        %v2953 = vadd.f32 %v2952, %v2852
        %v2954 = vadd.f32 %v2953, %v2856
        %v2955 = vadd.f32 %v2954, %v2860
        %v2956 = vadd.f32 %v2955, %v2864
        %v2957 = vadd.f32 %v2956, %v2868
        %v2958 = vadd.f32 %v2957, %v2872
        %v2959 = vadd.f32 %v2958, %v2876
        %v2960 = vadd.f32 %v2959, %v2880
        %v2961 = vadd.f32 %v2960, %v2884
        %v2962 = vadd.f32 %v2961, %v2888
        %v2963 = vadd.f32 %v2962, %v2892
        %v2964 = vrot.slane %v2963, 4
        %v2965 = vadd.f32 %v2963, %v2964
        %v2966 = vrot.slane %v2965, 2
        %v2967 = vadd.f32 %v2965, %v2966
        %v2968 = vrot.slane %v2967, 1
        %v2969 = vadd.f32 %v2967, %v2968
        %v2970 = vadd.f32 %v2769, %v2773
        %v2971 = vadd.f32 %v2970, %v2777
        %v2972 = vadd.f32 %v2971, %v2781
        %v2973 = vadd.f32 %v2972, %v2785
        %v2974 = vadd.f32 %v2973, %v2789
        %v2975 = vadd.f32 %v2974, %v2793
        %v2976 = vadd.f32 %v2975, %v2797
        %v2977 = vadd.f32 %v2976, %v2801
        %v2978 = vadd.f32 %v2977, %v2805
        %v2979 = vadd.f32 %v2978, %v2809
        %v2980 = vadd.f32 %v2979, %v2813
        %v2981 = vadd.f32 %v2980, %v2817
        %v2982 = vadd.f32 %v2981, %v2821
        %v2983 = vadd.f32 %v2982, %v2825
        %v2984 = vadd.f32 %v2983, %v2829
        %v2985 = vadd.f32 %v2984, %v2833
        %v2986 = vadd.f32 %v2985, %v2837
        %v2987 = vadd.f32 %v2986, %v2841
        %v2988 = vadd.f32 %v2987, %v2845
        %v2989 = vadd.f32 %v2988, %v2849
        %v2990 = vadd.f32 %v2989, %v2853
        %v2991 = vadd.f32 %v2990, %v2857
        %v2992 = vadd.f32 %v2991, %v2861
        %v2993 = vadd.f32 %v2992, %v2865
        %v2994 = vadd.f32 %v2993, %v2869
        %v2995 = vadd.f32 %v2994, %v2873
        %v2996 = vadd.f32 %v2995, %v2877
        %v2997 = vadd.f32 %v2996, %v2881
        %v2998 = vadd.f32 %v2997, %v2885
        %v2999 = vadd.f32 %v2998, %v2889
        %v3000 = vadd.f32 %v2999, %v2893
        %v3001 = vrot.slane %v3000, 4
        %v3002 = vadd.f32 %v3000, %v3001
        %v3003 = vrot.slane %v3002, 2
        %v3004 = vadd.f32 %v3002, %v3003
        %v3005 = vrot.slane %v3004, 1
        %v3006 = vadd.f32 %v3004, %v3005
        %v3007 = vadd.f32 %v2770, %v2774
        %v3008 = vadd.f32 %v3007, %v2778
        %v3009 = vadd.f32 %v3008, %v2782
        %v3010 = vadd.f32 %v3009, %v2786
        %v3011 = vadd.f32 %v3010, %v2790
        %v3012 = vadd.f32 %v3011, %v2794
        %v3013 = vadd.f32 %v3012, %v2798
        %v3014 = vadd.f32 %v3013, %v2802
        %v3015 = vadd.f32 %v3014, %v2806
        %v3016 = vadd.f32 %v3015, %v2810
        %v3017 = vadd.f32 %v3016, %v2814
        %v3018 = vadd.f32 %v3017, %v2818
        %v3019 = vadd.f32 %v3018, %v2822
        %v3020 = vadd.f32 %v3019, %v2826
        %v3021 = vadd.f32 %v3020, %v2830
        %v3022 = vadd.f32 %v3021, %v2834
        %v3023 = vadd.f32 %v3022, %v2838
        %v3024 = vadd.f32 %v3023, %v2842
        %v3025 = vadd.f32 %v3024, %v2846
        %v3026 = vadd.f32 %v3025, %v2850
        %v3027 = vadd.f32 %v3026, %v2854
        %v3028 = vadd.f32 %v3027, %v2858
        %v3029 = vadd.f32 %v3028, %v2862
        %v3030 = vadd.f32 %v3029, %v2866
        %v3031 = vadd.f32 %v3030, %v2870
        %v3032 = vadd.f32 %v3031, %v2874
        %v3033 = vadd.f32 %v3032, %v2878
        %v3034 = vadd.f32 %v3033, %v2882
        %v3035 = vadd.f32 %v3034, %v2886
        %v3036 = vadd.f32 %v3035, %v2890
        %v3037 = vadd.f32 %v3036, %v2894
        %v3038 = vrot.slane %v3037, 4
        %v3039 = vadd.f32 %v3037, %v3038
        %v3040 = vrot.slane %v3039, 2
        %v3041 = vadd.f32 %v3039, %v3040
        %v3042 = vrot.slane %v3041, 1
        %v3043 = vadd.f32 %v3041, %v3042
        %v3048 = vcombine.low %v2932, %v2969
        %v3049 = vcombine.low %v3006, %v3043
        %v3051 = vunpack.c.l.s4 1966171168
        %v3052 = vunpack.c.0.s8 %v3051
        %v3053 = vlaneseq
        %v3054 = vshrl.u32 %v3053, 7
        %v3055 = vsub.s32 %v3052, %v3054
        %v3056 = vrot.slane %v3048, %v3055
        %v3058 = vunpack.c.l.s4 1966171168
        %v3059 = vunpack.c.0.s8 %v3058
        %v3060 = vlaneseq
        %v3061 = vshrl.u32 %v3060, 7
        %v3062 = vsub.s32 %v3059, %v3061
        %v3063 = vrot.slane %v3049, %v3062
        %v3064 = vcombine.low %v3056, %v3063
        %v3066 = vunpack.c.l.s4 1966171168
        %v3067 = vunpack.c.0.s8 %v3066
        %v3068 = vlaneseq
        %v3069 = vshrl.u32 %v3068, 7
        %v3070 = vsub.s32 %v3067, %v3069
        %v3071 = vrot.slane %v3064, %v3070
        %v3073 = vadd.f32 %v2895, %v3071
        %3074 = vst.msk [vmem:[#allocation2 + $0x4] sm:$0xf] %vm1863, %v3073
        %v3075 = vld [vmem:[%s1 + $0x20] sm:$0x77]
        %v3076 = vld [vmem:[%s1 + $0x28] sm:$0x77]
        %v3079 = vlaneseq
        %v3080 = vshrl.u32 %v3079, 7
        %v3081 = vsub.s32 0, %v3080
        %v3082 = vrot.slane %v3075, %v3081
        %v3083 = vlaneseq
        %v3084 = vshrl.u32 %v3083, 7
        %v3085 = vsub.s32 4, %v3084
        %v3086 = vrot.slane %v3075, %v3085
        %v3087 = vlaneseq
        %v3088 = vshrl.u32 %v3087, 7
        %v3089 = vsub.s32 0, %v3088
        %v3090 = vrot.slane %v3076, %v3089
        %v3091 = vlaneseq
        %v3092 = vshrl.u32 %v3091, 7
        %v3093 = vsub.s32 4, %v3092
        %v3094 = vrot.slane %v3076, %v3093
        %v3099 = vlaneseq
        %v3100 = vshrl.u32 %v3099, 7
        %v3101 = vsub.s32 0, %v3100
        %v3102 = vrot.slane %v3082, %v3101
        %v3103 = vlaneseq
        %v3104 = vshrl.u32 %v3103, 7
        %v3105 = vsub.s32 0, %v3104
        %v3106 = vrot.slane %v3086, %v3105
        %v3107 = vlaneseq
        %v3108 = vshrl.u32 %v3107, 7
        %v3109 = vsub.s32 0, %v3108
        %v3110 = vrot.slane %v3090, %v3109
        %v3111 = vlaneseq
        %v3112 = vshrl.u32 %v3111, 7
        %v3113 = vsub.s32 0, %v3112
        %v3114 = vrot.slane %v3094, %v3113
        %v3115 = vmul.f32 %v240, %v3102
        %v3116 = vmul.f32 %v240, %v3106
        %v3117 = vmul.f32 %v240, %v3110
        %v3118 = vmul.f32 %v240, %v3114
        %v3119 = vmul.f32 %v245, %v3102
        %v3120 = vmul.f32 %v245, %v3106
        %v3121 = vmul.f32 %v245, %v3110
        %v3122 = vmul.f32 %v245, %v3114
        %v3123 = vmul.f32 %v250, %v3102
        %v3124 = vmul.f32 %v250, %v3106
        %v3125 = vmul.f32 %v250, %v3110
        %v3126 = vmul.f32 %v250, %v3114
        %v3127 = vmul.f32 %v255, %v3102
        %v3128 = vmul.f32 %v255, %v3106
        %v3129 = vmul.f32 %v255, %v3110
        %v3130 = vmul.f32 %v255, %v3114
        %v3131 = vmul.f32 %v260, %v3102
        %v3132 = vmul.f32 %v260, %v3106
        %v3133 = vmul.f32 %v260, %v3110
        %v3134 = vmul.f32 %v260, %v3114
        %v3135 = vmul.f32 %v265, %v3102
        %v3136 = vmul.f32 %v265, %v3106
        %v3137 = vmul.f32 %v265, %v3110
        %v3138 = vmul.f32 %v265, %v3114
        %v3139 = vmul.f32 %v270, %v3102
        %v3140 = vmul.f32 %v270, %v3106
        %v3141 = vmul.f32 %v270, %v3110
        %v3142 = vmul.f32 %v270, %v3114
        %v3143 = vmul.f32 %v275, %v3102
        %v3144 = vmul.f32 %v275, %v3106
        %v3145 = vmul.f32 %v275, %v3110
        %v3146 = vmul.f32 %v275, %v3114
        %v3147 = vmul.f32 %v280, %v3102
        %v3148 = vmul.f32 %v280, %v3106
        %v3149 = vmul.f32 %v280, %v3110
        %v3150 = vmul.f32 %v280, %v3114
        %v3151 = vmul.f32 %v285, %v3102
        %v3152 = vmul.f32 %v285, %v3106
        %v3153 = vmul.f32 %v285, %v3110
        %v3154 = vmul.f32 %v285, %v3114
        %v3155 = vmul.f32 %v290, %v3102
        %v3156 = vmul.f32 %v290, %v3106
        %v3157 = vmul.f32 %v290, %v3110
        %v3158 = vmul.f32 %v290, %v3114
        %v3159 = vmul.f32 %v295, %v3102
        %v3160 = vmul.f32 %v295, %v3106
        %v3161 = vmul.f32 %v295, %v3110
        %v3162 = vmul.f32 %v295, %v3114
        %v3163 = vmul.f32 %v300, %v3102
        %v3164 = vmul.f32 %v300, %v3106
        %v3165 = vmul.f32 %v300, %v3110
        %v3166 = vmul.f32 %v300, %v3114
        %v3167 = vmul.f32 %v305, %v3102
        %v3168 = vmul.f32 %v305, %v3106
        %v3169 = vmul.f32 %v305, %v3110
        %v3170 = vmul.f32 %v305, %v3114
        %v3171 = vmul.f32 %v310, %v3102
        %v3172 = vmul.f32 %v310, %v3106
        %v3173 = vmul.f32 %v310, %v3110
        %v3174 = vmul.f32 %v310, %v3114
        %v3175 = vmul.f32 %v315, %v3102
        %v3176 = vmul.f32 %v315, %v3106
        %v3177 = vmul.f32 %v315, %v3110
        %v3178 = vmul.f32 %v315, %v3114
        %v3179 = vmul.f32 %v320, %v3102
        %v3180 = vmul.f32 %v320, %v3106
        %v3181 = vmul.f32 %v320, %v3110
        %v3182 = vmul.f32 %v320, %v3114
        %v3183 = vmul.f32 %v325, %v3102
        %v3184 = vmul.f32 %v325, %v3106
        %v3185 = vmul.f32 %v325, %v3110
        %v3186 = vmul.f32 %v325, %v3114
        %v3187 = vmul.f32 %v330, %v3102
        %v3188 = vmul.f32 %v330, %v3106
        %v3189 = vmul.f32 %v330, %v3110
        %v3190 = vmul.f32 %v330, %v3114
        %v3191 = vmul.f32 %v335, %v3102
        %v3192 = vmul.f32 %v335, %v3106
        %v3193 = vmul.f32 %v335, %v3110
        %v3194 = vmul.f32 %v335, %v3114
        %v3195 = vmul.f32 %v340, %v3102
        %v3196 = vmul.f32 %v340, %v3106
        %v3197 = vmul.f32 %v340, %v3110
        %v3198 = vmul.f32 %v340, %v3114
        %v3199 = vmul.f32 %v345, %v3102
        %v3200 = vmul.f32 %v345, %v3106
        %v3201 = vmul.f32 %v345, %v3110
        %v3202 = vmul.f32 %v345, %v3114
        %v3203 = vmul.f32 %v350, %v3102
        %v3204 = vmul.f32 %v350, %v3106
        %v3205 = vmul.f32 %v350, %v3110
        %v3206 = vmul.f32 %v350, %v3114
        %v3207 = vmul.f32 %v355, %v3102
        %v3208 = vmul.f32 %v355, %v3106
        %v3209 = vmul.f32 %v355, %v3110
        %v3210 = vmul.f32 %v355, %v3114
        %v3211 = vmul.f32 %v360, %v3102
        %v3212 = vmul.f32 %v360, %v3106
        %v3213 = vmul.f32 %v360, %v3110
        %v3214 = vmul.f32 %v360, %v3114
        %v3215 = vmul.f32 %v365, %v3102
        %v3216 = vmul.f32 %v365, %v3106
        %v3217 = vmul.f32 %v365, %v3110
        %v3218 = vmul.f32 %v365, %v3114
        %v3219 = vmul.f32 %v370, %v3102
        %v3220 = vmul.f32 %v370, %v3106
        %v3221 = vmul.f32 %v370, %v3110
        %v3222 = vmul.f32 %v370, %v3114
        %v3223 = vmul.f32 %v375, %v3102
        %v3224 = vmul.f32 %v375, %v3106
        %v3225 = vmul.f32 %v375, %v3110
        %v3226 = vmul.f32 %v375, %v3114
        %v3227 = vmul.f32 %v380, %v3102
        %v3228 = vmul.f32 %v380, %v3106
        %v3229 = vmul.f32 %v380, %v3110
        %v3230 = vmul.f32 %v380, %v3114
        %v3231 = vmul.f32 %v385, %v3102
        %v3232 = vmul.f32 %v385, %v3106
        %v3233 = vmul.f32 %v385, %v3110
        %v3234 = vmul.f32 %v385, %v3114
        %v3235 = vmul.f32 %v390, %v3102
        %v3236 = vmul.f32 %v390, %v3106
        %v3237 = vmul.f32 %v390, %v3110
        %v3238 = vmul.f32 %v390, %v3114
        %v3239 = vmul.f32 %v395, %v3102
        %v3240 = vmul.f32 %v395, %v3106
        %v3241 = vmul.f32 %v395, %v3110
        %v3242 = vmul.f32 %v395, %v3114
        %v3243 = vlaneseq
        %v3244 = vshrl.u32 %v3243, 7
        %v3245 = vsub.s32 1, %v3244
        %v3246 = vrot.slane %v3075, %v3245
        %v3247 = vlaneseq
        %v3248 = vshrl.u32 %v3247, 7
        %v3249 = vsub.s32 5, %v3248
        %v3250 = vrot.slane %v3075, %v3249
        %v3251 = vlaneseq
        %v3252 = vshrl.u32 %v3251, 7
        %v3253 = vsub.s32 1, %v3252
        %v3254 = vrot.slane %v3076, %v3253
        %v3255 = vlaneseq
        %v3256 = vshrl.u32 %v3255, 7
        %v3257 = vsub.s32 5, %v3256
        %v3258 = vrot.slane %v3076, %v3257
        %v3263 = vlaneseq
        %v3264 = vshrl.u32 %v3263, 7
        %v3265 = vsub.s32 1, %v3264
        %v3266 = vrot.slane %v3246, %v3265
        %v3267 = vlaneseq
        %v3268 = vshrl.u32 %v3267, 7
        %v3269 = vsub.s32 1, %v3268
        %v3270 = vrot.slane %v3250, %v3269
        %v3271 = vlaneseq
        %v3272 = vshrl.u32 %v3271, 7
        %v3273 = vsub.s32 1, %v3272
        %v3274 = vrot.slane %v3254, %v3273
        %v3275 = vlaneseq
        %v3276 = vshrl.u32 %v3275, 7
        %v3277 = vsub.s32 1, %v3276
        %v3278 = vrot.slane %v3258, %v3277
        %v3279 = vmul.f32 %v565, %v3266
        %v3280 = vmul.f32 %v565, %v3270
        %v3281 = vmul.f32 %v565, %v3274
        %v3282 = vmul.f32 %v565, %v3278
        %v3283 = vmul.f32 %v569, %v3266
        %v3284 = vmul.f32 %v569, %v3270
        %v3285 = vmul.f32 %v569, %v3274
        %v3286 = vmul.f32 %v569, %v3278
        %v3287 = vmul.f32 %v573, %v3266
        %v3288 = vmul.f32 %v573, %v3270
        %v3289 = vmul.f32 %v573, %v3274
        %v3290 = vmul.f32 %v573, %v3278
        %v3291 = vmul.f32 %v577, %v3266
        %v3292 = vmul.f32 %v577, %v3270
        %v3293 = vmul.f32 %v577, %v3274
        %v3294 = vmul.f32 %v577, %v3278
        %v3295 = vmul.f32 %v581, %v3266
        %v3296 = vmul.f32 %v581, %v3270
        %v3297 = vmul.f32 %v581, %v3274
        %v3298 = vmul.f32 %v581, %v3278
        %v3299 = vmul.f32 %v585, %v3266
        %v3300 = vmul.f32 %v585, %v3270
        %v3301 = vmul.f32 %v585, %v3274
        %v3302 = vmul.f32 %v585, %v3278
        %v3303 = vmul.f32 %v589, %v3266
        %v3304 = vmul.f32 %v589, %v3270
        %v3305 = vmul.f32 %v589, %v3274
        %v3306 = vmul.f32 %v589, %v3278
        %v3307 = vmul.f32 %v593, %v3266
        %v3308 = vmul.f32 %v593, %v3270
        %v3309 = vmul.f32 %v593, %v3274
        %v3310 = vmul.f32 %v593, %v3278
        %v3311 = vmul.f32 %v597, %v3266
        %v3312 = vmul.f32 %v597, %v3270
        %v3313 = vmul.f32 %v597, %v3274
        %v3314 = vmul.f32 %v597, %v3278
        %v3315 = vmul.f32 %v601, %v3266
        %v3316 = vmul.f32 %v601, %v3270
        %v3317 = vmul.f32 %v601, %v3274
        %v3318 = vmul.f32 %v601, %v3278
        %v3319 = vmul.f32 %v605, %v3266
        %v3320 = vmul.f32 %v605, %v3270
        %v3321 = vmul.f32 %v605, %v3274
        %v3322 = vmul.f32 %v605, %v3278
        %v3323 = vmul.f32 %v609, %v3266
        %v3324 = vmul.f32 %v609, %v3270
        %v3325 = vmul.f32 %v609, %v3274
        %v3326 = vmul.f32 %v609, %v3278
        %v3327 = vmul.f32 %v613, %v3266
        %v3328 = vmul.f32 %v613, %v3270
        %v3329 = vmul.f32 %v613, %v3274
        %v3330 = vmul.f32 %v613, %v3278
        %v3331 = vmul.f32 %v617, %v3266
        %v3332 = vmul.f32 %v617, %v3270
        %v3333 = vmul.f32 %v617, %v3274
        %v3334 = vmul.f32 %v617, %v3278
        %v3335 = vmul.f32 %v621, %v3266
        %v3336 = vmul.f32 %v621, %v3270
        %v3337 = vmul.f32 %v621, %v3274
        %v3338 = vmul.f32 %v621, %v3278
        %v3339 = vmul.f32 %v625, %v3266
        %v3340 = vmul.f32 %v625, %v3270
        %v3341 = vmul.f32 %v625, %v3274
        %v3342 = vmul.f32 %v625, %v3278
        %v3343 = vmul.f32 %v629, %v3266
        %v3344 = vmul.f32 %v629, %v3270
        %v3345 = vmul.f32 %v629, %v3274
        %v3346 = vmul.f32 %v629, %v3278
        %v3347 = vmul.f32 %v633, %v3266
        %v3348 = vmul.f32 %v633, %v3270
        %v3349 = vmul.f32 %v633, %v3274
        %v3350 = vmul.f32 %v633, %v3278
        %v3351 = vmul.f32 %v637, %v3266
        %v3352 = vmul.f32 %v637, %v3270
        %v3353 = vmul.f32 %v637, %v3274
        %v3354 = vmul.f32 %v637, %v3278
        %v3355 = vmul.f32 %v641, %v3266
        %v3356 = vmul.f32 %v641, %v3270
        %v3357 = vmul.f32 %v641, %v3274
        %v3358 = vmul.f32 %v641, %v3278
        %v3359 = vmul.f32 %v645, %v3266
        %v3360 = vmul.f32 %v645, %v3270
        %v3361 = vmul.f32 %v645, %v3274
        %v3362 = vmul.f32 %v645, %v3278
        %v3363 = vmul.f32 %v649, %v3266
        %v3364 = vmul.f32 %v649, %v3270
        %v3365 = vmul.f32 %v649, %v3274
        %v3366 = vmul.f32 %v649, %v3278
        %v3367 = vmul.f32 %v653, %v3266
        %v3368 = vmul.f32 %v653, %v3270
        %v3369 = vmul.f32 %v653, %v3274
        %v3370 = vmul.f32 %v653, %v3278
        %v3371 = vmul.f32 %v657, %v3266
        %v3372 = vmul.f32 %v657, %v3270
        %v3373 = vmul.f32 %v657, %v3274
        %v3374 = vmul.f32 %v657, %v3278
        %v3375 = vmul.f32 %v661, %v3266
        %v3376 = vmul.f32 %v661, %v3270
        %v3377 = vmul.f32 %v661, %v3274
        %v3378 = vmul.f32 %v661, %v3278
        %v3379 = vmul.f32 %v665, %v3266
        %v3380 = vmul.f32 %v665, %v3270
        %v3381 = vmul.f32 %v665, %v3274
        %v3382 = vmul.f32 %v665, %v3278
        %v3383 = vmul.f32 %v669, %v3266
        %v3384 = vmul.f32 %v669, %v3270
        %v3385 = vmul.f32 %v669, %v3274
        %v3386 = vmul.f32 %v669, %v3278
        %v3387 = vmul.f32 %v673, %v3266
        %v3388 = vmul.f32 %v673, %v3270
        %v3389 = vmul.f32 %v673, %v3274
        %v3390 = vmul.f32 %v673, %v3278
        %v3391 = vmul.f32 %v677, %v3266
        %v3392 = vmul.f32 %v677, %v3270
        %v3393 = vmul.f32 %v677, %v3274
        %v3394 = vmul.f32 %v677, %v3278
        %v3395 = vmul.f32 %v681, %v3266
        %v3396 = vmul.f32 %v681, %v3270
        %v3397 = vmul.f32 %v681, %v3274
        %v3398 = vmul.f32 %v681, %v3278
        %v3399 = vmul.f32 %v685, %v3266
        %v3400 = vmul.f32 %v685, %v3270
        %v3401 = vmul.f32 %v685, %v3274
        %v3402 = vmul.f32 %v685, %v3278
        %v3403 = vmul.f32 %v689, %v3266
        %v3404 = vmul.f32 %v689, %v3270
        %v3405 = vmul.f32 %v689, %v3274
        %v3406 = vmul.f32 %v689, %v3278
        %v3407 = vadd.f32 %v3115, %v3279
        %v3408 = vadd.f32 %v3116, %v3280
        %v3409 = vadd.f32 %v3117, %v3281
        %v3410 = vadd.f32 %v3118, %v3282
        %v3411 = vadd.f32 %v3119, %v3283
        %v3412 = vadd.f32 %v3120, %v3284
        %v3413 = vadd.f32 %v3121, %v3285
        %v3414 = vadd.f32 %v3122, %v3286
        %v3415 = vadd.f32 %v3123, %v3287
        %v3416 = vadd.f32 %v3124, %v3288
        %v3417 = vadd.f32 %v3125, %v3289
        %v3418 = vadd.f32 %v3126, %v3290
        %v3419 = vadd.f32 %v3127, %v3291
        %v3420 = vadd.f32 %v3128, %v3292
        %v3421 = vadd.f32 %v3129, %v3293
        %v3422 = vadd.f32 %v3130, %v3294
        %v3423 = vadd.f32 %v3131, %v3295
        %v3424 = vadd.f32 %v3132, %v3296
        %v3425 = vadd.f32 %v3133, %v3297
        %v3426 = vadd.f32 %v3134, %v3298
        %v3427 = vadd.f32 %v3135, %v3299
        %v3428 = vadd.f32 %v3136, %v3300
        %v3429 = vadd.f32 %v3137, %v3301
        %v3430 = vadd.f32 %v3138, %v3302
        %v3431 = vadd.f32 %v3139, %v3303
        %v3432 = vadd.f32 %v3140, %v3304
        %v3433 = vadd.f32 %v3141, %v3305
        %v3434 = vadd.f32 %v3142, %v3306
        %v3435 = vadd.f32 %v3143, %v3307
        %v3436 = vadd.f32 %v3144, %v3308
        %v3437 = vadd.f32 %v3145, %v3309
        %v3438 = vadd.f32 %v3146, %v3310
        %v3439 = vadd.f32 %v3147, %v3311
        %v3440 = vadd.f32 %v3148, %v3312
        %v3441 = vadd.f32 %v3149, %v3313
        %v3442 = vadd.f32 %v3150, %v3314
        %v3443 = vadd.f32 %v3151, %v3315
        %v3444 = vadd.f32 %v3152, %v3316
        %v3445 = vadd.f32 %v3153, %v3317
        %v3446 = vadd.f32 %v3154, %v3318
        %v3447 = vadd.f32 %v3155, %v3319
        %v3448 = vadd.f32 %v3156, %v3320
        %v3449 = vadd.f32 %v3157, %v3321
        %v3450 = vadd.f32 %v3158, %v3322
        %v3451 = vadd.f32 %v3159, %v3323
        %v3452 = vadd.f32 %v3160, %v3324
        %v3453 = vadd.f32 %v3161, %v3325
        %v3454 = vadd.f32 %v3162, %v3326
        %v3455 = vadd.f32 %v3163, %v3327
        %v3456 = vadd.f32 %v3164, %v3328
        %v3457 = vadd.f32 %v3165, %v3329
        %v3458 = vadd.f32 %v3166, %v3330
        %v3459 = vadd.f32 %v3167, %v3331
        %v3460 = vadd.f32 %v3168, %v3332
        %v3461 = vadd.f32 %v3169, %v3333
        %v3462 = vadd.f32 %v3170, %v3334
        %v3463 = vadd.f32 %v3171, %v3335
        %v3464 = vadd.f32 %v3172, %v3336
        %v3465 = vadd.f32 %v3173, %v3337
        %v3466 = vadd.f32 %v3174, %v3338
        %v3467 = vadd.f32 %v3175, %v3339
        %v3468 = vadd.f32 %v3176, %v3340
        %v3469 = vadd.f32 %v3177, %v3341
        %v3470 = vadd.f32 %v3178, %v3342
        %v3471 = vadd.f32 %v3179, %v3343
        %v3472 = vadd.f32 %v3180, %v3344
        %v3473 = vadd.f32 %v3181, %v3345
        %v3474 = vadd.f32 %v3182, %v3346
        %v3475 = vadd.f32 %v3183, %v3347
        %v3476 = vadd.f32 %v3184, %v3348
        %v3477 = vadd.f32 %v3185, %v3349
        %v3478 = vadd.f32 %v3186, %v3350
        %v3479 = vadd.f32 %v3187, %v3351
        %v3480 = vadd.f32 %v3188, %v3352
        %v3481 = vadd.f32 %v3189, %v3353
        %v3482 = vadd.f32 %v3190, %v3354
        %v3483 = vadd.f32 %v3191, %v3355
        %v3484 = vadd.f32 %v3192, %v3356
        %v3485 = vadd.f32 %v3193, %v3357
        %v3486 = vadd.f32 %v3194, %v3358
        %v3487 = vadd.f32 %v3195, %v3359
        %v3488 = vadd.f32 %v3196, %v3360
        %v3489 = vadd.f32 %v3197, %v3361
        %v3490 = vadd.f32 %v3198, %v3362
        %v3491 = vadd.f32 %v3199, %v3363
        %v3492 = vadd.f32 %v3200, %v3364
        %v3493 = vadd.f32 %v3201, %v3365
        %v3494 = vadd.f32 %v3202, %v3366
        %v3495 = vadd.f32 %v3203, %v3367
        %v3496 = vadd.f32 %v3204, %v3368
        %v3497 = vadd.f32 %v3205, %v3369
        %v3498 = vadd.f32 %v3206, %v3370
        %v3499 = vadd.f32 %v3207, %v3371
        %v3500 = vadd.f32 %v3208, %v3372
        %v3501 = vadd.f32 %v3209, %v3373
        %v3502 = vadd.f32 %v3210, %v3374
        %v3503 = vadd.f32 %v3211, %v3375
        %v3504 = vadd.f32 %v3212, %v3376
        %v3505 = vadd.f32 %v3213, %v3377
        %v3506 = vadd.f32 %v3214, %v3378
        %v3507 = vadd.f32 %v3215, %v3379
        %v3508 = vadd.f32 %v3216, %v3380
        %v3509 = vadd.f32 %v3217, %v3381
        %v3510 = vadd.f32 %v3218, %v3382
        %v3511 = vadd.f32 %v3219, %v3383
        %v3512 = vadd.f32 %v3220, %v3384
        %v3513 = vadd.f32 %v3221, %v3385
        %v3514 = vadd.f32 %v3222, %v3386
        %v3515 = vadd.f32 %v3223, %v3387
        %v3516 = vadd.f32 %v3224, %v3388
        %v3517 = vadd.f32 %v3225, %v3389
        %v3518 = vadd.f32 %v3226, %v3390
        %v3519 = vadd.f32 %v3227, %v3391
        %v3520 = vadd.f32 %v3228, %v3392
        %v3521 = vadd.f32 %v3229, %v3393
        %v3522 = vadd.f32 %v3230, %v3394
        %v3523 = vadd.f32 %v3231, %v3395
        %v3524 = vadd.f32 %v3232, %v3396
        %v3525 = vadd.f32 %v3233, %v3397
        %v3526 = vadd.f32 %v3234, %v3398
        %v3527 = vadd.f32 %v3235, %v3399
        %v3528 = vadd.f32 %v3236, %v3400
        %v3529 = vadd.f32 %v3237, %v3401
        %v3530 = vadd.f32 %v3238, %v3402
        %v3531 = vadd.f32 %v3239, %v3403
        %v3532 = vadd.f32 %v3240, %v3404
        %v3533 = vadd.f32 %v3241, %v3405
        %v3534 = vadd.f32 %v3242, %v3406
        %v3535 = vlaneseq
        %v3536 = vshrl.u32 %v3535, 7
        %v3537 = vsub.s32 2, %v3536
        %v3538 = vrot.slane %v3075, %v3537
        %v3539 = vlaneseq
        %v3540 = vshrl.u32 %v3539, 7
        %v3541 = vsub.s32 6, %v3540
        %v3542 = vrot.slane %v3075, %v3541
        %v3543 = vlaneseq
        %v3544 = vshrl.u32 %v3543, 7
        %v3545 = vsub.s32 2, %v3544
        %v3546 = vrot.slane %v3076, %v3545
        %v3547 = vlaneseq
        %v3548 = vshrl.u32 %v3547, 7
        %v3549 = vsub.s32 6, %v3548
        %v3550 = vrot.slane %v3076, %v3549
        %v3555 = vlaneseq
        %v3556 = vshrl.u32 %v3555, 7
        %v3557 = vsub.s32 2, %v3556
        %v3558 = vrot.slane %v3538, %v3557
        %v3559 = vlaneseq
        %v3560 = vshrl.u32 %v3559, 7
        %v3561 = vsub.s32 2, %v3560
        %v3562 = vrot.slane %v3542, %v3561
        %v3563 = vlaneseq
        %v3564 = vshrl.u32 %v3563, 7
        %v3565 = vsub.s32 2, %v3564
        %v3566 = vrot.slane %v3546, %v3565
        %v3567 = vlaneseq
        %v3568 = vshrl.u32 %v3567, 7
        %v3569 = vsub.s32 2, %v3568
        %v3570 = vrot.slane %v3550, %v3569
        %v3571 = vmul.f32 %v985, %v3558
        %v3572 = vmul.f32 %v985, %v3562
        %v3573 = vmul.f32 %v985, %v3566
        %v3574 = vmul.f32 %v985, %v3570
        %v3575 = vmul.f32 %v989, %v3558
        %v3576 = vmul.f32 %v989, %v3562
        %v3577 = vmul.f32 %v989, %v3566
        %v3578 = vmul.f32 %v989, %v3570
        %v3579 = vmul.f32 %v993, %v3558
        %v3580 = vmul.f32 %v993, %v3562
        %v3581 = vmul.f32 %v993, %v3566
        %v3582 = vmul.f32 %v993, %v3570
        %v3583 = vmul.f32 %v997, %v3558
        %v3584 = vmul.f32 %v997, %v3562
        %v3585 = vmul.f32 %v997, %v3566
        %v3586 = vmul.f32 %v997, %v3570
        %v3587 = vmul.f32 %v1001, %v3558
        %v3588 = vmul.f32 %v1001, %v3562
        %v3589 = vmul.f32 %v1001, %v3566
        %v3590 = vmul.f32 %v1001, %v3570
        %v3591 = vmul.f32 %v1005, %v3558
        %v3592 = vmul.f32 %v1005, %v3562
        %v3593 = vmul.f32 %v1005, %v3566
        %v3594 = vmul.f32 %v1005, %v3570
        %v3595 = vmul.f32 %v1009, %v3558
        %v3596 = vmul.f32 %v1009, %v3562
        %v3597 = vmul.f32 %v1009, %v3566
        %v3598 = vmul.f32 %v1009, %v3570
        %v3599 = vmul.f32 %v1013, %v3558
        %v3600 = vmul.f32 %v1013, %v3562
        %v3601 = vmul.f32 %v1013, %v3566
        %v3602 = vmul.f32 %v1013, %v3570
        %v3603 = vmul.f32 %v1017, %v3558
        %v3604 = vmul.f32 %v1017, %v3562
        %v3605 = vmul.f32 %v1017, %v3566
        %v3606 = vmul.f32 %v1017, %v3570
        %v3607 = vmul.f32 %v1021, %v3558
        %v3608 = vmul.f32 %v1021, %v3562
        %v3609 = vmul.f32 %v1021, %v3566
        %v3610 = vmul.f32 %v1021, %v3570
        %v3611 = vmul.f32 %v1025, %v3558
        %v3612 = vmul.f32 %v1025, %v3562
        %v3613 = vmul.f32 %v1025, %v3566
        %v3614 = vmul.f32 %v1025, %v3570
        %v3615 = vmul.f32 %v1029, %v3558
        %v3616 = vmul.f32 %v1029, %v3562
        %v3617 = vmul.f32 %v1029, %v3566
        %v3618 = vmul.f32 %v1029, %v3570
        %v3619 = vmul.f32 %v1033, %v3558
        %v3620 = vmul.f32 %v1033, %v3562
        %v3621 = vmul.f32 %v1033, %v3566
        %v3622 = vmul.f32 %v1033, %v3570
        %v3623 = vmul.f32 %v1037, %v3558
        %v3624 = vmul.f32 %v1037, %v3562
        %v3625 = vmul.f32 %v1037, %v3566
        %v3626 = vmul.f32 %v1037, %v3570
        %v3627 = vmul.f32 %v1041, %v3558
        %v3628 = vmul.f32 %v1041, %v3562
        %v3629 = vmul.f32 %v1041, %v3566
        %v3630 = vmul.f32 %v1041, %v3570
        %v3631 = vmul.f32 %v1045, %v3558
        %v3632 = vmul.f32 %v1045, %v3562
        %v3633 = vmul.f32 %v1045, %v3566
        %v3634 = vmul.f32 %v1045, %v3570
        %v3635 = vmul.f32 %v1049, %v3558
        %v3636 = vmul.f32 %v1049, %v3562
        %v3637 = vmul.f32 %v1049, %v3566
        %v3638 = vmul.f32 %v1049, %v3570
        %v3639 = vmul.f32 %v1053, %v3558
        %v3640 = vmul.f32 %v1053, %v3562
        %v3641 = vmul.f32 %v1053, %v3566
        %v3642 = vmul.f32 %v1053, %v3570
        %v3643 = vmul.f32 %v1057, %v3558
        %v3644 = vmul.f32 %v1057, %v3562
        %v3645 = vmul.f32 %v1057, %v3566
        %v3646 = vmul.f32 %v1057, %v3570
        %v3647 = vmul.f32 %v1061, %v3558
        %v3648 = vmul.f32 %v1061, %v3562
        %v3649 = vmul.f32 %v1061, %v3566
        %v3650 = vmul.f32 %v1061, %v3570
        %v3651 = vmul.f32 %v1065, %v3558
        %v3652 = vmul.f32 %v1065, %v3562
        %v3653 = vmul.f32 %v1065, %v3566
        %v3654 = vmul.f32 %v1065, %v3570
        %v3655 = vmul.f32 %v1069, %v3558
        %v3656 = vmul.f32 %v1069, %v3562
        %v3657 = vmul.f32 %v1069, %v3566
        %v3658 = vmul.f32 %v1069, %v3570
        %v3659 = vmul.f32 %v1073, %v3558
        %v3660 = vmul.f32 %v1073, %v3562
        %v3661 = vmul.f32 %v1073, %v3566
        %v3662 = vmul.f32 %v1073, %v3570
        %v3663 = vmul.f32 %v1077, %v3558
        %v3664 = vmul.f32 %v1077, %v3562
        %v3665 = vmul.f32 %v1077, %v3566
        %v3666 = vmul.f32 %v1077, %v3570
        %v3667 = vmul.f32 %v1081, %v3558
        %v3668 = vmul.f32 %v1081, %v3562
        %v3669 = vmul.f32 %v1081, %v3566
        %v3670 = vmul.f32 %v1081, %v3570
        %v3671 = vmul.f32 %v1085, %v3558
        %v3672 = vmul.f32 %v1085, %v3562
        %v3673 = vmul.f32 %v1085, %v3566
        %v3674 = vmul.f32 %v1085, %v3570
        %v3675 = vmul.f32 %v1089, %v3558
        %v3676 = vmul.f32 %v1089, %v3562
        %v3677 = vmul.f32 %v1089, %v3566
        %v3678 = vmul.f32 %v1089, %v3570
        %v3679 = vmul.f32 %v1093, %v3558
        %v3680 = vmul.f32 %v1093, %v3562
        %v3681 = vmul.f32 %v1093, %v3566
        %v3682 = vmul.f32 %v1093, %v3570
        %v3683 = vmul.f32 %v1097, %v3558
        %v3684 = vmul.f32 %v1097, %v3562
        %v3685 = vmul.f32 %v1097, %v3566
        %v3686 = vmul.f32 %v1097, %v3570
        %v3687 = vmul.f32 %v1101, %v3558
        %v3688 = vmul.f32 %v1101, %v3562
        %v3689 = vmul.f32 %v1101, %v3566
        %v3690 = vmul.f32 %v1101, %v3570
        %v3691 = vmul.f32 %v1105, %v3558
        %v3692 = vmul.f32 %v1105, %v3562
        %v3693 = vmul.f32 %v1105, %v3566
        %v3694 = vmul.f32 %v1105, %v3570
        %v3695 = vmul.f32 %v1109, %v3558
        %v3696 = vmul.f32 %v1109, %v3562
        %v3697 = vmul.f32 %v1109, %v3566
        %v3698 = vmul.f32 %v1109, %v3570
        %v3699 = vadd.f32 %v3407, %v3571
        %v3700 = vadd.f32 %v3408, %v3572
        %v3701 = vadd.f32 %v3409, %v3573
        %v3702 = vadd.f32 %v3410, %v3574
        %v3703 = vadd.f32 %v3411, %v3575
        %v3704 = vadd.f32 %v3412, %v3576
        %v3705 = vadd.f32 %v3413, %v3577
        %v3706 = vadd.f32 %v3414, %v3578
        %v3707 = vadd.f32 %v3415, %v3579
        %v3708 = vadd.f32 %v3416, %v3580
        %v3709 = vadd.f32 %v3417, %v3581
        %v3710 = vadd.f32 %v3418, %v3582
        %v3711 = vadd.f32 %v3419, %v3583
        %v3712 = vadd.f32 %v3420, %v3584
        %v3713 = vadd.f32 %v3421, %v3585
        %v3714 = vadd.f32 %v3422, %v3586
        %v3715 = vadd.f32 %v3423, %v3587
        %v3716 = vadd.f32 %v3424, %v3588
        %v3717 = vadd.f32 %v3425, %v3589
        %v3718 = vadd.f32 %v3426, %v3590
        %v3719 = vadd.f32 %v3427, %v3591
        %v3720 = vadd.f32 %v3428, %v3592
        %v3721 = vadd.f32 %v3429, %v3593
        %v3722 = vadd.f32 %v3430, %v3594
        %v3723 = vadd.f32 %v3431, %v3595
        %v3724 = vadd.f32 %v3432, %v3596
        %v3725 = vadd.f32 %v3433, %v3597
        %v3726 = vadd.f32 %v3434, %v3598
        %v3727 = vadd.f32 %v3435, %v3599
        %v3728 = vadd.f32 %v3436, %v3600
        %v3729 = vadd.f32 %v3437, %v3601
        %v3730 = vadd.f32 %v3438, %v3602
        %v3731 = vadd.f32 %v3439, %v3603
        %v3732 = vadd.f32 %v3440, %v3604
        %v3733 = vadd.f32 %v3441, %v3605
        %v3734 = vadd.f32 %v3442, %v3606
        %v3735 = vadd.f32 %v3443, %v3607
        %v3736 = vadd.f32 %v3444, %v3608
        %v3737 = vadd.f32 %v3445, %v3609
        %v3738 = vadd.f32 %v3446, %v3610
        %v3739 = vadd.f32 %v3447, %v3611
        %v3740 = vadd.f32 %v3448, %v3612
        %v3741 = vadd.f32 %v3449, %v3613
        %v3742 = vadd.f32 %v3450, %v3614
        %v3743 = vadd.f32 %v3451, %v3615
        %v3744 = vadd.f32 %v3452, %v3616
        %v3745 = vadd.f32 %v3453, %v3617
        %v3746 = vadd.f32 %v3454, %v3618
        %v3747 = vadd.f32 %v3455, %v3619
        %v3748 = vadd.f32 %v3456, %v3620
        %v3749 = vadd.f32 %v3457, %v3621
        %v3750 = vadd.f32 %v3458, %v3622
        %v3751 = vadd.f32 %v3459, %v3623
        %v3752 = vadd.f32 %v3460, %v3624
        %v3753 = vadd.f32 %v3461, %v3625
        %v3754 = vadd.f32 %v3462, %v3626
        %v3755 = vadd.f32 %v3463, %v3627
        %v3756 = vadd.f32 %v3464, %v3628
        %v3757 = vadd.f32 %v3465, %v3629
        %v3758 = vadd.f32 %v3466, %v3630
        %v3759 = vadd.f32 %v3467, %v3631
        %v3760 = vadd.f32 %v3468, %v3632
        %v3761 = vadd.f32 %v3469, %v3633
        %v3762 = vadd.f32 %v3470, %v3634
        %v3763 = vadd.f32 %v3471, %v3635
        %v3764 = vadd.f32 %v3472, %v3636
        %v3765 = vadd.f32 %v3473, %v3637
        %v3766 = vadd.f32 %v3474, %v3638
        %v3767 = vadd.f32 %v3475, %v3639
        %v3768 = vadd.f32 %v3476, %v3640
        %v3769 = vadd.f32 %v3477, %v3641
        %v3770 = vadd.f32 %v3478, %v3642
        %v3771 = vadd.f32 %v3479, %v3643
        %v3772 = vadd.f32 %v3480, %v3644
        %v3773 = vadd.f32 %v3481, %v3645
        %v3774 = vadd.f32 %v3482, %v3646
        %v3775 = vadd.f32 %v3483, %v3647
        %v3776 = vadd.f32 %v3484, %v3648
        %v3777 = vadd.f32 %v3485, %v3649
        %v3778 = vadd.f32 %v3486, %v3650
        %v3779 = vadd.f32 %v3487, %v3651
        %v3780 = vadd.f32 %v3488, %v3652
        %v3781 = vadd.f32 %v3489, %v3653
        %v3782 = vadd.f32 %v3490, %v3654
        %v3783 = vadd.f32 %v3491, %v3655
        %v3784 = vadd.f32 %v3492, %v3656
        %v3785 = vadd.f32 %v3493, %v3657
        %v3786 = vadd.f32 %v3494, %v3658
        %v3787 = vadd.f32 %v3495, %v3659
        %v3788 = vadd.f32 %v3496, %v3660
        %v3789 = vadd.f32 %v3497, %v3661
        %v3790 = vadd.f32 %v3498, %v3662
        %v3791 = vadd.f32 %v3499, %v3663
        %v3792 = vadd.f32 %v3500, %v3664
        %v3793 = vadd.f32 %v3501, %v3665
        %v3794 = vadd.f32 %v3502, %v3666
        %v3795 = vadd.f32 %v3503, %v3667
        %v3796 = vadd.f32 %v3504, %v3668
        %v3797 = vadd.f32 %v3505, %v3669
        %v3798 = vadd.f32 %v3506, %v3670
        %v3799 = vadd.f32 %v3507, %v3671
        %v3800 = vadd.f32 %v3508, %v3672
        %v3801 = vadd.f32 %v3509, %v3673
        %v3802 = vadd.f32 %v3510, %v3674
        %v3803 = vadd.f32 %v3511, %v3675
        %v3804 = vadd.f32 %v3512, %v3676
        %v3805 = vadd.f32 %v3513, %v3677
        %v3806 = vadd.f32 %v3514, %v3678
        %v3807 = vadd.f32 %v3515, %v3679
        %v3808 = vadd.f32 %v3516, %v3680
        %v3809 = vadd.f32 %v3517, %v3681
        %v3810 = vadd.f32 %v3518, %v3682
        %v3811 = vadd.f32 %v3519, %v3683
        %v3812 = vadd.f32 %v3520, %v3684
        %v3813 = vadd.f32 %v3521, %v3685
        %v3814 = vadd.f32 %v3522, %v3686
        %v3815 = vadd.f32 %v3523, %v3687
        %v3816 = vadd.f32 %v3524, %v3688
        %v3817 = vadd.f32 %v3525, %v3689
        %v3818 = vadd.f32 %v3526, %v3690
        %v3819 = vadd.f32 %v3527, %v3691
        %v3820 = vadd.f32 %v3528, %v3692
        %v3821 = vadd.f32 %v3529, %v3693
        %v3822 = vadd.f32 %v3530, %v3694
        %v3823 = vadd.f32 %v3531, %v3695
        %v3824 = vadd.f32 %v3532, %v3696
        %v3825 = vadd.f32 %v3533, %v3697
        %v3826 = vadd.f32 %v3534, %v3698
        %v3827 = vld [vmem:[%s2 + $0x8] sm:$0xf]
        %v3829 = vlaneseq
        %v3830 = vshrl.u32 %v3829, 7
        %v3831 = vsub.s32 0, %v3830
        %v3832 = vrot.slane %v3827, %v3831
        %v3833 = vlaneseq
        %v3834 = vshrl.u32 %v3833, 7
        %v3835 = vsub.s32 1, %v3834
        %v3836 = vrot.slane %v3827, %v3835
        %v3837 = vlaneseq
        %v3838 = vshrl.u32 %v3837, 7
        %v3839 = vsub.s32 2, %v3838
        %v3840 = vrot.slane %v3827, %v3839
        %v3841 = vlaneseq
        %v3842 = vshrl.u32 %v3841, 7
        %v3843 = vsub.s32 3, %v3842
        %v3844 = vrot.slane %v3827, %v3843
        %v3849 = vadd.f32 %v3699, %v3832
        %v3850 = vadd.f32 %v3700, %v3836
        %v3851 = vadd.f32 %v3701, %v3840
        %v3852 = vadd.f32 %v3702, %v3844
        %v3853 = vadd.f32 %v3703, %v3832
        %v3854 = vadd.f32 %v3704, %v3836
        %v3855 = vadd.f32 %v3705, %v3840
        %v3856 = vadd.f32 %v3706, %v3844
        %v3857 = vadd.f32 %v3707, %v3832
        %v3858 = vadd.f32 %v3708, %v3836
        %v3859 = vadd.f32 %v3709, %v3840
        %v3860 = vadd.f32 %v3710, %v3844
        %v3861 = vadd.f32 %v3711, %v3832
        %v3862 = vadd.f32 %v3712, %v3836
        %v3863 = vadd.f32 %v3713, %v3840
        %v3864 = vadd.f32 %v3714, %v3844
        %v3865 = vadd.f32 %v3715, %v3832
        %v3866 = vadd.f32 %v3716, %v3836
        %v3867 = vadd.f32 %v3717, %v3840
        %v3868 = vadd.f32 %v3718, %v3844
        %v3869 = vadd.f32 %v3719, %v3832
        %v3870 = vadd.f32 %v3720, %v3836
        %v3871 = vadd.f32 %v3721, %v3840
        %v3872 = vadd.f32 %v3722, %v3844
        %v3873 = vadd.f32 %v3723, %v3832
        %v3874 = vadd.f32 %v3724, %v3836
        %v3875 = vadd.f32 %v3725, %v3840
        %v3876 = vadd.f32 %v3726, %v3844
        %v3877 = vadd.f32 %v3727, %v3832
        %v3878 = vadd.f32 %v3728, %v3836
        %v3879 = vadd.f32 %v3729, %v3840
        %v3880 = vadd.f32 %v3730, %v3844
        %v3881 = vadd.f32 %v3731, %v3832
        %v3882 = vadd.f32 %v3732, %v3836
        %v3883 = vadd.f32 %v3733, %v3840
        %v3884 = vadd.f32 %v3734, %v3844
        %v3885 = vadd.f32 %v3735, %v3832
        %v3886 = vadd.f32 %v3736, %v3836
        %v3887 = vadd.f32 %v3737, %v3840
        %v3888 = vadd.f32 %v3738, %v3844
        %v3889 = vadd.f32 %v3739, %v3832
        %v3890 = vadd.f32 %v3740, %v3836
        %v3891 = vadd.f32 %v3741, %v3840
        %v3892 = vadd.f32 %v3742, %v3844
        %v3893 = vadd.f32 %v3743, %v3832
        %v3894 = vadd.f32 %v3744, %v3836
        %v3895 = vadd.f32 %v3745, %v3840
        %v3896 = vadd.f32 %v3746, %v3844
        %v3897 = vadd.f32 %v3747, %v3832
        %v3898 = vadd.f32 %v3748, %v3836
        %v3899 = vadd.f32 %v3749, %v3840
        %v3900 = vadd.f32 %v3750, %v3844
        %v3901 = vadd.f32 %v3751, %v3832
        %v3902 = vadd.f32 %v3752, %v3836
        %v3903 = vadd.f32 %v3753, %v3840
        %v3904 = vadd.f32 %v3754, %v3844
        %v3905 = vadd.f32 %v3755, %v3832
        %v3906 = vadd.f32 %v3756, %v3836
        %v3907 = vadd.f32 %v3757, %v3840
        %v3908 = vadd.f32 %v3758, %v3844
        %v3909 = vadd.f32 %v3759, %v3832
        %v3910 = vadd.f32 %v3760, %v3836
        %v3911 = vadd.f32 %v3761, %v3840
        %v3912 = vadd.f32 %v3762, %v3844
        %v3913 = vadd.f32 %v3763, %v3832
        %v3914 = vadd.f32 %v3764, %v3836
        %v3915 = vadd.f32 %v3765, %v3840
        %v3916 = vadd.f32 %v3766, %v3844
        %v3917 = vadd.f32 %v3767, %v3832
        %v3918 = vadd.f32 %v3768, %v3836
        %v3919 = vadd.f32 %v3769, %v3840
        %v3920 = vadd.f32 %v3770, %v3844
        %v3921 = vadd.f32 %v3771, %v3832
        %v3922 = vadd.f32 %v3772, %v3836
        %v3923 = vadd.f32 %v3773, %v3840
        %v3924 = vadd.f32 %v3774, %v3844
        %v3925 = vadd.f32 %v3775, %v3832
        %v3926 = vadd.f32 %v3776, %v3836
        %v3927 = vadd.f32 %v3777, %v3840
        %v3928 = vadd.f32 %v3778, %v3844
        %v3929 = vadd.f32 %v3779, %v3832
        %v3930 = vadd.f32 %v3780, %v3836
        %v3931 = vadd.f32 %v3781, %v3840
        %v3932 = vadd.f32 %v3782, %v3844
        %v3933 = vadd.f32 %v3783, %v3832
        %v3934 = vadd.f32 %v3784, %v3836
        %v3935 = vadd.f32 %v3785, %v3840
        %v3936 = vadd.f32 %v3786, %v3844
        %v3937 = vadd.f32 %v3787, %v3832
        %v3938 = vadd.f32 %v3788, %v3836
        %v3939 = vadd.f32 %v3789, %v3840
        %v3940 = vadd.f32 %v3790, %v3844
        %v3941 = vadd.f32 %v3791, %v3832
        %v3942 = vadd.f32 %v3792, %v3836
        %v3943 = vadd.f32 %v3793, %v3840
        %v3944 = vadd.f32 %v3794, %v3844
        %v3945 = vadd.f32 %v3795, %v3832
        %v3946 = vadd.f32 %v3796, %v3836
        %v3947 = vadd.f32 %v3797, %v3840
        %v3948 = vadd.f32 %v3798, %v3844
        %v3949 = vadd.f32 %v3799, %v3832
        %v3950 = vadd.f32 %v3800, %v3836
        %v3951 = vadd.f32 %v3801, %v3840
        %v3952 = vadd.f32 %v3802, %v3844
        %v3953 = vadd.f32 %v3803, %v3832
        %v3954 = vadd.f32 %v3804, %v3836
        %v3955 = vadd.f32 %v3805, %v3840
        %v3956 = vadd.f32 %v3806, %v3844
        %v3957 = vadd.f32 %v3807, %v3832
        %v3958 = vadd.f32 %v3808, %v3836
        %v3959 = vadd.f32 %v3809, %v3840
        %v3960 = vadd.f32 %v3810, %v3844
        %v3961 = vadd.f32 %v3811, %v3832
        %v3962 = vadd.f32 %v3812, %v3836
        %v3963 = vadd.f32 %v3813, %v3840
        %v3964 = vadd.f32 %v3814, %v3844
        %v3965 = vadd.f32 %v3815, %v3832
        %v3966 = vadd.f32 %v3816, %v3836
        %v3967 = vadd.f32 %v3817, %v3840
        %v3968 = vadd.f32 %v3818, %v3844
        %v3969 = vadd.f32 %v3819, %v3832
        %v3970 = vadd.f32 %v3820, %v3836
        %v3971 = vadd.f32 %v3821, %v3840
        %v3972 = vadd.f32 %v3822, %v3844
        %v3973 = vadd.f32 %v3823, %v3832
        %v3974 = vadd.f32 %v3824, %v3836
        %v3975 = vadd.f32 %v3825, %v3840
        %v3976 = vadd.f32 %v3826, %v3844
        %v3977 = vmax.f32 %v3849, 0.0
        %v3978 = vmax.f32 %v3850, 0.0
        %v3979 = vmax.f32 %v3851, 0.0
        %v3980 = vmax.f32 %v3852, 0.0
        %v3981 = vmax.f32 %v3853, 0.0
        %v3982 = vmax.f32 %v3854, 0.0
        %v3983 = vmax.f32 %v3855, 0.0
        %v3984 = vmax.f32 %v3856, 0.0
        %v3985 = vmax.f32 %v3857, 0.0
        %v3986 = vmax.f32 %v3858, 0.0
        %v3987 = vmax.f32 %v3859, 0.0
        %v3988 = vmax.f32 %v3860, 0.0
        %v3989 = vmax.f32 %v3861, 0.0
        %v3990 = vmax.f32 %v3862, 0.0
        %v3991 = vmax.f32 %v3863, 0.0
        %v3992 = vmax.f32 %v3864, 0.0
        %v3993 = vmax.f32 %v3865, 0.0
        %v3994 = vmax.f32 %v3866, 0.0
        %v3995 = vmax.f32 %v3867, 0.0
        %v3996 = vmax.f32 %v3868, 0.0
        %v3997 = vmax.f32 %v3869, 0.0
        %v3998 = vmax.f32 %v3870, 0.0
        %v3999 = vmax.f32 %v3871, 0.0
        %v4000 = vmax.f32 %v3872, 0.0
        %v4001 = vmax.f32 %v3873, 0.0
        %v4002 = vmax.f32 %v3874, 0.0
        %v4003 = vmax.f32 %v3875, 0.0
        %v4004 = vmax.f32 %v3876, 0.0
        %v4005 = vmax.f32 %v3877, 0.0
        %v4006 = vmax.f32 %v3878, 0.0
        %v4007 = vmax.f32 %v3879, 0.0
        %v4008 = vmax.f32 %v3880, 0.0
        %v4009 = vmax.f32 %v3881, 0.0
        %v4010 = vmax.f32 %v3882, 0.0
        %v4011 = vmax.f32 %v3883, 0.0
        %v4012 = vmax.f32 %v3884, 0.0
        %v4013 = vmax.f32 %v3885, 0.0
        %v4014 = vmax.f32 %v3886, 0.0
        %v4015 = vmax.f32 %v3887, 0.0
        %v4016 = vmax.f32 %v3888, 0.0
        %v4017 = vmax.f32 %v3889, 0.0
        %v4018 = vmax.f32 %v3890, 0.0
        %v4019 = vmax.f32 %v3891, 0.0
        %v4020 = vmax.f32 %v3892, 0.0
        %v4021 = vmax.f32 %v3893, 0.0
        %v4022 = vmax.f32 %v3894, 0.0
        %v4023 = vmax.f32 %v3895, 0.0
        %v4024 = vmax.f32 %v3896, 0.0
        %v4025 = vmax.f32 %v3897, 0.0
        %v4026 = vmax.f32 %v3898, 0.0
        %v4027 = vmax.f32 %v3899, 0.0
        %v4028 = vmax.f32 %v3900, 0.0
        %v4029 = vmax.f32 %v3901, 0.0
        %v4030 = vmax.f32 %v3902, 0.0
        %v4031 = vmax.f32 %v3903, 0.0
        %v4032 = vmax.f32 %v3904, 0.0
        %v4033 = vmax.f32 %v3905, 0.0
        %v4034 = vmax.f32 %v3906, 0.0
        %v4035 = vmax.f32 %v3907, 0.0
        %v4036 = vmax.f32 %v3908, 0.0
        %v4037 = vmax.f32 %v3909, 0.0
        %v4038 = vmax.f32 %v3910, 0.0
        %v4039 = vmax.f32 %v3911, 0.0
        %v4040 = vmax.f32 %v3912, 0.0
        %v4041 = vmax.f32 %v3913, 0.0
        %v4042 = vmax.f32 %v3914, 0.0
        %v4043 = vmax.f32 %v3915, 0.0
        %v4044 = vmax.f32 %v3916, 0.0
        %v4045 = vmax.f32 %v3917, 0.0
        %v4046 = vmax.f32 %v3918, 0.0
        %v4047 = vmax.f32 %v3919, 0.0
        %v4048 = vmax.f32 %v3920, 0.0
        %v4049 = vmax.f32 %v3921, 0.0
        %v4050 = vmax.f32 %v3922, 0.0
        %v4051 = vmax.f32 %v3923, 0.0
        %v4052 = vmax.f32 %v3924, 0.0
        %v4053 = vmax.f32 %v3925, 0.0
        %v4054 = vmax.f32 %v3926, 0.0
        %v4055 = vmax.f32 %v3927, 0.0
        %v4056 = vmax.f32 %v3928, 0.0
        %v4057 = vmax.f32 %v3929, 0.0
        %v4058 = vmax.f32 %v3930, 0.0
        %v4059 = vmax.f32 %v3931, 0.0
        %v4060 = vmax.f32 %v3932, 0.0
        %v4061 = vmax.f32 %v3933, 0.0
        %v4062 = vmax.f32 %v3934, 0.0
        %v4063 = vmax.f32 %v3935, 0.0
        %v4064 = vmax.f32 %v3936, 0.0
        %v4065 = vmax.f32 %v3937, 0.0
        %v4066 = vmax.f32 %v3938, 0.0
        %v4067 = vmax.f32 %v3939, 0.0
        %v4068 = vmax.f32 %v3940, 0.0
        %v4069 = vmax.f32 %v3941, 0.0
        %v4070 = vmax.f32 %v3942, 0.0
        %v4071 = vmax.f32 %v3943, 0.0
        %v4072 = vmax.f32 %v3944, 0.0
        %v4073 = vmax.f32 %v3945, 0.0
        %v4074 = vmax.f32 %v3946, 0.0
        %v4075 = vmax.f32 %v3947, 0.0
        %v4076 = vmax.f32 %v3948, 0.0
        %v4077 = vmax.f32 %v3949, 0.0
        %v4078 = vmax.f32 %v3950, 0.0
        %v4079 = vmax.f32 %v3951, 0.0
        %v4080 = vmax.f32 %v3952, 0.0
        %v4081 = vmax.f32 %v3953, 0.0
        %v4082 = vmax.f32 %v3954, 0.0
        %v4083 = vmax.f32 %v3955, 0.0
        %v4084 = vmax.f32 %v3956, 0.0
        %v4085 = vmax.f32 %v3957, 0.0
        %v4086 = vmax.f32 %v3958, 0.0
        %v4087 = vmax.f32 %v3959, 0.0
        %v4088 = vmax.f32 %v3960, 0.0
        %v4089 = vmax.f32 %v3961, 0.0
        %v4090 = vmax.f32 %v3962, 0.0
        %v4091 = vmax.f32 %v3963, 0.0
        %v4092 = vmax.f32 %v3964, 0.0
        %v4093 = vmax.f32 %v3965, 0.0
        %v4094 = vmax.f32 %v3966, 0.0
        %v4095 = vmax.f32 %v3967, 0.0
        %v4096 = vmax.f32 %v3968, 0.0
        %v4097 = vmax.f32 %v3969, 0.0
        %v4098 = vmax.f32 %v3970, 0.0
        %v4099 = vmax.f32 %v3971, 0.0
        %v4100 = vmax.f32 %v3972, 0.0
        %v4101 = vmax.f32 %v3973, 0.0
        %v4102 = vmax.f32 %v3974, 0.0
        %v4103 = vmax.f32 %v3975, 0.0
        %v4104 = vmax.f32 %v3976, 0.0
        %v4105 = vld [vmem:[#allocation2 + $0x8] sm:$0xf]
        %v4106 = vadd.f32 %v3977, %v3981
        %v4107 = vadd.f32 %v4106, %v3985
        %v4108 = vadd.f32 %v4107, %v3989
        %v4109 = vadd.f32 %v4108, %v3993
        %v4110 = vadd.f32 %v4109, %v3997
        %v4111 = vadd.f32 %v4110, %v4001
        %v4112 = vadd.f32 %v4111, %v4005
        %v4113 = vadd.f32 %v4112, %v4009
        %v4114 = vadd.f32 %v4113, %v4013
        %v4115 = vadd.f32 %v4114, %v4017
        %v4116 = vadd.f32 %v4115, %v4021
        %v4117 = vadd.f32 %v4116, %v4025
        %v4118 = vadd.f32 %v4117, %v4029
        %v4119 = vadd.f32 %v4118, %v4033
        %v4120 = vadd.f32 %v4119, %v4037
        %v4121 = vadd.f32 %v4120, %v4041
        %v4122 = vadd.f32 %v4121, %v4045
        %v4123 = vadd.f32 %v4122, %v4049
        %v4124 = vadd.f32 %v4123, %v4053
        %v4125 = vadd.f32 %v4124, %v4057
        %v4126 = vadd.f32 %v4125, %v4061
        %v4127 = vadd.f32 %v4126, %v4065
        %v4128 = vadd.f32 %v4127, %v4069
        %v4129 = vadd.f32 %v4128, %v4073
        %v4130 = vadd.f32 %v4129, %v4077
        %v4131 = vadd.f32 %v4130, %v4081
        %v4132 = vadd.f32 %v4131, %v4085
        %v4133 = vadd.f32 %v4132, %v4089
        %v4134 = vadd.f32 %v4133, %v4093
        %v4135 = vadd.f32 %v4134, %v4097
        %v4136 = vadd.f32 %v4135, %v4101
        %v4137 = vrot.slane %v4136, 4
        %v4138 = vadd.f32 %v4136, %v4137
        %v4139 = vrot.slane %v4138, 2
        %v4140 = vadd.f32 %v4138, %v4139
        %v4141 = vrot.slane %v4140, 1
        %v4142 = vadd.f32 %v4140, %v4141
        %v4143 = vadd.f32 %v3978, %v3982
        %v4144 = vadd.f32 %v4143, %v3986
        %v4145 = vadd.f32 %v4144, %v3990
        %v4146 = vadd.f32 %v4145, %v3994
        %v4147 = vadd.f32 %v4146, %v3998
        %v4148 = vadd.f32 %v4147, %v4002
        %v4149 = vadd.f32 %v4148, %v4006
        %v4150 = vadd.f32 %v4149, %v4010
        %v4151 = vadd.f32 %v4150, %v4014
        %v4152 = vadd.f32 %v4151, %v4018
        %v4153 = vadd.f32 %v4152, %v4022
        %v4154 = vadd.f32 %v4153, %v4026
        %v4155 = vadd.f32 %v4154, %v4030
        %v4156 = vadd.f32 %v4155, %v4034
        %v4157 = vadd.f32 %v4156, %v4038
        %v4158 = vadd.f32 %v4157, %v4042
        %v4159 = vadd.f32 %v4158, %v4046
        %v4160 = vadd.f32 %v4159, %v4050
        %v4161 = vadd.f32 %v4160, %v4054
        %v4162 = vadd.f32 %v4161, %v4058
        %v4163 = vadd.f32 %v4162, %v4062
        %v4164 = vadd.f32 %v4163, %v4066
        %v4165 = vadd.f32 %v4164, %v4070
        %v4166 = vadd.f32 %v4165, %v4074
        %v4167 = vadd.f32 %v4166, %v4078
        %v4168 = vadd.f32 %v4167, %v4082
        %v4169 = vadd.f32 %v4168, %v4086
        %v4170 = vadd.f32 %v4169, %v4090
        %v4171 = vadd.f32 %v4170, %v4094
        %v4172 = vadd.f32 %v4171, %v4098
        %v4173 = vadd.f32 %v4172, %v4102
        %v4174 = vrot.slane %v4173, 4
        %v4175 = vadd.f32 %v4173, %v4174
        %v4176 = vrot.slane %v4175, 2
        %v4177 = vadd.f32 %v4175, %v4176
        %v4178 = vrot.slane %v4177, 1
        %v4179 = vadd.f32 %v4177, %v4178
        %v4180 = vadd.f32 %v3979, %v3983
        %v4181 = vadd.f32 %v4180, %v3987
        %v4182 = vadd.f32 %v4181, %v3991
        %v4183 = vadd.f32 %v4182, %v3995
        %v4184 = vadd.f32 %v4183, %v3999
        %v4185 = vadd.f32 %v4184, %v4003
        %v4186 = vadd.f32 %v4185, %v4007
        %v4187 = vadd.f32 %v4186, %v4011
        %v4188 = vadd.f32 %v4187, %v4015
        %v4189 = vadd.f32 %v4188, %v4019
        %v4190 = vadd.f32 %v4189, %v4023
        %v4191 = vadd.f32 %v4190, %v4027
        %v4192 = vadd.f32 %v4191, %v4031
        %v4193 = vadd.f32 %v4192, %v4035
        %v4194 = vadd.f32 %v4193, %v4039
        %v4195 = vadd.f32 %v4194, %v4043
        %v4196 = vadd.f32 %v4195, %v4047
        %v4197 = vadd.f32 %v4196, %v4051
        %v4198 = vadd.f32 %v4197, %v4055
        %v4199 = vadd.f32 %v4198, %v4059
        %v4200 = vadd.f32 %v4199, %v4063
        %v4201 = vadd.f32 %v4200, %v4067
        %v4202 = vadd.f32 %v4201, %v4071
        %v4203 = vadd.f32 %v4202, %v4075
        %v4204 = vadd.f32 %v4203, %v4079
        %v4205 = vadd.f32 %v4204, %v4083
        %v4206 = vadd.f32 %v4205, %v4087
        %v4207 = vadd.f32 %v4206, %v4091
        %v4208 = vadd.f32 %v4207, %v4095
        %v4209 = vadd.f32 %v4208, %v4099
        %v4210 = vadd.f32 %v4209, %v4103
        %v4211 = vrot.slane %v4210, 4
        %v4212 = vadd.f32 %v4210, %v4211
        %v4213 = vrot.slane %v4212, 2
        %v4214 = vadd.f32 %v4212, %v4213
        %v4215 = vrot.slane %v4214, 1
        %v4216 = vadd.f32 %v4214, %v4215
        %v4217 = vadd.f32 %v3980, %v3984
        %v4218 = vadd.f32 %v4217, %v3988
        %v4219 = vadd.f32 %v4218, %v3992
        %v4220 = vadd.f32 %v4219, %v3996
        %v4221 = vadd.f32 %v4220, %v4000
        %v4222 = vadd.f32 %v4221, %v4004
        %v4223 = vadd.f32 %v4222, %v4008
        %v4224 = vadd.f32 %v4223, %v4012
        %v4225 = vadd.f32 %v4224, %v4016
        %v4226 = vadd.f32 %v4225, %v4020
        %v4227 = vadd.f32 %v4226, %v4024
        %v4228 = vadd.f32 %v4227, %v4028
        %v4229 = vadd.f32 %v4228, %v4032
        %v4230 = vadd.f32 %v4229, %v4036
        %v4231 = vadd.f32 %v4230, %v4040
        %v4232 = vadd.f32 %v4231, %v4044
        %v4233 = vadd.f32 %v4232, %v4048
        %v4234 = vadd.f32 %v4233, %v4052
        %v4235 = vadd.f32 %v4234, %v4056
        %v4236 = vadd.f32 %v4235, %v4060
        %v4237 = vadd.f32 %v4236, %v4064
        %v4238 = vadd.f32 %v4237, %v4068
        %v4239 = vadd.f32 %v4238, %v4072
        %v4240 = vadd.f32 %v4239, %v4076
        %v4241 = vadd.f32 %v4240, %v4080
        %v4242 = vadd.f32 %v4241, %v4084
        %v4243 = vadd.f32 %v4242, %v4088
        %v4244 = vadd.f32 %v4243, %v4092
        %v4245 = vadd.f32 %v4244, %v4096
        %v4246 = vadd.f32 %v4245, %v4100
        %v4247 = vadd.f32 %v4246, %v4104
        %v4248 = vrot.slane %v4247, 4
        %v4249 = vadd.f32 %v4247, %v4248
        %v4250 = vrot.slane %v4249, 2
        %v4251 = vadd.f32 %v4249, %v4250
        %v4252 = vrot.slane %v4251, 1
        %v4253 = vadd.f32 %v4251, %v4252
        %v4258 = vcombine.low %v4142, %v4179
        %v4259 = vcombine.low %v4216, %v4253
        %v4261 = vunpack.c.l.s4 1966171168
        %v4262 = vunpack.c.0.s8 %v4261
        %v4263 = vlaneseq
        %v4264 = vshrl.u32 %v4263, 7
        %v4265 = vsub.s32 %v4262, %v4264
        %v4266 = vrot.slane %v4258, %v4265
        %v4268 = vunpack.c.l.s4 1966171168
        %v4269 = vunpack.c.0.s8 %v4268
        %v4270 = vlaneseq
        %v4271 = vshrl.u32 %v4270, 7
        %v4272 = vsub.s32 %v4269, %v4271
        %v4273 = vrot.slane %v4259, %v4272
        %v4274 = vcombine.low %v4266, %v4273
        %v4276 = vunpack.c.l.s4 1966171168
        %v4277 = vunpack.c.0.s8 %v4276
        %v4278 = vlaneseq
        %v4279 = vshrl.u32 %v4278, 7
        %v4280 = vsub.s32 %v4277, %v4279
        %v4281 = vrot.slane %v4274, %v4280
        %v4283 = vadd.f32 %v4105, %v4281
        %4284 = vst.msk [vmem:[#allocation2 + $0x8] sm:$0xf] %vm1863, %v4283
        %v4285 = vld [vmem:[%s1 + $0x30] sm:$0x77]
        %v4286 = vld [vmem:[%s1 + $0x38] sm:$0x77]
        %v4289 = vlaneseq
        %v4290 = vshrl.u32 %v4289, 7
        %v4291 = vsub.s32 0, %v4290
        %v4292 = vrot.slane %v4285, %v4291
        %v4293 = vlaneseq
        %v4294 = vshrl.u32 %v4293, 7
        %v4295 = vsub.s32 4, %v4294
        %v4296 = vrot.slane %v4285, %v4295
        %v4297 = vlaneseq
        %v4298 = vshrl.u32 %v4297, 7
        %v4299 = vsub.s32 0, %v4298
        %v4300 = vrot.slane %v4286, %v4299
        %v4301 = vlaneseq
        %v4302 = vshrl.u32 %v4301, 7
        %v4303 = vsub.s32 4, %v4302
        %v4304 = vrot.slane %v4286, %v4303
        %v4309 = vlaneseq
        %v4310 = vshrl.u32 %v4309, 7
        %v4311 = vsub.s32 0, %v4310
        %v4312 = vrot.slane %v4292, %v4311
        %v4313 = vlaneseq
        %v4314 = vshrl.u32 %v4313, 7
        %v4315 = vsub.s32 0, %v4314
        %v4316 = vrot.slane %v4296, %v4315
        %v4317 = vlaneseq
        %v4318 = vshrl.u32 %v4317, 7
        %v4319 = vsub.s32 0, %v4318
        %v4320 = vrot.slane %v4300, %v4319
        %v4321 = vlaneseq
        %v4322 = vshrl.u32 %v4321, 7
        %v4323 = vsub.s32 0, %v4322
        %v4324 = vrot.slane %v4304, %v4323
        %v4325 = vmul.f32 %v240, %v4312
        %v4326 = vmul.f32 %v240, %v4316
        %v4327 = vmul.f32 %v240, %v4320
        %v4328 = vmul.f32 %v240, %v4324
        %v4329 = vmul.f32 %v245, %v4312
        %v4330 = vmul.f32 %v245, %v4316
        %v4331 = vmul.f32 %v245, %v4320
        %v4332 = vmul.f32 %v245, %v4324
        %v4333 = vmul.f32 %v250, %v4312
        %v4334 = vmul.f32 %v250, %v4316
        %v4335 = vmul.f32 %v250, %v4320
        %v4336 = vmul.f32 %v250, %v4324
        %v4337 = vmul.f32 %v255, %v4312
        %v4338 = vmul.f32 %v255, %v4316
        %v4339 = vmul.f32 %v255, %v4320
        %v4340 = vmul.f32 %v255, %v4324
        %v4341 = vmul.f32 %v260, %v4312
        %v4342 = vmul.f32 %v260, %v4316
        %v4343 = vmul.f32 %v260, %v4320
        %v4344 = vmul.f32 %v260, %v4324
        %v4345 = vmul.f32 %v265, %v4312
        %v4346 = vmul.f32 %v265, %v4316
        %v4347 = vmul.f32 %v265, %v4320
        %v4348 = vmul.f32 %v265, %v4324
        %v4349 = vmul.f32 %v270, %v4312
        %v4350 = vmul.f32 %v270, %v4316
        %v4351 = vmul.f32 %v270, %v4320
        %v4352 = vmul.f32 %v270, %v4324
        %v4353 = vmul.f32 %v275, %v4312
        %v4354 = vmul.f32 %v275, %v4316
        %v4355 = vmul.f32 %v275, %v4320
        %v4356 = vmul.f32 %v275, %v4324
        %v4357 = vmul.f32 %v280, %v4312
        %v4358 = vmul.f32 %v280, %v4316
        %v4359 = vmul.f32 %v280, %v4320
        %v4360 = vmul.f32 %v280, %v4324
        %v4361 = vmul.f32 %v285, %v4312
        %v4362 = vmul.f32 %v285, %v4316
        %v4363 = vmul.f32 %v285, %v4320
        %v4364 = vmul.f32 %v285, %v4324
        %v4365 = vmul.f32 %v290, %v4312
        %v4366 = vmul.f32 %v290, %v4316
        %v4367 = vmul.f32 %v290, %v4320
        %v4368 = vmul.f32 %v290, %v4324
        %v4369 = vmul.f32 %v295, %v4312
        %v4370 = vmul.f32 %v295, %v4316
        %v4371 = vmul.f32 %v295, %v4320
        %v4372 = vmul.f32 %v295, %v4324
        %v4373 = vmul.f32 %v300, %v4312
        %v4374 = vmul.f32 %v300, %v4316
        %v4375 = vmul.f32 %v300, %v4320
        %v4376 = vmul.f32 %v300, %v4324
        %v4377 = vmul.f32 %v305, %v4312
        %v4378 = vmul.f32 %v305, %v4316
        %v4379 = vmul.f32 %v305, %v4320
        %v4380 = vmul.f32 %v305, %v4324
        %v4381 = vmul.f32 %v310, %v4312
        %v4382 = vmul.f32 %v310, %v4316
        %v4383 = vmul.f32 %v310, %v4320
        %v4384 = vmul.f32 %v310, %v4324
        %v4385 = vmul.f32 %v315, %v4312
        %v4386 = vmul.f32 %v315, %v4316
        %v4387 = vmul.f32 %v315, %v4320
        %v4388 = vmul.f32 %v315, %v4324
        %v4389 = vmul.f32 %v320, %v4312
        %v4390 = vmul.f32 %v320, %v4316
        %v4391 = vmul.f32 %v320, %v4320
        %v4392 = vmul.f32 %v320, %v4324
        %v4393 = vmul.f32 %v325, %v4312
        %v4394 = vmul.f32 %v325, %v4316
        %v4395 = vmul.f32 %v325, %v4320
        %v4396 = vmul.f32 %v325, %v4324
        %v4397 = vmul.f32 %v330, %v4312
        %v4398 = vmul.f32 %v330, %v4316
        %v4399 = vmul.f32 %v330, %v4320
        %v4400 = vmul.f32 %v330, %v4324
        %v4401 = vmul.f32 %v335, %v4312
        %v4402 = vmul.f32 %v335, %v4316
        %v4403 = vmul.f32 %v335, %v4320
        %v4404 = vmul.f32 %v335, %v4324
        %v4405 = vmul.f32 %v340, %v4312
        %v4406 = vmul.f32 %v340, %v4316
        %v4407 = vmul.f32 %v340, %v4320
        %v4408 = vmul.f32 %v340, %v4324
        %v4409 = vmul.f32 %v345, %v4312
        %v4410 = vmul.f32 %v345, %v4316
        %v4411 = vmul.f32 %v345, %v4320
        %v4412 = vmul.f32 %v345, %v4324
        %v4413 = vmul.f32 %v350, %v4312
        %v4414 = vmul.f32 %v350, %v4316
        %v4415 = vmul.f32 %v350, %v4320
        %v4416 = vmul.f32 %v350, %v4324
        %v4417 = vmul.f32 %v355, %v4312
        %v4418 = vmul.f32 %v355, %v4316
        %v4419 = vmul.f32 %v355, %v4320
        %v4420 = vmul.f32 %v355, %v4324
        %v4421 = vmul.f32 %v360, %v4312
        %v4422 = vmul.f32 %v360, %v4316
        %v4423 = vmul.f32 %v360, %v4320
        %v4424 = vmul.f32 %v360, %v4324
        %v4425 = vmul.f32 %v365, %v4312
        %v4426 = vmul.f32 %v365, %v4316
        %v4427 = vmul.f32 %v365, %v4320
        %v4428 = vmul.f32 %v365, %v4324
        %v4429 = vmul.f32 %v370, %v4312
        %v4430 = vmul.f32 %v370, %v4316
        %v4431 = vmul.f32 %v370, %v4320
        %v4432 = vmul.f32 %v370, %v4324
        %v4433 = vmul.f32 %v375, %v4312
        %v4434 = vmul.f32 %v375, %v4316
        %v4435 = vmul.f32 %v375, %v4320
        %v4436 = vmul.f32 %v375, %v4324
        %v4437 = vmul.f32 %v380, %v4312
        %v4438 = vmul.f32 %v380, %v4316
        %v4439 = vmul.f32 %v380, %v4320
        %v4440 = vmul.f32 %v380, %v4324
        %v4441 = vmul.f32 %v385, %v4312
        %v4442 = vmul.f32 %v385, %v4316
        %v4443 = vmul.f32 %v385, %v4320
        %v4444 = vmul.f32 %v385, %v4324
        %v4445 = vmul.f32 %v390, %v4312
        %v4446 = vmul.f32 %v390, %v4316
        %v4447 = vmul.f32 %v390, %v4320
        %v4448 = vmul.f32 %v390, %v4324
        %v4449 = vmul.f32 %v395, %v4312
        %v4450 = vmul.f32 %v395, %v4316
        %v4451 = vmul.f32 %v395, %v4320
        %v4452 = vmul.f32 %v395, %v4324
        %v4453 = vlaneseq
        %v4454 = vshrl.u32 %v4453, 7
        %v4455 = vsub.s32 1, %v4454
        %v4456 = vrot.slane %v4285, %v4455
        %v4457 = vlaneseq
        %v4458 = vshrl.u32 %v4457, 7
        %v4459 = vsub.s32 5, %v4458
        %v4460 = vrot.slane %v4285, %v4459
        %v4461 = vlaneseq
        %v4462 = vshrl.u32 %v4461, 7
        %v4463 = vsub.s32 1, %v4462
        %v4464 = vrot.slane %v4286, %v4463
        %v4465 = vlaneseq
        %v4466 = vshrl.u32 %v4465, 7
        %v4467 = vsub.s32 5, %v4466
        %v4468 = vrot.slane %v4286, %v4467
        %v4473 = vlaneseq
        %v4474 = vshrl.u32 %v4473, 7
        %v4475 = vsub.s32 1, %v4474
        %v4476 = vrot.slane %v4456, %v4475
        %v4477 = vlaneseq
        %v4478 = vshrl.u32 %v4477, 7
        %v4479 = vsub.s32 1, %v4478
        %v4480 = vrot.slane %v4460, %v4479
        %v4481 = vlaneseq
        %v4482 = vshrl.u32 %v4481, 7
        %v4483 = vsub.s32 1, %v4482
        %v4484 = vrot.slane %v4464, %v4483
        %v4485 = vlaneseq
        %v4486 = vshrl.u32 %v4485, 7
        %v4487 = vsub.s32 1, %v4486
        %v4488 = vrot.slane %v4468, %v4487
        %v4489 = vmul.f32 %v565, %v4476
        %v4490 = vmul.f32 %v565, %v4480
        %v4491 = vmul.f32 %v565, %v4484
        %v4492 = vmul.f32 %v565, %v4488
        %v4493 = vmul.f32 %v569, %v4476
        %v4494 = vmul.f32 %v569, %v4480
        %v4495 = vmul.f32 %v569, %v4484
        %v4496 = vmul.f32 %v569, %v4488
        %v4497 = vmul.f32 %v573, %v4476
        %v4498 = vmul.f32 %v573, %v4480
        %v4499 = vmul.f32 %v573, %v4484
        %v4500 = vmul.f32 %v573, %v4488
        %v4501 = vmul.f32 %v577, %v4476
        %v4502 = vmul.f32 %v577, %v4480
        %v4503 = vmul.f32 %v577, %v4484
        %v4504 = vmul.f32 %v577, %v4488
        %v4505 = vmul.f32 %v581, %v4476
        %v4506 = vmul.f32 %v581, %v4480
        %v4507 = vmul.f32 %v581, %v4484
        %v4508 = vmul.f32 %v581, %v4488
        %v4509 = vmul.f32 %v585, %v4476
        %v4510 = vmul.f32 %v585, %v4480
        %v4511 = vmul.f32 %v585, %v4484
        %v4512 = vmul.f32 %v585, %v4488
        %v4513 = vmul.f32 %v589, %v4476
        %v4514 = vmul.f32 %v589, %v4480
        %v4515 = vmul.f32 %v589, %v4484
        %v4516 = vmul.f32 %v589, %v4488
        %v4517 = vmul.f32 %v593, %v4476
        %v4518 = vmul.f32 %v593, %v4480
        %v4519 = vmul.f32 %v593, %v4484
        %v4520 = vmul.f32 %v593, %v4488
        %v4521 = vmul.f32 %v597, %v4476
        %v4522 = vmul.f32 %v597, %v4480
        %v4523 = vmul.f32 %v597, %v4484
        %v4524 = vmul.f32 %v597, %v4488
        %v4525 = vmul.f32 %v601, %v4476
        %v4526 = vmul.f32 %v601, %v4480
        %v4527 = vmul.f32 %v601, %v4484
        %v4528 = vmul.f32 %v601, %v4488
        %v4529 = vmul.f32 %v605, %v4476
        %v4530 = vmul.f32 %v605, %v4480
        %v4531 = vmul.f32 %v605, %v4484
        %v4532 = vmul.f32 %v605, %v4488
        %v4533 = vmul.f32 %v609, %v4476
        %v4534 = vmul.f32 %v609, %v4480
        %v4535 = vmul.f32 %v609, %v4484
        %v4536 = vmul.f32 %v609, %v4488
        %v4537 = vmul.f32 %v613, %v4476
        %v4538 = vmul.f32 %v613, %v4480
        %v4539 = vmul.f32 %v613, %v4484
        %v4540 = vmul.f32 %v613, %v4488
        %v4541 = vmul.f32 %v617, %v4476
        %v4542 = vmul.f32 %v617, %v4480
        %v4543 = vmul.f32 %v617, %v4484
        %v4544 = vmul.f32 %v617, %v4488
        %v4545 = vmul.f32 %v621, %v4476
        %v4546 = vmul.f32 %v621, %v4480
        %v4547 = vmul.f32 %v621, %v4484
        %v4548 = vmul.f32 %v621, %v4488
        %v4549 = vmul.f32 %v625, %v4476
        %v4550 = vmul.f32 %v625, %v4480
        %v4551 = vmul.f32 %v625, %v4484
        %v4552 = vmul.f32 %v625, %v4488
        %v4553 = vmul.f32 %v629, %v4476
        %v4554 = vmul.f32 %v629, %v4480
        %v4555 = vmul.f32 %v629, %v4484
        %v4556 = vmul.f32 %v629, %v4488
        %v4557 = vmul.f32 %v633, %v4476
        %v4558 = vmul.f32 %v633, %v4480
        %v4559 = vmul.f32 %v633, %v4484
        %v4560 = vmul.f32 %v633, %v4488
        %v4561 = vmul.f32 %v637, %v4476
        %v4562 = vmul.f32 %v637, %v4480
        %v4563 = vmul.f32 %v637, %v4484
        %v4564 = vmul.f32 %v637, %v4488
        %v4565 = vmul.f32 %v641, %v4476
        %v4566 = vmul.f32 %v641, %v4480
        %v4567 = vmul.f32 %v641, %v4484
        %v4568 = vmul.f32 %v641, %v4488
        %v4569 = vmul.f32 %v645, %v4476
        %v4570 = vmul.f32 %v645, %v4480
        %v4571 = vmul.f32 %v645, %v4484
        %v4572 = vmul.f32 %v645, %v4488
        %v4573 = vmul.f32 %v649, %v4476
        %v4574 = vmul.f32 %v649, %v4480
        %v4575 = vmul.f32 %v649, %v4484
        %v4576 = vmul.f32 %v649, %v4488
        %v4577 = vmul.f32 %v653, %v4476
        %v4578 = vmul.f32 %v653, %v4480
        %v4579 = vmul.f32 %v653, %v4484
        %v4580 = vmul.f32 %v653, %v4488
        %v4581 = vmul.f32 %v657, %v4476
        %v4582 = vmul.f32 %v657, %v4480
        %v4583 = vmul.f32 %v657, %v4484
        %v4584 = vmul.f32 %v657, %v4488
        %v4585 = vmul.f32 %v661, %v4476
        %v4586 = vmul.f32 %v661, %v4480
        %v4587 = vmul.f32 %v661, %v4484
        %v4588 = vmul.f32 %v661, %v4488
        %v4589 = vmul.f32 %v665, %v4476
        %v4590 = vmul.f32 %v665, %v4480
        %v4591 = vmul.f32 %v665, %v4484
        %v4592 = vmul.f32 %v665, %v4488
        %v4593 = vmul.f32 %v669, %v4476
        %v4594 = vmul.f32 %v669, %v4480
        %v4595 = vmul.f32 %v669, %v4484
        %v4596 = vmul.f32 %v669, %v4488
        %v4597 = vmul.f32 %v673, %v4476
        %v4598 = vmul.f32 %v673, %v4480
        %v4599 = vmul.f32 %v673, %v4484
        %v4600 = vmul.f32 %v673, %v4488
        %v4601 = vmul.f32 %v677, %v4476
        %v4602 = vmul.f32 %v677, %v4480
        %v4603 = vmul.f32 %v677, %v4484
        %v4604 = vmul.f32 %v677, %v4488
        %v4605 = vmul.f32 %v681, %v4476
        %v4606 = vmul.f32 %v681, %v4480
        %v4607 = vmul.f32 %v681, %v4484
        %v4608 = vmul.f32 %v681, %v4488
        %v4609 = vmul.f32 %v685, %v4476
        %v4610 = vmul.f32 %v685, %v4480
        %v4611 = vmul.f32 %v685, %v4484
        %v4612 = vmul.f32 %v685, %v4488
        %v4613 = vmul.f32 %v689, %v4476
        %v4614 = vmul.f32 %v689, %v4480
        %v4615 = vmul.f32 %v689, %v4484
        %v4616 = vmul.f32 %v689, %v4488
        %v4617 = vadd.f32 %v4325, %v4489
        %v4618 = vadd.f32 %v4326, %v4490
        %v4619 = vadd.f32 %v4327, %v4491
        %v4620 = vadd.f32 %v4328, %v4492
        %v4621 = vadd.f32 %v4329, %v4493
        %v4622 = vadd.f32 %v4330, %v4494
        %v4623 = vadd.f32 %v4331, %v4495
        %v4624 = vadd.f32 %v4332, %v4496
        %v4625 = vadd.f32 %v4333, %v4497
        %v4626 = vadd.f32 %v4334, %v4498
        %v4627 = vadd.f32 %v4335, %v4499
        %v4628 = vadd.f32 %v4336, %v4500
        %v4629 = vadd.f32 %v4337, %v4501
        %v4630 = vadd.f32 %v4338, %v4502
        %v4631 = vadd.f32 %v4339, %v4503
        %v4632 = vadd.f32 %v4340, %v4504
        %v4633 = vadd.f32 %v4341, %v4505
        %v4634 = vadd.f32 %v4342, %v4506
        %v4635 = vadd.f32 %v4343, %v4507
        %v4636 = vadd.f32 %v4344, %v4508
        %v4637 = vadd.f32 %v4345, %v4509
        %v4638 = vadd.f32 %v4346, %v4510
        %v4639 = vadd.f32 %v4347, %v4511
        %v4640 = vadd.f32 %v4348, %v4512
        %v4641 = vadd.f32 %v4349, %v4513
        %v4642 = vadd.f32 %v4350, %v4514
        %v4643 = vadd.f32 %v4351, %v4515
        %v4644 = vadd.f32 %v4352, %v4516
        %v4645 = vadd.f32 %v4353, %v4517
        %v4646 = vadd.f32 %v4354, %v4518
        %v4647 = vadd.f32 %v4355, %v4519
        %v4648 = vadd.f32 %v4356, %v4520
        %v4649 = vadd.f32 %v4357, %v4521
        %v4650 = vadd.f32 %v4358, %v4522
        %v4651 = vadd.f32 %v4359, %v4523
        %v4652 = vadd.f32 %v4360, %v4524
        %v4653 = vadd.f32 %v4361, %v4525
        %v4654 = vadd.f32 %v4362, %v4526
        %v4655 = vadd.f32 %v4363, %v4527
        %v4656 = vadd.f32 %v4364, %v4528
        %v4657 = vadd.f32 %v4365, %v4529
        %v4658 = vadd.f32 %v4366, %v4530
        %v4659 = vadd.f32 %v4367, %v4531
        %v4660 = vadd.f32 %v4368, %v4532
        %v4661 = vadd.f32 %v4369, %v4533
        %v4662 = vadd.f32 %v4370, %v4534
        %v4663 = vadd.f32 %v4371, %v4535
        %v4664 = vadd.f32 %v4372, %v4536
        %v4665 = vadd.f32 %v4373, %v4537
        %v4666 = vadd.f32 %v4374, %v4538
        %v4667 = vadd.f32 %v4375, %v4539
        %v4668 = vadd.f32 %v4376, %v4540
        %v4669 = vadd.f32 %v4377, %v4541
        %v4670 = vadd.f32 %v4378, %v4542
        %v4671 = vadd.f32 %v4379, %v4543
        %v4672 = vadd.f32 %v4380, %v4544
        %v4673 = vadd.f32 %v4381, %v4545
        %v4674 = vadd.f32 %v4382, %v4546
        %v4675 = vadd.f32 %v4383, %v4547
        %v4676 = vadd.f32 %v4384, %v4548
        %v4677 = vadd.f32 %v4385, %v4549
        %v4678 = vadd.f32 %v4386, %v4550
        %v4679 = vadd.f32 %v4387, %v4551
        %v4680 = vadd.f32 %v4388, %v4552
        %v4681 = vadd.f32 %v4389, %v4553
        %v4682 = vadd.f32 %v4390, %v4554
        %v4683 = vadd.f32 %v4391, %v4555
        %v4684 = vadd.f32 %v4392, %v4556
        %v4685 = vadd.f32 %v4393, %v4557
        %v4686 = vadd.f32 %v4394, %v4558
        %v4687 = vadd.f32 %v4395, %v4559
        %v4688 = vadd.f32 %v4396, %v4560
        %v4689 = vadd.f32 %v4397, %v4561
        %v4690 = vadd.f32 %v4398, %v4562
        %v4691 = vadd.f32 %v4399, %v4563
        %v4692 = vadd.f32 %v4400, %v4564
        %v4693 = vadd.f32 %v4401, %v4565
        %v4694 = vadd.f32 %v4402, %v4566
        %v4695 = vadd.f32 %v4403, %v4567
        %v4696 = vadd.f32 %v4404, %v4568
        %v4697 = vadd.f32 %v4405, %v4569
        %v4698 = vadd.f32 %v4406, %v4570
        %v4699 = vadd.f32 %v4407, %v4571
        %v4700 = vadd.f32 %v4408, %v4572
        %v4701 = vadd.f32 %v4409, %v4573
        %v4702 = vadd.f32 %v4410, %v4574
        %v4703 = vadd.f32 %v4411, %v4575
        %v4704 = vadd.f32 %v4412, %v4576
        %v4705 = vadd.f32 %v4413, %v4577
        %v4706 = vadd.f32 %v4414, %v4578
        %v4707 = vadd.f32 %v4415, %v4579
        %v4708 = vadd.f32 %v4416, %v4580
        %v4709 = vadd.f32 %v4417, %v4581
        %v4710 = vadd.f32 %v4418, %v4582
        %v4711 = vadd.f32 %v4419, %v4583
        %v4712 = vadd.f32 %v4420, %v4584
        %v4713 = vadd.f32 %v4421, %v4585
        %v4714 = vadd.f32 %v4422, %v4586
        %v4715 = vadd.f32 %v4423, %v4587
        %v4716 = vadd.f32 %v4424, %v4588
        %v4717 = vadd.f32 %v4425, %v4589
        %v4718 = vadd.f32 %v4426, %v4590
        %v4719 = vadd.f32 %v4427, %v4591
        %v4720 = vadd.f32 %v4428, %v4592
        %v4721 = vadd.f32 %v4429, %v4593
        %v4722 = vadd.f32 %v4430, %v4594
        %v4723 = vadd.f32 %v4431, %v4595
        %v4724 = vadd.f32 %v4432, %v4596
        %v4725 = vadd.f32 %v4433, %v4597
        %v4726 = vadd.f32 %v4434, %v4598
        %v4727 = vadd.f32 %v4435, %v4599
        %v4728 = vadd.f32 %v4436, %v4600
        %v4729 = vadd.f32 %v4437, %v4601
        %v4730 = vadd.f32 %v4438, %v4602
        %v4731 = vadd.f32 %v4439, %v4603
        %v4732 = vadd.f32 %v4440, %v4604
        %v4733 = vadd.f32 %v4441, %v4605
        %v4734 = vadd.f32 %v4442, %v4606
        %v4735 = vadd.f32 %v4443, %v4607
        %v4736 = vadd.f32 %v4444, %v4608
        %v4737 = vadd.f32 %v4445, %v4609
        %v4738 = vadd.f32 %v4446, %v4610
        %v4739 = vadd.f32 %v4447, %v4611
        %v4740 = vadd.f32 %v4448, %v4612
        %v4741 = vadd.f32 %v4449, %v4613
        %v4742 = vadd.f32 %v4450, %v4614
        %v4743 = vadd.f32 %v4451, %v4615
        %v4744 = vadd.f32 %v4452, %v4616
        %v4745 = vlaneseq
        %v4746 = vshrl.u32 %v4745, 7
        %v4747 = vsub.s32 2, %v4746
        %v4748 = vrot.slane %v4285, %v4747
        %v4749 = vlaneseq
        %v4750 = vshrl.u32 %v4749, 7
        %v4751 = vsub.s32 6, %v4750
        %v4752 = vrot.slane %v4285, %v4751
        %v4753 = vlaneseq
        %v4754 = vshrl.u32 %v4753, 7
        %v4755 = vsub.s32 2, %v4754
        %v4756 = vrot.slane %v4286, %v4755
        %v4757 = vlaneseq
        %v4758 = vshrl.u32 %v4757, 7
        %v4759 = vsub.s32 6, %v4758
        %v4760 = vrot.slane %v4286, %v4759
        %v4765 = vlaneseq
        %v4766 = vshrl.u32 %v4765, 7
        %v4767 = vsub.s32 2, %v4766
        %v4768 = vrot.slane %v4748, %v4767
        %v4769 = vlaneseq
        %v4770 = vshrl.u32 %v4769, 7
        %v4771 = vsub.s32 2, %v4770
        %v4772 = vrot.slane %v4752, %v4771
        %v4773 = vlaneseq
        %v4774 = vshrl.u32 %v4773, 7
        %v4775 = vsub.s32 2, %v4774
        %v4776 = vrot.slane %v4756, %v4775
        %v4777 = vlaneseq
        %v4778 = vshrl.u32 %v4777, 7
        %v4779 = vsub.s32 2, %v4778
        %v4780 = vrot.slane %v4760, %v4779
        %v4781 = vmul.f32 %v985, %v4768
        %v4782 = vmul.f32 %v985, %v4772
        %v4783 = vmul.f32 %v985, %v4776
        %v4784 = vmul.f32 %v985, %v4780
        %v4785 = vmul.f32 %v989, %v4768
        %v4786 = vmul.f32 %v989, %v4772
        %v4787 = vmul.f32 %v989, %v4776
        %v4788 = vmul.f32 %v989, %v4780
        %v4789 = vmul.f32 %v993, %v4768
        %v4790 = vmul.f32 %v993, %v4772
        %v4791 = vmul.f32 %v993, %v4776
        %v4792 = vmul.f32 %v993, %v4780
        %v4793 = vmul.f32 %v997, %v4768
        %v4794 = vmul.f32 %v997, %v4772
        %v4795 = vmul.f32 %v997, %v4776
        %v4796 = vmul.f32 %v997, %v4780
        %v4797 = vmul.f32 %v1001, %v4768
        %v4798 = vmul.f32 %v1001, %v4772
        %v4799 = vmul.f32 %v1001, %v4776
        %v4800 = vmul.f32 %v1001, %v4780
        %v4801 = vmul.f32 %v1005, %v4768
        %v4802 = vmul.f32 %v1005, %v4772
        %v4803 = vmul.f32 %v1005, %v4776
        %v4804 = vmul.f32 %v1005, %v4780
        %v4805 = vmul.f32 %v1009, %v4768
        %v4806 = vmul.f32 %v1009, %v4772
        %v4807 = vmul.f32 %v1009, %v4776
        %v4808 = vmul.f32 %v1009, %v4780
        %v4809 = vmul.f32 %v1013, %v4768
        %v4810 = vmul.f32 %v1013, %v4772
        %v4811 = vmul.f32 %v1013, %v4776
        %v4812 = vmul.f32 %v1013, %v4780
        %v4813 = vmul.f32 %v1017, %v4768
        %v4814 = vmul.f32 %v1017, %v4772
        %v4815 = vmul.f32 %v1017, %v4776
        %v4816 = vmul.f32 %v1017, %v4780
        %v4817 = vmul.f32 %v1021, %v4768
        %v4818 = vmul.f32 %v1021, %v4772
        %v4819 = vmul.f32 %v1021, %v4776
        %v4820 = vmul.f32 %v1021, %v4780
        %v4821 = vmul.f32 %v1025, %v4768
        %v4822 = vmul.f32 %v1025, %v4772
        %v4823 = vmul.f32 %v1025, %v4776
        %v4824 = vmul.f32 %v1025, %v4780
        %v4825 = vmul.f32 %v1029, %v4768
        %v4826 = vmul.f32 %v1029, %v4772
        %v4827 = vmul.f32 %v1029, %v4776
        %v4828 = vmul.f32 %v1029, %v4780
        %v4829 = vmul.f32 %v1033, %v4768
        %v4830 = vmul.f32 %v1033, %v4772
        %v4831 = vmul.f32 %v1033, %v4776
        %v4832 = vmul.f32 %v1033, %v4780
        %v4833 = vmul.f32 %v1037, %v4768
        %v4834 = vmul.f32 %v1037, %v4772
        %v4835 = vmul.f32 %v1037, %v4776
        %v4836 = vmul.f32 %v1037, %v4780
        %v4837 = vmul.f32 %v1041, %v4768
        %v4838 = vmul.f32 %v1041, %v4772
        %v4839 = vmul.f32 %v1041, %v4776
        %v4840 = vmul.f32 %v1041, %v4780
        %v4841 = vmul.f32 %v1045, %v4768
        %v4842 = vmul.f32 %v1045, %v4772
        %v4843 = vmul.f32 %v1045, %v4776
        %v4844 = vmul.f32 %v1045, %v4780
        %v4845 = vmul.f32 %v1049, %v4768
        %v4846 = vmul.f32 %v1049, %v4772
        %v4847 = vmul.f32 %v1049, %v4776
        %v4848 = vmul.f32 %v1049, %v4780
        %v4849 = vmul.f32 %v1053, %v4768
        %v4850 = vmul.f32 %v1053, %v4772
        %v4851 = vmul.f32 %v1053, %v4776
        %v4852 = vmul.f32 %v1053, %v4780
        %v4853 = vmul.f32 %v1057, %v4768
        %v4854 = vmul.f32 %v1057, %v4772
        %v4855 = vmul.f32 %v1057, %v4776
        %v4856 = vmul.f32 %v1057, %v4780
        %v4857 = vmul.f32 %v1061, %v4768
        %v4858 = vmul.f32 %v1061, %v4772
        %v4859 = vmul.f32 %v1061, %v4776
        %v4860 = vmul.f32 %v1061, %v4780
        %v4861 = vmul.f32 %v1065, %v4768
        %v4862 = vmul.f32 %v1065, %v4772
        %v4863 = vmul.f32 %v1065, %v4776
        %v4864 = vmul.f32 %v1065, %v4780
        %v4865 = vmul.f32 %v1069, %v4768
        %v4866 = vmul.f32 %v1069, %v4772
        %v4867 = vmul.f32 %v1069, %v4776
        %v4868 = vmul.f32 %v1069, %v4780
        %v4869 = vmul.f32 %v1073, %v4768
        %v4870 = vmul.f32 %v1073, %v4772
        %v4871 = vmul.f32 %v1073, %v4776
        %v4872 = vmul.f32 %v1073, %v4780
        %v4873 = vmul.f32 %v1077, %v4768
        %v4874 = vmul.f32 %v1077, %v4772
        %v4875 = vmul.f32 %v1077, %v4776
        %v4876 = vmul.f32 %v1077, %v4780
        %v4877 = vmul.f32 %v1081, %v4768
        %v4878 = vmul.f32 %v1081, %v4772
        %v4879 = vmul.f32 %v1081, %v4776
        %v4880 = vmul.f32 %v1081, %v4780
        %v4881 = vmul.f32 %v1085, %v4768
        %v4882 = vmul.f32 %v1085, %v4772
        %v4883 = vmul.f32 %v1085, %v4776
        %v4884 = vmul.f32 %v1085, %v4780
        %v4885 = vmul.f32 %v1089, %v4768
        %v4886 = vmul.f32 %v1089, %v4772
        %v4887 = vmul.f32 %v1089, %v4776
        %v4888 = vmul.f32 %v1089, %v4780
        %v4889 = vmul.f32 %v1093, %v4768
        %v4890 = vmul.f32 %v1093, %v4772
        %v4891 = vmul.f32 %v1093, %v4776
        %v4892 = vmul.f32 %v1093, %v4780
        %v4893 = vmul.f32 %v1097, %v4768
        %v4894 = vmul.f32 %v1097, %v4772
        %v4895 = vmul.f32 %v1097, %v4776
        %v4896 = vmul.f32 %v1097, %v4780
        %v4897 = vmul.f32 %v1101, %v4768
        %v4898 = vmul.f32 %v1101, %v4772
        %v4899 = vmul.f32 %v1101, %v4776
        %v4900 = vmul.f32 %v1101, %v4780
        %v4901 = vmul.f32 %v1105, %v4768
        %v4902 = vmul.f32 %v1105, %v4772
        %v4903 = vmul.f32 %v1105, %v4776
        %v4904 = vmul.f32 %v1105, %v4780
        %v4905 = vmul.f32 %v1109, %v4768
        %v4906 = vmul.f32 %v1109, %v4772
        %v4907 = vmul.f32 %v1109, %v4776
        %v4908 = vmul.f32 %v1109, %v4780
        %v4909 = vadd.f32 %v4617, %v4781
        %v4910 = vadd.f32 %v4618, %v4782
        %v4911 = vadd.f32 %v4619, %v4783
        %v4912 = vadd.f32 %v4620, %v4784
        %v4913 = vadd.f32 %v4621, %v4785
        %v4914 = vadd.f32 %v4622, %v4786
        %v4915 = vadd.f32 %v4623, %v4787
        %v4916 = vadd.f32 %v4624, %v4788
        %v4917 = vadd.f32 %v4625, %v4789
        %v4918 = vadd.f32 %v4626, %v4790
        %v4919 = vadd.f32 %v4627, %v4791
        %v4920 = vadd.f32 %v4628, %v4792
        %v4921 = vadd.f32 %v4629, %v4793
        %v4922 = vadd.f32 %v4630, %v4794
        %v4923 = vadd.f32 %v4631, %v4795
        %v4924 = vadd.f32 %v4632, %v4796
        %v4925 = vadd.f32 %v4633, %v4797
        %v4926 = vadd.f32 %v4634, %v4798
        %v4927 = vadd.f32 %v4635, %v4799
        %v4928 = vadd.f32 %v4636, %v4800
        %v4929 = vadd.f32 %v4637, %v4801
        %v4930 = vadd.f32 %v4638, %v4802
        %v4931 = vadd.f32 %v4639, %v4803
        %v4932 = vadd.f32 %v4640, %v4804
        %v4933 = vadd.f32 %v4641, %v4805
        %v4934 = vadd.f32 %v4642, %v4806
        %v4935 = vadd.f32 %v4643, %v4807
        %v4936 = vadd.f32 %v4644, %v4808
        %v4937 = vadd.f32 %v4645, %v4809
        %v4938 = vadd.f32 %v4646, %v4810
        %v4939 = vadd.f32 %v4647, %v4811
        %v4940 = vadd.f32 %v4648, %v4812
        %v4941 = vadd.f32 %v4649, %v4813
        %v4942 = vadd.f32 %v4650, %v4814
        %v4943 = vadd.f32 %v4651, %v4815
        %v4944 = vadd.f32 %v4652, %v4816
        %v4945 = vadd.f32 %v4653, %v4817
        %v4946 = vadd.f32 %v4654, %v4818
        %v4947 = vadd.f32 %v4655, %v4819
        %v4948 = vadd.f32 %v4656, %v4820
        %v4949 = vadd.f32 %v4657, %v4821
        %v4950 = vadd.f32 %v4658, %v4822
        %v4951 = vadd.f32 %v4659, %v4823
        %v4952 = vadd.f32 %v4660, %v4824
        %v4953 = vadd.f32 %v4661, %v4825
        %v4954 = vadd.f32 %v4662, %v4826
        %v4955 = vadd.f32 %v4663, %v4827
        %v4956 = vadd.f32 %v4664, %v4828
        %v4957 = vadd.f32 %v4665, %v4829
        %v4958 = vadd.f32 %v4666, %v4830
        %v4959 = vadd.f32 %v4667, %v4831
        %v4960 = vadd.f32 %v4668, %v4832
        %v4961 = vadd.f32 %v4669, %v4833
        %v4962 = vadd.f32 %v4670, %v4834
        %v4963 = vadd.f32 %v4671, %v4835
        %v4964 = vadd.f32 %v4672, %v4836
        %v4965 = vadd.f32 %v4673, %v4837
        %v4966 = vadd.f32 %v4674, %v4838
        %v4967 = vadd.f32 %v4675, %v4839
        %v4968 = vadd.f32 %v4676, %v4840
        %v4969 = vadd.f32 %v4677, %v4841
        %v4970 = vadd.f32 %v4678, %v4842
        %v4971 = vadd.f32 %v4679, %v4843
        %v4972 = vadd.f32 %v4680, %v4844
        %v4973 = vadd.f32 %v4681, %v4845
        %v4974 = vadd.f32 %v4682, %v4846
        %v4975 = vadd.f32 %v4683, %v4847
        %v4976 = vadd.f32 %v4684, %v4848
        %v4977 = vadd.f32 %v4685, %v4849
        %v4978 = vadd.f32 %v4686, %v4850
        %v4979 = vadd.f32 %v4687, %v4851
        %v4980 = vadd.f32 %v4688, %v4852
        %v4981 = vadd.f32 %v4689, %v4853
        %v4982 = vadd.f32 %v4690, %v4854
        %v4983 = vadd.f32 %v4691, %v4855
        %v4984 = vadd.f32 %v4692, %v4856
        %v4985 = vadd.f32 %v4693, %v4857
        %v4986 = vadd.f32 %v4694, %v4858
        %v4987 = vadd.f32 %v4695, %v4859
        %v4988 = vadd.f32 %v4696, %v4860
        %v4989 = vadd.f32 %v4697, %v4861
        %v4990 = vadd.f32 %v4698, %v4862
        %v4991 = vadd.f32 %v4699, %v4863
        %v4992 = vadd.f32 %v4700, %v4864
        %v4993 = vadd.f32 %v4701, %v4865
        %v4994 = vadd.f32 %v4702, %v4866
        %v4995 = vadd.f32 %v4703, %v4867
        %v4996 = vadd.f32 %v4704, %v4868
        %v4997 = vadd.f32 %v4705, %v4869
        %v4998 = vadd.f32 %v4706, %v4870
        %v4999 = vadd.f32 %v4707, %v4871
        %v5000 = vadd.f32 %v4708, %v4872
        %v5001 = vadd.f32 %v4709, %v4873
        %v5002 = vadd.f32 %v4710, %v4874
        %v5003 = vadd.f32 %v4711, %v4875
        %v5004 = vadd.f32 %v4712, %v4876
        %v5005 = vadd.f32 %v4713, %v4877
        %v5006 = vadd.f32 %v4714, %v4878
        %v5007 = vadd.f32 %v4715, %v4879
        %v5008 = vadd.f32 %v4716, %v4880
        %v5009 = vadd.f32 %v4717, %v4881
        %v5010 = vadd.f32 %v4718, %v4882
        %v5011 = vadd.f32 %v4719, %v4883
        %v5012 = vadd.f32 %v4720, %v4884
        %v5013 = vadd.f32 %v4721, %v4885
        %v5014 = vadd.f32 %v4722, %v4886
        %v5015 = vadd.f32 %v4723, %v4887
        %v5016 = vadd.f32 %v4724, %v4888
        %v5017 = vadd.f32 %v4725, %v4889
        %v5018 = vadd.f32 %v4726, %v4890
        %v5019 = vadd.f32 %v4727, %v4891
        %v5020 = vadd.f32 %v4728, %v4892
        %v5021 = vadd.f32 %v4729, %v4893
        %v5022 = vadd.f32 %v4730, %v4894
        %v5023 = vadd.f32 %v4731, %v4895
        %v5024 = vadd.f32 %v4732, %v4896
        %v5025 = vadd.f32 %v4733, %v4897
        %v5026 = vadd.f32 %v4734, %v4898
        %v5027 = vadd.f32 %v4735, %v4899
        %v5028 = vadd.f32 %v4736, %v4900
        %v5029 = vadd.f32 %v4737, %v4901
        %v5030 = vadd.f32 %v4738, %v4902
        %v5031 = vadd.f32 %v4739, %v4903
        %v5032 = vadd.f32 %v4740, %v4904
        %v5033 = vadd.f32 %v4741, %v4905
        %v5034 = vadd.f32 %v4742, %v4906
        %v5035 = vadd.f32 %v4743, %v4907
        %v5036 = vadd.f32 %v4744, %v4908
        %v5037 = vld [vmem:[%s2 + $0xc] sm:$0xf]
        %v5039 = vlaneseq
        %v5040 = vshrl.u32 %v5039, 7
        %v5041 = vsub.s32 0, %v5040
        %v5042 = vrot.slane %v5037, %v5041
        %v5043 = vlaneseq
        %v5044 = vshrl.u32 %v5043, 7
        %v5045 = vsub.s32 1, %v5044
        %v5046 = vrot.slane %v5037, %v5045
        %v5047 = vlaneseq
        %v5048 = vshrl.u32 %v5047, 7
        %v5049 = vsub.s32 2, %v5048
        %v5050 = vrot.slane %v5037, %v5049
        %v5051 = vlaneseq
        %v5052 = vshrl.u32 %v5051, 7
        %v5053 = vsub.s32 3, %v5052
        %v5054 = vrot.slane %v5037, %v5053
        %v5059 = vadd.f32 %v4909, %v5042
        %v5060 = vadd.f32 %v4910, %v5046
        %v5061 = vadd.f32 %v4911, %v5050
        %v5062 = vadd.f32 %v4912, %v5054
        %v5063 = vadd.f32 %v4913, %v5042
        %v5064 = vadd.f32 %v4914, %v5046
        %v5065 = vadd.f32 %v4915, %v5050
        %v5066 = vadd.f32 %v4916, %v5054
        %v5067 = vadd.f32 %v4917, %v5042
        %v5068 = vadd.f32 %v4918, %v5046
        %v5069 = vadd.f32 %v4919, %v5050
        %v5070 = vadd.f32 %v4920, %v5054
        %v5071 = vadd.f32 %v4921, %v5042
        %v5072 = vadd.f32 %v4922, %v5046
        %v5073 = vadd.f32 %v4923, %v5050
        %v5074 = vadd.f32 %v4924, %v5054
        %v5075 = vadd.f32 %v4925, %v5042
        %v5076 = vadd.f32 %v4926, %v5046
        %v5077 = vadd.f32 %v4927, %v5050
        %v5078 = vadd.f32 %v4928, %v5054
        %v5079 = vadd.f32 %v4929, %v5042
        %v5080 = vadd.f32 %v4930, %v5046
        %v5081 = vadd.f32 %v4931, %v5050
        %v5082 = vadd.f32 %v4932, %v5054
        %v5083 = vadd.f32 %v4933, %v5042
        %v5084 = vadd.f32 %v4934, %v5046
        %v5085 = vadd.f32 %v4935, %v5050
        %v5086 = vadd.f32 %v4936, %v5054
        %v5087 = vadd.f32 %v4937, %v5042
        %v5088 = vadd.f32 %v4938, %v5046
        %v5089 = vadd.f32 %v4939, %v5050
        %v5090 = vadd.f32 %v4940, %v5054
        %v5091 = vadd.f32 %v4941, %v5042
        %v5092 = vadd.f32 %v4942, %v5046
        %v5093 = vadd.f32 %v4943, %v5050
        %v5094 = vadd.f32 %v4944, %v5054
        %v5095 = vadd.f32 %v4945, %v5042
        %v5096 = vadd.f32 %v4946, %v5046
        %v5097 = vadd.f32 %v4947, %v5050
        %v5098 = vadd.f32 %v4948, %v5054
        %v5099 = vadd.f32 %v4949, %v5042
        %v5100 = vadd.f32 %v4950, %v5046
        %v5101 = vadd.f32 %v4951, %v5050
        %v5102 = vadd.f32 %v4952, %v5054
        %v5103 = vadd.f32 %v4953, %v5042
        %v5104 = vadd.f32 %v4954, %v5046
        %v5105 = vadd.f32 %v4955, %v5050
        %v5106 = vadd.f32 %v4956, %v5054
        %v5107 = vadd.f32 %v4957, %v5042
        %v5108 = vadd.f32 %v4958, %v5046
        %v5109 = vadd.f32 %v4959, %v5050
        %v5110 = vadd.f32 %v4960, %v5054
        %v5111 = vadd.f32 %v4961, %v5042
        %v5112 = vadd.f32 %v4962, %v5046
        %v5113 = vadd.f32 %v4963, %v5050
        %v5114 = vadd.f32 %v4964, %v5054
        %v5115 = vadd.f32 %v4965, %v5042
        %v5116 = vadd.f32 %v4966, %v5046
        %v5117 = vadd.f32 %v4967, %v5050
        %v5118 = vadd.f32 %v4968, %v5054
        %v5119 = vadd.f32 %v4969, %v5042
        %v5120 = vadd.f32 %v4970, %v5046
        %v5121 = vadd.f32 %v4971, %v5050
        %v5122 = vadd.f32 %v4972, %v5054
        %v5123 = vadd.f32 %v4973, %v5042
        %v5124 = vadd.f32 %v4974, %v5046
        %v5125 = vadd.f32 %v4975, %v5050
        %v5126 = vadd.f32 %v4976, %v5054
        %v5127 = vadd.f32 %v4977, %v5042
        %v5128 = vadd.f32 %v4978, %v5046
        %v5129 = vadd.f32 %v4979, %v5050
        %v5130 = vadd.f32 %v4980, %v5054
        %v5131 = vadd.f32 %v4981, %v5042
        %v5132 = vadd.f32 %v4982, %v5046
        %v5133 = vadd.f32 %v4983, %v5050
        %v5134 = vadd.f32 %v4984, %v5054
        %v5135 = vadd.f32 %v4985, %v5042
        %v5136 = vadd.f32 %v4986, %v5046
        %v5137 = vadd.f32 %v4987, %v5050
        %v5138 = vadd.f32 %v4988, %v5054
        %v5139 = vadd.f32 %v4989, %v5042
        %v5140 = vadd.f32 %v4990, %v5046
        %v5141 = vadd.f32 %v4991, %v5050
        %v5142 = vadd.f32 %v4992, %v5054
        %v5143 = vadd.f32 %v4993, %v5042
        %v5144 = vadd.f32 %v4994, %v5046
        %v5145 = vadd.f32 %v4995, %v5050
        %v5146 = vadd.f32 %v4996, %v5054
        %v5147 = vadd.f32 %v4997, %v5042
        %v5148 = vadd.f32 %v4998, %v5046
        %v5149 = vadd.f32 %v4999, %v5050
        %v5150 = vadd.f32 %v5000, %v5054
        %v5151 = vadd.f32 %v5001, %v5042
        %v5152 = vadd.f32 %v5002, %v5046
        %v5153 = vadd.f32 %v5003, %v5050
        %v5154 = vadd.f32 %v5004, %v5054
        %v5155 = vadd.f32 %v5005, %v5042
        %v5156 = vadd.f32 %v5006, %v5046
        %v5157 = vadd.f32 %v5007, %v5050
        %v5158 = vadd.f32 %v5008, %v5054
        %v5159 = vadd.f32 %v5009, %v5042
        %v5160 = vadd.f32 %v5010, %v5046
        %v5161 = vadd.f32 %v5011, %v5050
        %v5162 = vadd.f32 %v5012, %v5054
        %v5163 = vadd.f32 %v5013, %v5042
        %v5164 = vadd.f32 %v5014, %v5046
        %v5165 = vadd.f32 %v5015, %v5050
        %v5166 = vadd.f32 %v5016, %v5054
        %v5167 = vadd.f32 %v5017, %v5042
        %v5168 = vadd.f32 %v5018, %v5046
        %v5169 = vadd.f32 %v5019, %v5050
        %v5170 = vadd.f32 %v5020, %v5054
        %v5171 = vadd.f32 %v5021, %v5042
        %v5172 = vadd.f32 %v5022, %v5046
        %v5173 = vadd.f32 %v5023, %v5050
        %v5174 = vadd.f32 %v5024, %v5054
        %v5175 = vadd.f32 %v5025, %v5042
        %v5176 = vadd.f32 %v5026, %v5046
        %v5177 = vadd.f32 %v5027, %v5050
        %v5178 = vadd.f32 %v5028, %v5054
        %v5179 = vadd.f32 %v5029, %v5042
        %v5180 = vadd.f32 %v5030, %v5046
        %v5181 = vadd.f32 %v5031, %v5050
        %v5182 = vadd.f32 %v5032, %v5054
        %v5183 = vadd.f32 %v5033, %v5042
        %v5184 = vadd.f32 %v5034, %v5046
        %v5185 = vadd.f32 %v5035, %v5050
        %v5186 = vadd.f32 %v5036, %v5054
        %v5187 = vmax.f32 %v5059, 0.0
        %v5188 = vmax.f32 %v5060, 0.0
        %v5189 = vmax.f32 %v5061, 0.0
        %v5190 = vmax.f32 %v5062, 0.0
        %v5191 = vmax.f32 %v5063, 0.0
        %v5192 = vmax.f32 %v5064, 0.0
        %v5193 = vmax.f32 %v5065, 0.0
        %v5194 = vmax.f32 %v5066, 0.0
        %v5195 = vmax.f32 %v5067, 0.0
        %v5196 = vmax.f32 %v5068, 0.0
        %v5197 = vmax.f32 %v5069, 0.0
        %v5198 = vmax.f32 %v5070, 0.0
        %v5199 = vmax.f32 %v5071, 0.0
        %v5200 = vmax.f32 %v5072, 0.0
        %v5201 = vmax.f32 %v5073, 0.0
        %v5202 = vmax.f32 %v5074, 0.0
        %v5203 = vmax.f32 %v5075, 0.0
        %v5204 = vmax.f32 %v5076, 0.0
        %v5205 = vmax.f32 %v5077, 0.0
        %v5206 = vmax.f32 %v5078, 0.0
        %v5207 = vmax.f32 %v5079, 0.0
        %v5208 = vmax.f32 %v5080, 0.0
        %v5209 = vmax.f32 %v5081, 0.0
        %v5210 = vmax.f32 %v5082, 0.0
        %v5211 = vmax.f32 %v5083, 0.0
        %v5212 = vmax.f32 %v5084, 0.0
        %v5213 = vmax.f32 %v5085, 0.0
        %v5214 = vmax.f32 %v5086, 0.0
        %v5215 = vmax.f32 %v5087, 0.0
        %v5216 = vmax.f32 %v5088, 0.0
        %v5217 = vmax.f32 %v5089, 0.0
        %v5218 = vmax.f32 %v5090, 0.0
        %v5219 = vmax.f32 %v5091, 0.0
        %v5220 = vmax.f32 %v5092, 0.0
        %v5221 = vmax.f32 %v5093, 0.0
        %v5222 = vmax.f32 %v5094, 0.0
        %v5223 = vmax.f32 %v5095, 0.0
        %v5224 = vmax.f32 %v5096, 0.0
        %v5225 = vmax.f32 %v5097, 0.0
        %v5226 = vmax.f32 %v5098, 0.0
        %v5227 = vmax.f32 %v5099, 0.0
        %v5228 = vmax.f32 %v5100, 0.0
        %v5229 = vmax.f32 %v5101, 0.0
        %v5230 = vmax.f32 %v5102, 0.0
        %v5231 = vmax.f32 %v5103, 0.0
        %v5232 = vmax.f32 %v5104, 0.0
        %v5233 = vmax.f32 %v5105, 0.0
        %v5234 = vmax.f32 %v5106, 0.0
        %v5235 = vmax.f32 %v5107, 0.0
        %v5236 = vmax.f32 %v5108, 0.0
        %v5237 = vmax.f32 %v5109, 0.0
        %v5238 = vmax.f32 %v5110, 0.0
        %v5239 = vmax.f32 %v5111, 0.0
        %v5240 = vmax.f32 %v5112, 0.0
        %v5241 = vmax.f32 %v5113, 0.0
        %v5242 = vmax.f32 %v5114, 0.0
        %v5243 = vmax.f32 %v5115, 0.0
        %v5244 = vmax.f32 %v5116, 0.0
        %v5245 = vmax.f32 %v5117, 0.0
        %v5246 = vmax.f32 %v5118, 0.0
        %v5247 = vmax.f32 %v5119, 0.0
        %v5248 = vmax.f32 %v5120, 0.0
        %v5249 = vmax.f32 %v5121, 0.0
        %v5250 = vmax.f32 %v5122, 0.0
        %v5251 = vmax.f32 %v5123, 0.0
        %v5252 = vmax.f32 %v5124, 0.0
        %v5253 = vmax.f32 %v5125, 0.0
        %v5254 = vmax.f32 %v5126, 0.0
        %v5255 = vmax.f32 %v5127, 0.0
        %v5256 = vmax.f32 %v5128, 0.0
        %v5257 = vmax.f32 %v5129, 0.0
        %v5258 = vmax.f32 %v5130, 0.0
        %v5259 = vmax.f32 %v5131, 0.0
        %v5260 = vmax.f32 %v5132, 0.0
        %v5261 = vmax.f32 %v5133, 0.0
        %v5262 = vmax.f32 %v5134, 0.0
        %v5263 = vmax.f32 %v5135, 0.0
        %v5264 = vmax.f32 %v5136, 0.0
        %v5265 = vmax.f32 %v5137, 0.0
        %v5266 = vmax.f32 %v5138, 0.0
        %v5267 = vmax.f32 %v5139, 0.0
        %v5268 = vmax.f32 %v5140, 0.0
        %v5269 = vmax.f32 %v5141, 0.0
        %v5270 = vmax.f32 %v5142, 0.0
        %v5271 = vmax.f32 %v5143, 0.0
        %v5272 = vmax.f32 %v5144, 0.0
        %v5273 = vmax.f32 %v5145, 0.0
        %v5274 = vmax.f32 %v5146, 0.0
        %v5275 = vmax.f32 %v5147, 0.0
        %v5276 = vmax.f32 %v5148, 0.0
        %v5277 = vmax.f32 %v5149, 0.0
        %v5278 = vmax.f32 %v5150, 0.0
        %v5279 = vmax.f32 %v5151, 0.0
        %v5280 = vmax.f32 %v5152, 0.0
        %v5281 = vmax.f32 %v5153, 0.0
        %v5282 = vmax.f32 %v5154, 0.0
        %v5283 = vmax.f32 %v5155, 0.0
        %v5284 = vmax.f32 %v5156, 0.0
        %v5285 = vmax.f32 %v5157, 0.0
        %v5286 = vmax.f32 %v5158, 0.0
        %v5287 = vmax.f32 %v5159, 0.0
        %v5288 = vmax.f32 %v5160, 0.0
        %v5289 = vmax.f32 %v5161, 0.0
        %v5290 = vmax.f32 %v5162, 0.0
        %v5291 = vmax.f32 %v5163, 0.0
        %v5292 = vmax.f32 %v5164, 0.0
        %v5293 = vmax.f32 %v5165, 0.0
        %v5294 = vmax.f32 %v5166, 0.0
        %v5295 = vmax.f32 %v5167, 0.0
        %v5296 = vmax.f32 %v5168, 0.0
        %v5297 = vmax.f32 %v5169, 0.0
        %v5298 = vmax.f32 %v5170, 0.0
        %v5299 = vmax.f32 %v5171, 0.0
        %v5300 = vmax.f32 %v5172, 0.0
        %v5301 = vmax.f32 %v5173, 0.0
        %v5302 = vmax.f32 %v5174, 0.0
        %v5303 = vmax.f32 %v5175, 0.0
        %v5304 = vmax.f32 %v5176, 0.0
        %v5305 = vmax.f32 %v5177, 0.0
        %v5306 = vmax.f32 %v5178, 0.0
        %v5307 = vmax.f32 %v5179, 0.0
        %v5308 = vmax.f32 %v5180, 0.0
        %v5309 = vmax.f32 %v5181, 0.0
        %v5310 = vmax.f32 %v5182, 0.0
        %v5311 = vmax.f32 %v5183, 0.0
        %v5312 = vmax.f32 %v5184, 0.0
        %v5313 = vmax.f32 %v5185, 0.0
        %v5314 = vmax.f32 %v5186, 0.0
        %v5315 = vld [vmem:[#allocation2 + $0xc] sm:$0xf]
        %v5316 = vadd.f32 %v5187, %v5191
        %v5317 = vadd.f32 %v5316, %v5195
        %v5318 = vadd.f32 %v5317, %v5199
        %v5319 = vadd.f32 %v5318, %v5203
        %v5320 = vadd.f32 %v5319, %v5207
        %v5321 = vadd.f32 %v5320, %v5211
        %v5322 = vadd.f32 %v5321, %v5215
        %v5323 = vadd.f32 %v5322, %v5219
        %v5324 = vadd.f32 %v5323, %v5223
        %v5325 = vadd.f32 %v5324, %v5227
        %v5326 = vadd.f32 %v5325, %v5231
        %v5327 = vadd.f32 %v5326, %v5235
        %v5328 = vadd.f32 %v5327, %v5239
        %v5329 = vadd.f32 %v5328, %v5243
        %v5330 = vadd.f32 %v5329, %v5247
        %v5331 = vadd.f32 %v5330, %v5251
        %v5332 = vadd.f32 %v5331, %v5255
        %v5333 = vadd.f32 %v5332, %v5259
        %v5334 = vadd.f32 %v5333, %v5263
        %v5335 = vadd.f32 %v5334, %v5267
        %v5336 = vadd.f32 %v5335, %v5271
        %v5337 = vadd.f32 %v5336, %v5275
        %v5338 = vadd.f32 %v5337, %v5279
        %v5339 = vadd.f32 %v5338, %v5283
        %v5340 = vadd.f32 %v5339, %v5287
        %v5341 = vadd.f32 %v5340, %v5291
        %v5342 = vadd.f32 %v5341, %v5295
        %v5343 = vadd.f32 %v5342, %v5299
        %v5344 = vadd.f32 %v5343, %v5303
        %v5345 = vadd.f32 %v5344, %v5307
        %v5346 = vadd.f32 %v5345, %v5311
        %v5347 = vrot.slane %v5346, 4
        %v5348 = vadd.f32 %v5346, %v5347
        %v5349 = vrot.slane %v5348, 2
        %v5350 = vadd.f32 %v5348, %v5349
        %v5351 = vrot.slane %v5350, 1
        %v5352 = vadd.f32 %v5350, %v5351
        %v5353 = vadd.f32 %v5188, %v5192
        %v5354 = vadd.f32 %v5353, %v5196
        %v5355 = vadd.f32 %v5354, %v5200
        %v5356 = vadd.f32 %v5355, %v5204
        %v5357 = vadd.f32 %v5356, %v5208
        %v5358 = vadd.f32 %v5357, %v5212
        %v5359 = vadd.f32 %v5358, %v5216
        %v5360 = vadd.f32 %v5359, %v5220
        %v5361 = vadd.f32 %v5360, %v5224
        %v5362 = vadd.f32 %v5361, %v5228
        %v5363 = vadd.f32 %v5362, %v5232
        %v5364 = vadd.f32 %v5363, %v5236
        %v5365 = vadd.f32 %v5364, %v5240
        %v5366 = vadd.f32 %v5365, %v5244
        %v5367 = vadd.f32 %v5366, %v5248
        %v5368 = vadd.f32 %v5367, %v5252
        %v5369 = vadd.f32 %v5368, %v5256
        %v5370 = vadd.f32 %v5369, %v5260
        %v5371 = vadd.f32 %v5370, %v5264
        %v5372 = vadd.f32 %v5371, %v5268
        %v5373 = vadd.f32 %v5372, %v5272
        %v5374 = vadd.f32 %v5373, %v5276
        %v5375 = vadd.f32 %v5374, %v5280
        %v5376 = vadd.f32 %v5375, %v5284
        %v5377 = vadd.f32 %v5376, %v5288
        %v5378 = vadd.f32 %v5377, %v5292
        %v5379 = vadd.f32 %v5378, %v5296
        %v5380 = vadd.f32 %v5379, %v5300
        %v5381 = vadd.f32 %v5380, %v5304
        %v5382 = vadd.f32 %v5381, %v5308
        %v5383 = vadd.f32 %v5382, %v5312
        %v5384 = vrot.slane %v5383, 4
        %v5385 = vadd.f32 %v5383, %v5384
        %v5386 = vrot.slane %v5385, 2
        %v5387 = vadd.f32 %v5385, %v5386
        %v5388 = vrot.slane %v5387, 1
        %v5389 = vadd.f32 %v5387, %v5388
        %v5390 = vadd.f32 %v5189, %v5193
        %v5391 = vadd.f32 %v5390, %v5197
        %v5392 = vadd.f32 %v5391, %v5201
        %v5393 = vadd.f32 %v5392, %v5205
        %v5394 = vadd.f32 %v5393, %v5209
        %v5395 = vadd.f32 %v5394, %v5213
        %v5396 = vadd.f32 %v5395, %v5217
        %v5397 = vadd.f32 %v5396, %v5221
        %v5398 = vadd.f32 %v5397, %v5225
        %v5399 = vadd.f32 %v5398, %v5229
        %v5400 = vadd.f32 %v5399, %v5233
        %v5401 = vadd.f32 %v5400, %v5237
        %v5402 = vadd.f32 %v5401, %v5241
        %v5403 = vadd.f32 %v5402, %v5245
        %v5404 = vadd.f32 %v5403, %v5249
        %v5405 = vadd.f32 %v5404, %v5253
        %v5406 = vadd.f32 %v5405, %v5257
        %v5407 = vadd.f32 %v5406, %v5261
        %v5408 = vadd.f32 %v5407, %v5265
        %v5409 = vadd.f32 %v5408, %v5269
        %v5410 = vadd.f32 %v5409, %v5273
        %v5411 = vadd.f32 %v5410, %v5277
        %v5412 = vadd.f32 %v5411, %v5281
        %v5413 = vadd.f32 %v5412, %v5285
        %v5414 = vadd.f32 %v5413, %v5289
        %v5415 = vadd.f32 %v5414, %v5293
        %v5416 = vadd.f32 %v5415, %v5297
        %v5417 = vadd.f32 %v5416, %v5301
        %v5418 = vadd.f32 %v5417, %v5305
        %v5419 = vadd.f32 %v5418, %v5309
        %v5420 = vadd.f32 %v5419, %v5313
        %v5421 = vrot.slane %v5420, 4
        %v5422 = vadd.f32 %v5420, %v5421
        %v5423 = vrot.slane %v5422, 2
        %v5424 = vadd.f32 %v5422, %v5423
        %v5425 = vrot.slane %v5424, 1
        %v5426 = vadd.f32 %v5424, %v5425
        %v5427 = vadd.f32 %v5190, %v5194
        %v5428 = vadd.f32 %v5427, %v5198
        %v5429 = vadd.f32 %v5428, %v5202
        %v5430 = vadd.f32 %v5429, %v5206
        %v5431 = vadd.f32 %v5430, %v5210
        %v5432 = vadd.f32 %v5431, %v5214
        %v5433 = vadd.f32 %v5432, %v5218
        %v5434 = vadd.f32 %v5433, %v5222
        %v5435 = vadd.f32 %v5434, %v5226
        %v5436 = vadd.f32 %v5435, %v5230
        %v5437 = vadd.f32 %v5436, %v5234
        %v5438 = vadd.f32 %v5437, %v5238
        %v5439 = vadd.f32 %v5438, %v5242
        %v5440 = vadd.f32 %v5439, %v5246
        %v5441 = vadd.f32 %v5440, %v5250
        %v5442 = vadd.f32 %v5441, %v5254
        %v5443 = vadd.f32 %v5442, %v5258
        %v5444 = vadd.f32 %v5443, %v5262
        %v5445 = vadd.f32 %v5444, %v5266
        %v5446 = vadd.f32 %v5445, %v5270
        %v5447 = vadd.f32 %v5446, %v5274
        %v5448 = vadd.f32 %v5447, %v5278
        %v5449 = vadd.f32 %v5448, %v5282
        %v5450 = vadd.f32 %v5449, %v5286
        %v5451 = vadd.f32 %v5450, %v5290
        %v5452 = vadd.f32 %v5451, %v5294
        %v5453 = vadd.f32 %v5452, %v5298
        %v5454 = vadd.f32 %v5453, %v5302
        %v5455 = vadd.f32 %v5454, %v5306
        %v5456 = vadd.f32 %v5455, %v5310
        %v5457 = vadd.f32 %v5456, %v5314
        %v5458 = vrot.slane %v5457, 4
        %v5459 = vadd.f32 %v5457, %v5458
        %v5460 = vrot.slane %v5459, 2
        %v5461 = vadd.f32 %v5459, %v5460
        %v5462 = vrot.slane %v5461, 1
        %v5463 = vadd.f32 %v5461, %v5462
        %v5468 = vcombine.low %v5352, %v5389
        %v5469 = vcombine.low %v5426, %v5463
        %v5471 = vunpack.c.l.s4 1966171168
        %v5472 = vunpack.c.0.s8 %v5471
        %v5473 = vlaneseq
        %v5474 = vshrl.u32 %v5473, 7
        %v5475 = vsub.s32 %v5472, %v5474
        %v5476 = vrot.slane %v5468, %v5475
        %v5478 = vunpack.c.l.s4 1966171168
        %v5479 = vunpack.c.0.s8 %v5478
        %v5480 = vlaneseq
        %v5481 = vshrl.u32 %v5480, 7
        %v5482 = vsub.s32 %v5479, %v5481
        %v5483 = vrot.slane %v5469, %v5482
        %v5484 = vcombine.low %v5476, %v5483
        %v5486 = vunpack.c.l.s4 1966171168
        %v5487 = vunpack.c.0.s8 %v5486
        %v5488 = vlaneseq
        %v5489 = vshrl.u32 %v5488, 7
        %v5490 = vsub.s32 %v5487, %v5489
        %v5491 = vrot.slane %v5484, %v5490
        %v5493 = vadd.f32 %v5315, %v5491
        %5494 = vst.msk [vmem:[#allocation2 + $0xc] sm:$0xf] %vm1863, %v5493
        // Predicated region
        $region37: #{tpu_custom_call.1} parent=31 // pred_check
          %p5495 = pneg %p197
        $region38: #{tpu_custom_call.1} parent=31 // pred_check_branch
          %5497 = sbr.rel (%p5495) target = $region40
        $region39: #{tpu_custom_call.1} parent=31 // pred_region
          %v5498 = vld [vmem:[#allocation2] sm:$0xff]
          %v5499 = vld [vmem:[#allocation2 + $0x8] sm:$0xff]
          %v5500 = vmul.f32 %v5498, 0.00390625
          %v5501 = vmul.f32 %v5499, 0.00390625
          %5502 = vst [vmem:[%s186] sm:$0xff] %v5500
          %5503 = vst [vmem:[%s186 + $0x8] sm:$0xff] %v5501
        $region40: #{tpu_custom_call.1} parent=31 // pred_fallthru
          _
        %s5504 = sand.u32 %s107, 1
        %s5505 = scalar_lea.sflag [#allocation4], %s5504
        %s5506 = sand.u32 %s107, 1
        %s5507 = smul.addr %s5506, 16
        %s5508 = scalar_lea.vmem [#allocation3], %s5507
        // Predicated region
        $region41: #{tpu_custom_call.1} parent=31 // pred_check
          %p5509 = pneg %p117
        $region42: #{tpu_custom_call.1} parent=31 // pred_check_branch
          %5511 = sbr.rel (%p5509) target = $region44
        $region43: #{tpu_custom_call.1} parent=31 // pred_region
          %s5513 = ssub.s32 256, 256
          %5514 = vsyncadd %s5505, %s5513
          %s5515 = smul.addr %s21, 16
          %s5516 = smul.addr %s5515, 16
          %s5517 = scalar_lea.hbm %s3, %s5516
          %s5519 = sshll.u32 %s5508, 4
          %s5520 = int_to_ptr.vmem [resolvable:$true] %s5519
          %5522 = dma.vmem_to_hbm [thread:$0]  %s5520, 256, %s5517, %s5505
        $region44: #{tpu_custom_call.1} parent=31 // pred_fallthru
          _
      $region32: #{tpu_custom_call.1} parent=5 // pred_fallthru
        _
      %p5523 = scmp.le.s32.totalorder 2, %s12
      // Predicated region
      $region45: #{tpu_custom_call.1} parent=5 // pred_check
        %p5524 = pneg %p5523
      $region46: #{tpu_custom_call.1} parent=5 // pred_check_branch
        %5526 = sbr.rel (%p5524) target = $region48
      $region47: #{tpu_custom_call.1} parent=5 // pred_region
        %s5527 = ssub.s32 %s12, 2
        // Predicated region
        $region49: #{tpu_custom_call.1} parent=47 // pred_check
          %p5528 = pneg %p123
        $region50: #{tpu_custom_call.1} parent=47 // pred_check_branch
          %5530 = sbr.rel (%p5528) target = $region52
        $region51: #{tpu_custom_call.1} parent=47 // pred_region
          %s5531 = sand.u32 %s108, 1
          %s5532 = scalar_lea.sflag [#allocation4], %s5531
          %s5533 = sand.u32 %s108, 1
          %s5534 = smul.addr %s5533, 16
          %s5535 = scalar_lea.vmem [#allocation3], %s5534
          %5536 = dma.done %s5532, 256
        $region52: #{tpu_custom_call.1} parent=47 // pred_fallthru
          _
      $region48: #{tpu_custom_call.1} parent=5 // pred_fallthru
        _
    $region6: #{tpu_custom_call.1} parent=1 // loop_footer
      %s16 = sadd.s32 1, %s12
    $region7: #{tpu_custom_call.1} parent=1 // loop_footer_branch
      %11 = sbr.rel target = $region3
    $region8: #{tpu_custom_call.1} parent=1 // loop_exit
      _
    %5537 = vsyncpa [#allocation4], 1
    %s5538 = scalar_lea.sflag [#allocation4], 1
    %5539 = vsyncpa %s5538, 1

</llo_original>
